<compile_context>
chip_gen: v7x
topology: tpu7x:2x2x1
jax: 0.10.0
libtpu: 0.0.40
codegen_flags: <defaults>
</compile_context>

<pallas_src>
import math

import numpy as np
import jax
import jax.numpy as jnp
from jax import lax
from jax.experimental import pallas as pl
from jax.experimental.pallas import tpu as pltpu

EPS = 1e-5  # GroupNorm / BatchNorm eps (PyTorch default)


def make_ltae_kernel(seq_len, d_model, n_head, compute_dtype):
    T = seq_len
    H = n_head
    TD = T * d_model
    f32 = jnp.float32
    exact_div = jnp.dtype(compute_dtype) == jnp.dtype(jnp.float32)

    def kernel(x_ref, s_in_m_ref, s_in_ref, w_proj_ref, b_proj_ref, s_hbc_ref,
               w_mlp_ref, b_mlp_ref, s_out_m_ref, s_out_ref, og_g_ref, og_b_ref,
               out_ref):
        x = x_ref[...].astype(f32)          # (T*C, px): features on sublanes, pixels on lanes
        px = x.shape[1]

        # ---- input GroupNorm(n_head): per-pixel stats over (time, channels of the group) ----
        s_in_m = s_in_m_ref[...]            # (H, T*C)   selector pre-scaled by 1/(T*cg_in)
        s_in = s_in_ref[...]                # (T*C, H)   0/1 broadcast-back
        mean = jnp.dot(s_in_m, x, preferred_element_type=f32)           # (H, px)
        xc = x - jnp.dot(s_in, mean, preferred_element_type=f32)        # two-pass variance
        var = jnp.dot(s_in_m, xc * xc, preferred_element_type=f32)
        xn = xc * lax.rsqrt(jnp.dot(s_in, var, preferred_element_type=f32) + EPS)
        # (GroupNorm affine is folded into w_proj / b_proj on the host)

        # ---- fused projection: [values | attention scores] in ONE block-diagonal matmul ----
        # rows [0, T*d_model)        : values  h[t*d_model + c]   (inconv output)
        # rows [T*d_model, T*(dm+H)) : scores  s[t*H + h]         (key proj . query / temp)
        hk = jnp.dot(w_proj_ref[...], xn.astype(compute_dtype),
                     preferred_element_type=f32) + b_proj_ref[...]
        sc = hk[TD:, :]                     # (T*H, px)

        # ---- softmax over time per (head, pixel), fused with the head-wise weighted sum ----
        m = sc[0:H, :]
        for t in range(1, T):
            m = jnp.maximum(m, sc[t * H:(t + 1) * H, :])                # (H, px) running max
        s_hbc = s_hbc_ref[...]              # (d_model, H) head -> channel broadcast
        l = jnp.zeros_like(m)
        o = jnp.zeros((d_model, px), f32)
        for t in range(T):
            e_t = jnp.exp(sc[t * H:(t + 1) * H, :] - m)                 # (H, px)
            l = l + e_t
            o = o + (jnp.dot(s_hbc, e_t, preferred_element_type=f32)
                     * hk[t * d_model:(t + 1) * d_model, :])
        inv_l = (1.0 / l) if exact_div else pl.reciprocal(l, approx=True)
        o = o * jnp.dot(s_hbc, inv_l, preferred_element_type=f32)       # (d_model, px)

        # ---- MLP Linear + folded BatchNorm1d (eval) + ReLU ----
        y = jnp.dot(w_mlp_ref[...], o, preferred_element_type=f32) + b_mlp_ref[...]
        y = jnp.maximum(y, 0.0)             # (d_out, px)

        # ---- output GroupNorm(n_head) ----
        s_out_m = s_out_m_ref[...]          # (H, d_out)  selector pre-scaled by 1/cg_out
        s_out = s_out_ref[...]              # (d_out, H)
        mo = jnp.dot(s_out_m, y, preferred_element_type=f32)
        yc = y - jnp.dot(s_out, mo, preferred_element_type=f32)
        vo = jnp.dot(s_out_m, yc * yc, preferred_element_type=f32)
        yn = yc * lax.rsqrt(jnp.dot(s_out, vo, preferred_element_type=f32) + EPS)
        out_ref[...] = (yn * og_g_ref[...] + og_b_ref[...]).astype(out_ref.dtype)

    return kernel


def _build_kernel_weights(params, *, seq_len, n_head, d_k, compute_dtype):
    """Fold / tile module weights into transposed, kernel-ready matrices (host side)."""
    T, H = seq_len, n_head
    w_in = np.asarray(params["w_in"], np.float32)        # (C, d_model)
    b_in = np.asarray(params["b_in"], np.float32)        # (1, d_model)
    w_k = np.asarray(params["w_k"], np.float32)          # (d_model, H*d_k)
    b_k = np.asarray(params["b_k"], np.float32)          # (1, H*d_k)
    q = np.asarray(params["q_flat"], np.float32).reshape(H, d_k)
    gin_g = np.asarray(params["gin_gamma"], np.float32).reshape(-1)    # (C,)
    gin_b = np.asarray(params["gin_beta"], np.float32).reshape(-1)
    w_mlp = np.asarray(params["w_mlp"], np.float32)      # (d_model, d_out)
    b_mlp = np.asarray(params["b_mlp"], np.float32).reshape(-1)
    bn_s = np.asarray(params["bn_scale"], np.float32).reshape(-1)
    bn_b = np.asarray(params["bn_shift"], np.float32).reshape(-1)
    og_g = np.asarray(params["og_gamma"], np.float32).reshape(-1)
    og_b = np.asarray(params["og_beta"], np.float32).reshape(-1)

    C, d_model = w_in.shape
    d_out = w_mlp.shape[1]
    cg_in, cg_out, dmh = C // H, d_out // H, d_model // H
    inv_temp = 1.0 / math.sqrt(d_k)

    # -- fold per-head query + 1/temperature into the key projection ("score head") --
    w_ink = w_in @ w_k                                   # (C, H*d_k)
    b_ink = (b_in @ w_k + b_k).reshape(-1)               # (H*d_k,)
    w_sc = np.stack([w_ink[:, h * d_k:(h + 1) * d_k] @ q[h] for h in range(H)],
                    axis=1).astype(np.float32) * inv_temp                    # (C, H)
    b_sc = np.array([b_ink[h * d_k:(h + 1) * d_k] @ q[h] for h in range(H)],
                    np.float32) * inv_temp                                   # (H,)

    # -- fold the input-GroupNorm affine into both projection heads --
    w_in_f = gin_g[:, None] * w_in
    b_in_f = b_in.reshape(-1) + gin_b @ w_in
    w_sc_f = gin_g[:, None] * w_sc
    b_sc_f = b_sc + gin_b @ w_sc

    eye_T = np.eye(T, dtype=np.float32)
    # transposed block-diagonal projection: rows = outputs, cols = input lanes (t*C + c)
    w_projT = np.concatenate([np.kron(eye_T, w_in_f.T),      # value rows  t*d_model + c
                              np.kron(eye_T, w_sc_f.T)],     # score rows  t*H + h
                             axis=0)                          # (T*(d_model+H), T*C)
    b_proj = np.concatenate([np.tile(b_in_f, T), np.tile(b_sc_f, T)])[:, None]

    # GroupNorm(in) selectors over rows (t*C + c); mean selector pre-scaled
    ch = np.arange(T * C) % C
    s_in = (ch[:, None] // cg_in == np.arange(H)[None, :]).astype(np.float32)   # (T*C, H)
    s_in_m = s_in.T / float(T * cg_in)                                          # (H, T*C)

    # head -> channel broadcast for the value combine
    s_hbc = (np.arange(d_model)[:, None] // dmh ==
             np.arange(H)[None, :]).astype(np.float32)                          # (d_model, H)

    # MLP with folded eval-BatchNorm, transposed
    w_mlpT = (w_mlp * bn_s[None, :]).T                                           # (d_out, d_model)
    b_mlp_c = (b_mlp * bn_s + bn_b)[:, None]                                     # (d_out, 1)

    # GroupNorm(out) selectors
    s_out = (np.arange(d_out)[:, None] // cg_out ==
             np.arange(H)[None, :]).astype(np.float32)                           # (d_out, H)
    s_out_m = s_out.T / float(cg_out)                                            # (H, d_out)

    host = [s_in_m, s_in, w_projT, b_proj, s_hbc, w_mlpT, b_mlp_c,
            s_out_m, s_out, og_g[:, None], og_b[:, None]]
    weights = []
    for i, w in enumerate(host):
        arr = jnp.asarray(w, dtype=jnp.float32)
        if i == 2:  # stream the dominant projection at compute precision (halves its DMA in bf16)
            arr = arr.astype(compute_dtype)
        weights.append(arr)
    return weights


def ltae2d_forward(x, params, *, n_head, d_k, tile_px=1024, compute_dtype=jnp.bfloat16):
    """x: (B, T, C, H, W) float32. Returns (B, mlp[-1], H, W) like the PyTorch module."""
    B, T, C, Hh, Ww = x.shape
    P = Hh * Ww
    d_model = params["w_in"].shape[1]
    d_out = params["w_mlp"].shape[1]
    assert C % n_head == 0 and d_model % n_head == 0 and d_out % n_head == 0
    assert P % 128 == 0, "H*W must be a multiple of 128 (pixels are the lane axis)"

    # largest 128-multiple pixel tile <= requested that divides H*W (keeps grid >= B steps;
    # with B >= 2 both v7x TensorCores get work via the 'parallel' grid axes)
    tile_px = max(128, min((tile_px // 128) * 128, P))
    while P % tile_px:
        tile_px -= 128

    # free reshape: rows are (t, c)-major features, columns are (h, w)-major pixels.
    x3 = x.reshape(B, T * C, P)

    weights = _build_kernel_weights(params, seq_len=T, n_head=n_head, d_k=d_k,
                                    compute_dtype=compute_dtype)
    kernel = make_ltae_kernel(T, d_model, n_head, compute_dtype)

    w_specs = [pl.BlockSpec(w.shape, lambda b, j: (0, 0)) for w in weights]
    out = pl.pallas_call(
        kernel,
        out_shape=jax.ShapeDtypeStruct((B, d_out, P), jnp.float32),
        grid=(B, P // tile_px),
        in_specs=[pl.BlockSpec((None, T * C, tile_px), lambda b, j: (b, 0, j))] + w_specs,
        out_specs=pl.BlockSpec((None, d_out, tile_px), lambda b, j: (b, 0, j)),
        compiler_params=pltpu.CompilerParams(
            dimension_semantics=("parallel", "parallel"),
            vmem_limit_bytes=48 * 1024 * 1024),
    )(x3, *weights)
    return out.reshape(B, d_out, Hh, Ww)


def init_params(key, *, in_channels, d_model, n_head, d_k, mlp_out):
    ks = jax.random.split(key, 14)
    nrm = lambda k, shape, std: (std * jax.random.normal(k, shape)).astype(jnp.float32)
    p = {}
    # input GroupNorm affine
    p["gin_gamma"] = (1.0 + 0.1 * jax.random.normal(ks[0], (1, in_channels))).astype(jnp.float32)
    p["gin_beta"] = nrm(ks[1], (1, in_channels), 0.1)
    # inconv: Conv1d(in_channels, d_model, 1) -> (C, d_model) weight (transposed) + bias
    p["w_in"] = nrm(ks[2], (in_channels, d_model), 0.2)
    p["b_in"] = nrm(ks[3], (1, d_model), 0.05)
    # per-head query vectors Q (n_head, d_k), flattened head-major
    p["q_flat"] = nrm(ks[4], (1, n_head * d_k), math.sqrt(2.0 / d_k))
    # fc1_k: Linear(d_model, n_head*d_k)
    p["w_k"] = nrm(ks[5], (d_model, n_head * d_k), 0.15)
    p["b_k"] = nrm(ks[6], (1, n_head * d_k), 0.05)
    # MLP Linear(d_model, mlp_out)
    p["w_mlp"] = nrm(ks[7], (d_model, mlp_out), 0.2)
    p["b_mlp"] = nrm(ks[8], (1, mlp_out), 0.05)
    # BatchNorm1d(mlp_out) eval-mode, folded into scale/shift
    gamma = (1.0 + 0.1 * jax.random.normal(ks[9], (1, mlp_out))).astype(jnp.float32)
    beta = nrm(ks[10], (1, mlp_out), 0.1)
    running_mean = nrm(ks[11], (1, mlp_out), 0.1)
    running_var = jnp.ones((1, mlp_out), jnp.float32)
    scale = gamma / jnp.sqrt(running_var + EPS)
    p["bn_scale"] = scale.astype(jnp.float32)
    p["bn_shift"] = (beta - running_mean * scale).astype(jnp.float32)
    # output GroupNorm affine
    p["og_gamma"] = (1.0 + 0.1 * jax.random.normal(ks[12], (1, mlp_out))).astype(jnp.float32)
    p["og_beta"] = nrm(ks[13], (1, mlp_out), 0.1)
    return p


def ltae2d_reference(x, params, *, n_head, d_k):
    """Pure-JAX reference mirroring the PyTorch forward (eval mode)."""
    B, T, C, Hh, Ww = x.shape
    N = B * Hh * Ww
    d_model = params["w_in"].shape[1]
    d_out = params["w_mlp"].shape[1]
    G = n_head
    cg = C // G
    dmh = d_model // G
    hp = lax.Precision.HIGHEST

    out = jnp.transpose(x, (0, 3, 4, 1, 2)).reshape(N, T, C)
    xg = out.reshape(N, T, G, cg)
    m = xg.mean(axis=(1, 3), keepdims=True)
    v = xg.var(axis=(1, 3), keepdims=True)
    xn = ((xg - m) / jnp.sqrt(v + EPS)).reshape(N, T, C)
    xn = xn * params["gin_gamma"][0] + params["gin_beta"][0]

    h = jnp.einsum("ntc,cd->ntd", xn, params["w_in"], precision=hp) + params["b_in"][0]

    kp = jnp.einsum("ntd,de->nte", h, params["w_k"], precision=hp) + params["b_k"][0]
    kp = kp.reshape(N, T, G, d_k)
    q = params["q_flat"].reshape(G, d_k)
    s = jnp.einsum("nthk,hk->nht", kp, q, precision=hp) / math.sqrt(d_k)
    p = jax.nn.softmax(s, axis=-1)
    vh = h.reshape(N, T, G, dmh)
    o = jnp.einsum("nht,nthd->nhd", p, vh, precision=hp).reshape(N, d_model)

    y = jnp.dot(o, params["w_mlp"], precision=hp) + params["b_mlp"][0]
    y = y * params["bn_scale"][0] + params["bn_shift"][0]
    y = jnp.maximum(y, 0.0)

    yg = y.reshape(N, G, d_out // G)
    mo = yg.mean(-1, keepdims=True)
    vo = yg.var(-1, keepdims=True)
    yn = ((yg - mo) / jnp.sqrt(vo + EPS)).reshape(N, d_out)
    yn = yn * params["og_gamma"][0] + params["og_beta"][0]
    return yn.reshape(B, Hh, Ww, d_out).transpose(0, 3, 1, 2)


if __name__ == "__main__":
    # Small, consistent configuration: in_channels % n_head == 0, mlp = [d_model, mlp_out],
    # H*W = 1024 pixels per batch element -> tile_px=512 gives a (2, 2) 'parallel' grid
    # (>= 2 steps for both v7x TensorCores, 4 steps total for pipelining).
    B, T, C, Hh, Ww = 2, 8, 16, 32, 32
    n_head, d_k, d_model, mlp_out = 4, 4, 32, 16

    key = jax.random.PRNGKey(0)
    kx, kparam = jax.random.split(key)
    x = jax.random.normal(kx, (B, T, C, Hh, Ww), jnp.float32)
    params = init_params(kparam, in_channels=C, d_model=d_model,
                         n_head=n_head, d_k=d_k, mlp_out=mlp_out)

    # default path: bf16 operands for the dominant fused projection matmul (native MXU rate
    # on v6e/v7x, halved constant DMA); everything downstream stays f32.
    out = ltae2d_forward(x, params, n_head=n_head, d_k=d_k, tile_px=512)
    out = jax.block_until_ready(out)
    assert out.shape == (B, mlp_out, Hh, Ww), out.shape
    assert bool(jnp.all(jnp.isfinite(out)))

    # f32 compute path checked against the pure-JAX reference (the tiny output-GroupNorm
    # groups amplify bf16-level error near the ReLU boundary, so only f32 gets the tight check).
    out_f32 = ltae2d_forward(x, params, n_head=n_head, d_k=d_k, tile_px=512,
                             compute_dtype=jnp.float32)
    out_f32 = jax.block_until_ready(out_f32)
    ref = ltae2d_reference(x, params, n_head=n_head, d_k=d_k)
    np.testing.assert_allclose(np.asarray(out_f32), np.asarray(ref), rtol=5e-2, atol=5e-2)

    print("KERNEL_OK")
</pallas_src>

<mosaic_0001>
module attributes {stable_mosaic.version = 11 : i64} {
  func.func @kernel(%arg0: i32, %arg1: i32, %arg2: memref<1x128x512xf32, #tpu.memory_space<vmem>>, %arg3: memref<4x128xf32, #tpu.memory_space<vmem>>, %arg4: memref<128x4xf32, #tpu.memory_space<vmem>>, %arg5: memref<288x128xbf16, #tpu.memory_space<vmem>>, %arg6: memref<288x1xf32, #tpu.memory_space<vmem>>, %arg7: memref<32x4xf32, #tpu.memory_space<vmem>>, %arg8: memref<16x32xf32, #tpu.memory_space<vmem>>, %arg9: memref<16x1xf32, #tpu.memory_space<vmem>>, %arg10: memref<4x16xf32, #tpu.memory_space<vmem>>, %arg11: memref<16x4xf32, #tpu.memory_space<vmem>>, %arg12: memref<16x1xf32, #tpu.memory_space<vmem>>, %arg13: memref<16x1xf32, #tpu.memory_space<vmem>>, %arg14: memref<1x16x512xf32, #tpu.memory_space<vmem>>) attributes {dimension_semantics = [#tpu.dimension_semantics<parallel>, #tpu.dimension_semantics<parallel>], iteration_bounds = array<i64: 2, 2>, scalar_prefetch = 0 : i64, scratch_operands = 0 : i64, tpu.core_type = #tpu.core_type<tc>, window_params = [{transform_indices = @transform_0, window_bounds = array<i64: 1, 128, 512>}, {pipeline_mode = #tpu.pipeline_mode<synchronous>, transform_indices = @transform_1, window_bounds = array<i64: 4, 128>}, {pipeline_mode = #tpu.pipeline_mode<synchronous>, transform_indices = @transform_2, window_bounds = array<i64: 128, 4>}, {pipeline_mode = #tpu.pipeline_mode<synchronous>, transform_indices = @transform_3, window_bounds = array<i64: 288, 128>}, {pipeline_mode = #tpu.pipeline_mode<synchronous>, transform_indices = @transform_4, window_bounds = array<i64: 288, 1>}, {pipeline_mode = #tpu.pipeline_mode<synchronous>, transform_indices = @transform_5, window_bounds = array<i64: 32, 4>}, {pipeline_mode = #tpu.pipeline_mode<synchronous>, transform_indices = @transform_6, window_bounds = array<i64: 16, 32>}, {pipeline_mode = #tpu.pipeline_mode<synchronous>, transform_indices = @transform_7, window_bounds = array<i64: 16, 1>}, {pipeline_mode = #tpu.pipeline_mode<synchronous>, transform_indices = @transform_8, window_bounds = array<i64: 4, 16>}, {pipeline_mode = #tpu.pipeline_mode<synchronous>, transform_indices = @transform_9, window_bounds = array<i64: 16, 4>}, {pipeline_mode = #tpu.pipeline_mode<synchronous>, transform_indices = @transform_10, window_bounds = array<i64: 16, 1>}, {pipeline_mode = #tpu.pipeline_mode<synchronous>, transform_indices = @transform_11, window_bounds = array<i64: 16, 1>}, {transform_indices = @transform_12, window_bounds = array<i64: 1, 16, 512>}]} {
    %c0 = arith.constant 0 : index
    %c0_0 = arith.constant 0 : index
    %c0_1 = arith.constant 0 : index
    %0 = vector.load %arg2[%c0, %c0_0, %c0_1] : memref<1x128x512xf32, #tpu.memory_space<vmem>>, vector<1x128x512xf32>
    %1 = vector.shape_cast %0 : vector<1x128x512xf32> to vector<128x512xf32>
    %c0_2 = arith.constant 0 : index
    %c0_3 = arith.constant 0 : index
    %2 = vector.load %arg3[%c0_2, %c0_3] : memref<4x128xf32, #tpu.memory_space<vmem>>, vector<4x128xf32>
    %c0_4 = arith.constant 0 : index
    %c0_5 = arith.constant 0 : index
    %3 = vector.load %arg4[%c0_4, %c0_5] : memref<128x4xf32, #tpu.memory_space<vmem>>, vector<128x4xf32>
    %cst = arith.constant dense<0.000000e+00> : vector<4x512xf32>
    %4 = tpu.matmul %2, %1, %cst {dimension_numbers = #tpu.dot_dimension_numbers<[1], [0], [0], [1], [0, 0, 1, 1], [], []>} : vector<4x128xf32>, vector<128x512xf32>, vector<4x512xf32> -> vector<4x512xf32>
    %cst_6 = arith.constant dense<0.000000e+00> : vector<128x512xf32>
    %5 = tpu.matmul %3, %4, %cst_6 {dimension_numbers = #tpu.dot_dimension_numbers<[1], [0], [0], [1], [0, 0, 1, 1], [], []>} : vector<128x4xf32>, vector<4x512xf32>, vector<128x512xf32> -> vector<128x512xf32>
    %6 = arith.subf %1, %5 : vector<128x512xf32>
    %7 = arith.mulf %6, %6 : vector<128x512xf32>
    %cst_7 = arith.constant dense<0.000000e+00> : vector<4x512xf32>
    %8 = tpu.matmul %2, %7, %cst_7 {dimension_numbers = #tpu.dot_dimension_numbers<[1], [0], [0], [1], [0, 0, 1, 1], [], []>} : vector<4x128xf32>, vector<128x512xf32>, vector<4x512xf32> -> vector<4x512xf32>
    %cst_8 = arith.constant dense<0.000000e+00> : vector<128x512xf32>
    %9 = tpu.matmul %3, %8, %cst_8 {dimension_numbers = #tpu.dot_dimension_numbers<[1], [0], [0], [1], [0, 0, 1, 1], [], []>} : vector<128x4xf32>, vector<4x512xf32>, vector<128x512xf32> -> vector<128x512xf32>
    %cst_9 = arith.constant 9.99999974E-6 : f32
    %10 = vector.broadcast %cst_9 : f32 to vector<128x512xf32>
    %11 = arith.addf %9, %10 : vector<128x512xf32>
    %12 = math.rsqrt %11 : vector<128x512xf32>
    %13 = arith.mulf %6, %12 : vector<128x512xf32>
    %c0_10 = arith.constant 0 : index
    %c0_11 = arith.constant 0 : index
    %14 = vector.load %arg5[%c0_10, %c0_11] : memref<288x128xbf16, #tpu.memory_space<vmem>>, vector<288x128xbf16>
    %15 = arith.truncf %13 : vector<128x512xf32> to vector<128x512xbf16>
    %cst_12 = arith.constant dense<0.000000e+00> : vector<288x512xf32>
    %16 = tpu.matmul %14, %15, %cst_12 {dimension_numbers = #tpu.dot_dimension_numbers<[1], [0], [0], [1], [0, 0, 1, 1], [], []>} : vector<288x128xbf16>, vector<128x512xbf16>, vector<288x512xf32> -> vector<288x512xf32>
    %c0_13 = arith.constant 0 : index
    %c0_14 = arith.constant 0 : index
    %17 = vector.load %arg6[%c0_13, %c0_14] : memref<288x1xf32, #tpu.memory_space<vmem>>, vector<288x1xf32>
    %18 = vector.broadcast %17 : vector<288x1xf32> to vector<288x512xf32>
    %19 = arith.addf %16, %18 : vector<288x512xf32>
    %20 = vector.extract_strided_slice %19 {offsets = [256, 0], sizes = [32, 512], strides = [1, 1]} : vector<288x512xf32> to vector<32x512xf32>
    %21 = vector.extract_strided_slice %20 {offsets = [0, 0], sizes = [4, 512], strides = [1, 1]} : vector<32x512xf32> to vector<4x512xf32>
    %22 = vector.extract_strided_slice %20 {offsets = [4, 0], sizes = [4, 512], strides = [1, 1]} : vector<32x512xf32> to vector<4x512xf32>
    %23 = arith.maximumf %21, %22 : vector<4x512xf32>
    %24 = vector.extract_strided_slice %20 {offsets = [8, 0], sizes = [4, 512], strides = [1, 1]} : vector<32x512xf32> to vector<4x512xf32>
    %25 = arith.maximumf %23, %24 : vector<4x512xf32>
    %26 = vector.extract_strided_slice %20 {offsets = [12, 0], sizes = [4, 512], strides = [1, 1]} : vector<32x512xf32> to vector<4x512xf32>
    %27 = arith.maximumf %25, %26 : vector<4x512xf32>
    %28 = vector.extract_strided_slice %20 {offsets = [16, 0], sizes = [4, 512], strides = [1, 1]} : vector<32x512xf32> to vector<4x512xf32>
    %29 = arith.maximumf %27, %28 : vector<4x512xf32>
    %30 = vector.extract_strided_slice %20 {offsets = [20, 0], sizes = [4, 512], strides = [1, 1]} : vector<32x512xf32> to vector<4x512xf32>
    %31 = arith.maximumf %29, %30 : vector<4x512xf32>
    %32 = vector.extract_strided_slice %20 {offsets = [24, 0], sizes = [4, 512], strides = [1, 1]} : vector<32x512xf32> to vector<4x512xf32>
    %33 = arith.maximumf %31, %32 : vector<4x512xf32>
    %34 = vector.extract_strided_slice %20 {offsets = [28, 0], sizes = [4, 512], strides = [1, 1]} : vector<32x512xf32> to vector<4x512xf32>
    %35 = arith.maximumf %33, %34 : vector<4x512xf32>
    %c0_15 = arith.constant 0 : index
    %c0_16 = arith.constant 0 : index
    %36 = vector.load %arg7[%c0_15, %c0_16] : memref<32x4xf32, #tpu.memory_space<vmem>>, vector<32x4xf32>
    %cst_17 = arith.constant 0.000000e+00 : f32
    %37 = vector.broadcast %cst_17 : f32 to vector<4x512xf32>
    %cst_18 = arith.constant 0.000000e+00 : f32
    %38 = vector.broadcast %cst_18 : f32 to vector<32x512xf32>
    %39 = vector.extract_strided_slice %20 {offsets = [0, 0], sizes = [4, 512], strides = [1, 1]} : vector<32x512xf32> to vector<4x512xf32>
    %40 = arith.subf %39, %35 : vector<4x512xf32>
    %41 = math.exp %40 : vector<4x512xf32>
    %42 = arith.addf %37, %41 : vector<4x512xf32>
    %cst_19 = arith.constant dense<0.000000e+00> : vector<32x512xf32>
    %43 = tpu.matmul %36, %41, %cst_19 {dimension_numbers = #tpu.dot_dimension_numbers<[1], [0], [0], [1], [0, 0, 1, 1], [], []>} : vector<32x4xf32>, vector<4x512xf32>, vector<32x512xf32> -> vector<32x512xf32>
    %44 = vector.extract_strided_slice %19 {offsets = [0, 0], sizes = [32, 512], strides = [1, 1]} : vector<288x512xf32> to vector<32x512xf32>
    %45 = arith.mulf %43, %44 : vector<32x512xf32>
    %46 = arith.addf %38, %45 : vector<32x512xf32>
    %47 = vector.extract_strided_slice %20 {offsets = [4, 0], sizes = [4, 512], strides = [1, 1]} : vector<32x512xf32> to vector<4x512xf32>
    %48 = arith.subf %47, %35 : vector<4x512xf32>
    %49 = math.exp %48 : vector<4x512xf32>
    %50 = arith.addf %42, %49 : vector<4x512xf32>
    %cst_20 = arith.constant dense<0.000000e+00> : vector<32x512xf32>
    %51 = tpu.matmul %36, %49, %cst_20 {dimension_numbers = #tpu.dot_dimension_numbers<[1], [0], [0], [1], [0, 0, 1, 1], [], []>} : vector<32x4xf32>, vector<4x512xf32>, vector<32x512xf32> -> vector<32x512xf32>
    %52 = vector.extract_strided_slice %19 {offsets = [32, 0], sizes = [32, 512], strides = [1, 1]} : vector<288x512xf32> to vector<32x512xf32>
    %53 = arith.mulf %51, %52 : vector<32x512xf32>
    %54 = arith.addf %46, %53 : vector<32x512xf32>
    %55 = vector.extract_strided_slice %20 {offsets = [8, 0], sizes = [4, 512], strides = [1, 1]} : vector<32x512xf32> to vector<4x512xf32>
    %56 = arith.subf %55, %35 : vector<4x512xf32>
    %57 = math.exp %56 : vector<4x512xf32>
    %58 = arith.addf %50, %57 : vector<4x512xf32>
    %cst_21 = arith.constant dense<0.000000e+00> : vector<32x512xf32>
    %59 = tpu.matmul %36, %57, %cst_21 {dimension_numbers = #tpu.dot_dimension_numbers<[1], [0], [0], [1], [0, 0, 1, 1], [], []>} : vector<32x4xf32>, vector<4x512xf32>, vector<32x512xf32> -> vector<32x512xf32>
    %60 = vector.extract_strided_slice %19 {offsets = [64, 0], sizes = [32, 512], strides = [1, 1]} : vector<288x512xf32> to vector<32x512xf32>
    %61 = arith.mulf %59, %60 : vector<32x512xf32>
    %62 = arith.addf %54, %61 : vector<32x512xf32>
    %63 = vector.extract_strided_slice %20 {offsets = [12, 0], sizes = [4, 512], strides = [1, 1]} : vector<32x512xf32> to vector<4x512xf32>
    %64 = arith.subf %63, %35 : vector<4x512xf32>
    %65 = math.exp %64 : vector<4x512xf32>
    %66 = arith.addf %58, %65 : vector<4x512xf32>
    %cst_22 = arith.constant dense<0.000000e+00> : vector<32x512xf32>
    %67 = tpu.matmul %36, %65, %cst_22 {dimension_numbers = #tpu.dot_dimension_numbers<[1], [0], [0], [1], [0, 0, 1, 1], [], []>} : vector<32x4xf32>, vector<4x512xf32>, vector<32x512xf32> -> vector<32x512xf32>
    %68 = vector.extract_strided_slice %19 {offsets = [96, 0], sizes = [32, 512], strides = [1, 1]} : vector<288x512xf32> to vector<32x512xf32>
    %69 = arith.mulf %67, %68 : vector<32x512xf32>
    %70 = arith.addf %62, %69 : vector<32x512xf32>
    %71 = vector.extract_strided_slice %20 {offsets = [16, 0], sizes = [4, 512], strides = [1, 1]} : vector<32x512xf32> to vector<4x512xf32>
    %72 = arith.subf %71, %35 : vector<4x512xf32>
    %73 = math.exp %72 : vector<4x512xf32>
    %74 = arith.addf %66, %73 : vector<4x512xf32>
    %cst_23 = arith.constant dense<0.000000e+00> : vector<32x512xf32>
    %75 = tpu.matmul %36, %73, %cst_23 {dimension_numbers = #tpu.dot_dimension_numbers<[1], [0], [0], [1], [0, 0, 1, 1], [], []>} : vector<32x4xf32>, vector<4x512xf32>, vector<32x512xf32> -> vector<32x512xf32>
    %76 = vector.extract_strided_slice %19 {offsets = [128, 0], sizes = [32, 512], strides = [1, 1]} : vector<288x512xf32> to vector<32x512xf32>
    %77 = arith.mulf %75, %76 : vector<32x512xf32>
    %78 = arith.addf %70, %77 : vector<32x512xf32>
    %79 = vector.extract_strided_slice %20 {offsets = [20, 0], sizes = [4, 512], strides = [1, 1]} : vector<32x512xf32> to vector<4x512xf32>
    %80 = arith.subf %79, %35 : vector<4x512xf32>
    %81 = math.exp %80 : vector<4x512xf32>
    %82 = arith.addf %74, %81 : vector<4x512xf32>
    %cst_24 = arith.constant dense<0.000000e+00> : vector<32x512xf32>
    %83 = tpu.matmul %36, %81, %cst_24 {dimension_numbers = #tpu.dot_dimension_numbers<[1], [0], [0], [1], [0, 0, 1, 1], [], []>} : vector<32x4xf32>, vector<4x512xf32>, vector<32x512xf32> -> vector<32x512xf32>
    %84 = vector.extract_strided_slice %19 {offsets = [160, 0], sizes = [32, 512], strides = [1, 1]} : vector<288x512xf32> to vector<32x512xf32>
    %85 = arith.mulf %83, %84 : vector<32x512xf32>
    %86 = arith.addf %78, %85 : vector<32x512xf32>
    %87 = vector.extract_strided_slice %20 {offsets = [24, 0], sizes = [4, 512], strides = [1, 1]} : vector<32x512xf32> to vector<4x512xf32>
    %88 = arith.subf %87, %35 : vector<4x512xf32>
    %89 = math.exp %88 : vector<4x512xf32>
    %90 = arith.addf %82, %89 : vector<4x512xf32>
    %cst_25 = arith.constant dense<0.000000e+00> : vector<32x512xf32>
    %91 = tpu.matmul %36, %89, %cst_25 {dimension_numbers = #tpu.dot_dimension_numbers<[1], [0], [0], [1], [0, 0, 1, 1], [], []>} : vector<32x4xf32>, vector<4x512xf32>, vector<32x512xf32> -> vector<32x512xf32>
    %92 = vector.extract_strided_slice %19 {offsets = [192, 0], sizes = [32, 512], strides = [1, 1]} : vector<288x512xf32> to vector<32x512xf32>
    %93 = arith.mulf %91, %92 : vector<32x512xf32>
    %94 = arith.addf %86, %93 : vector<32x512xf32>
    %95 = vector.extract_strided_slice %20 {offsets = [28, 0], sizes = [4, 512], strides = [1, 1]} : vector<32x512xf32> to vector<4x512xf32>
    %96 = arith.subf %95, %35 : vector<4x512xf32>
    %97 = math.exp %96 : vector<4x512xf32>
    %98 = arith.addf %90, %97 : vector<4x512xf32>
    %cst_26 = arith.constant dense<0.000000e+00> : vector<32x512xf32>
    %99 = tpu.matmul %36, %97, %cst_26 {dimension_numbers = #tpu.dot_dimension_numbers<[1], [0], [0], [1], [0, 0, 1, 1], [], []>} : vector<32x4xf32>, vector<4x512xf32>, vector<32x512xf32> -> vector<32x512xf32>
    %100 = vector.extract_strided_slice %19 {offsets = [224, 0], sizes = [32, 512], strides = [1, 1]} : vector<288x512xf32> to vector<32x512xf32>
    %101 = arith.mulf %99, %100 : vector<32x512xf32>
    %102 = arith.addf %94, %101 : vector<32x512xf32>
    %103 = tpu.reciprocal %98 {approx = true} : vector<4x512xf32> -> vector<4x512xf32>
    %cst_27 = arith.constant dense<0.000000e+00> : vector<32x512xf32>
    %104 = tpu.matmul %36, %103, %cst_27 {dimension_numbers = #tpu.dot_dimension_numbers<[1], [0], [0], [1], [0, 0, 1, 1], [], []>} : vector<32x4xf32>, vector<4x512xf32>, vector<32x512xf32> -> vector<32x512xf32>
    %105 = arith.mulf %102, %104 : vector<32x512xf32>
    %c0_28 = arith.constant 0 : index
    %c0_29 = arith.constant 0 : index
    %106 = vector.load %arg8[%c0_28, %c0_29] : memref<16x32xf32, #tpu.memory_space<vmem>>, vector<16x32xf32>
    %cst_30 = arith.constant dense<0.000000e+00> : vector<16x512xf32>
    %107 = tpu.matmul %106, %105, %cst_30 {dimension_numbers = #tpu.dot_dimension_numbers<[1], [0], [0], [1], [0, 0, 1, 1], [], []>} : vector<16x32xf32>, vector<32x512xf32>, vector<16x512xf32> -> vector<16x512xf32>
    %c0_31 = arith.constant 0 : index
    %c0_32 = arith.constant 0 : index
    %108 = vector.load %arg9[%c0_31, %c0_32] : memref<16x1xf32, #tpu.memory_space<vmem>>, vector<16x1xf32>
    %109 = vector.broadcast %108 : vector<16x1xf32> to vector<16x512xf32>
    %110 = arith.addf %107, %109 : vector<16x512xf32>
    %cst_33 = arith.constant 0.000000e+00 : f32
    %111 = vector.broadcast %cst_33 : f32 to vector<16x512xf32>
    %112 = arith.maximumf %110, %111 : vector<16x512xf32>
    %c0_34 = arith.constant 0 : index
    %c0_35 = arith.constant 0 : index
    %113 = vector.load %arg10[%c0_34, %c0_35] : memref<4x16xf32, #tpu.memory_space<vmem>>, vector<4x16xf32>
    %c0_36 = arith.constant 0 : index
    %c0_37 = arith.constant 0 : index
    %114 = vector.load %arg11[%c0_36, %c0_37] : memref<16x4xf32, #tpu.memory_space<vmem>>, vector<16x4xf32>
    %cst_38 = arith.constant dense<0.000000e+00> : vector<4x512xf32>
    %115 = tpu.matmul %113, %112, %cst_38 {dimension_numbers = #tpu.dot_dimension_numbers<[1], [0], [0], [1], [0, 0, 1, 1], [], []>} : vector<4x16xf32>, vector<16x512xf32>, vector<4x512xf32> -> vector<4x512xf32>
    %cst_39 = arith.constant dense<0.000000e+00> : vector<16x512xf32>
    %116 = tpu.matmul %114, %115, %cst_39 {dimension_numbers = #tpu.dot_dimension_numbers<[1], [0], [0], [1], [0, 0, 1, 1], [], []>} : vector<16x4xf32>, vector<4x512xf32>, vector<16x512xf32> -> vector<16x512xf32>
    %117 = arith.subf %112, %116 : vector<16x512xf32>
    %118 = arith.mulf %117, %117 : vector<16x512xf32>
    %cst_40 = arith.constant dense<0.000000e+00> : vector<4x512xf32>
    %119 = tpu.matmul %113, %118, %cst_40 {dimension_numbers = #tpu.dot_dimension_numbers<[1], [0], [0], [1], [0, 0, 1, 1], [], []>} : vector<4x16xf32>, vector<16x512xf32>, vector<4x512xf32> -> vector<4x512xf32>
    %cst_41 = arith.constant dense<0.000000e+00> : vector<16x512xf32>
    %120 = tpu.matmul %114, %119, %cst_41 {dimension_numbers = #tpu.dot_dimension_numbers<[1], [0], [0], [1], [0, 0, 1, 1], [], []>} : vector<16x4xf32>, vector<4x512xf32>, vector<16x512xf32> -> vector<16x512xf32>
    %cst_42 = arith.constant 9.99999974E-6 : f32
    %121 = vector.broadcast %cst_42 : f32 to vector<16x512xf32>
    %122 = arith.addf %120, %121 : vector<16x512xf32>
    %123 = math.rsqrt %122 : vector<16x512xf32>
    %124 = arith.mulf %117, %123 : vector<16x512xf32>
    %c0_43 = arith.constant 0 : index
    %c0_44 = arith.constant 0 : index
    %125 = vector.load %arg12[%c0_43, %c0_44] : memref<16x1xf32, #tpu.memory_space<vmem>>, vector<16x1xf32>
    %126 = vector.broadcast %125 : vector<16x1xf32> to vector<16x512xf32>
    %127 = arith.mulf %124, %126 : vector<16x512xf32>
    %c0_45 = arith.constant 0 : index
    %c0_46 = arith.constant 0 : index
    %128 = vector.load %arg13[%c0_45, %c0_46] : memref<16x1xf32, #tpu.memory_space<vmem>>, vector<16x1xf32>
    %129 = vector.broadcast %128 : vector<16x1xf32> to vector<16x512xf32>
    %130 = arith.addf %127, %129 : vector<16x512xf32>
    %c0_47 = arith.constant 0 : index
    %c0_48 = arith.constant 0 : index
    %c0_49 = arith.constant 0 : index
    %131 = vector.load %arg14[%c0_47, %c0_48, %c0_49] : memref<1x16x512xf32, #tpu.memory_space<vmem>>, vector<1x16x512xf32>
    %132 = vector.shape_cast %131 : vector<1x16x512xf32> to vector<16x512xf32>
    %133 = vector.shape_cast %130 : vector<16x512xf32> to vector<1x16x512xf32>
    tpu.vector_store %arg14[%c0_47, %c0_48, %c0_49], %133 {strides = array<i32>} : memref<1x16x512xf32, #tpu.memory_space<vmem>>, vector<1x16x512xf32>,
    return
  }
  func.func @transform_0(%arg0: i32, %arg1: i32) -> (i32, i32, i32) {
    %c0_i32 = arith.constant 0 : i32
    %c0_i32_0 = arith.constant 0 : i32
    return %arg0, %c0_i32, %arg1 : i32, i32, i32
  }
  func.func @transform_1(%arg0: i32, %arg1: i32) -> (i32, i32) {
    %c0_i32 = arith.constant 0 : i32
    %c0_i32_0 = arith.constant 0 : i32
    %c0_i32_1 = arith.constant 0 : i32
    return %c0_i32, %c0_i32_0 : i32, i32
  }
  func.func @transform_2(%arg0: i32, %arg1: i32) -> (i32, i32) {
    %c0_i32 = arith.constant 0 : i32
    %c0_i32_0 = arith.constant 0 : i32
    %c0_i32_1 = arith.constant 0 : i32
    return %c0_i32, %c0_i32_0 : i32, i32
  }
  func.func @transform_3(%arg0: i32, %arg1: i32) -> (i32, i32) {
    %c0_i32 = arith.constant 0 : i32
    %c0_i32_0 = arith.constant 0 : i32
    %c0_i32_1 = arith.constant 0 : i32
    return %c0_i32, %c0_i32_0 : i32, i32
  }
  func.func @transform_4(%arg0: i32, %arg1: i32) -> (i32, i32) {
    %c0_i32 = arith.constant 0 : i32
    %c0_i32_0 = arith.constant 0 : i32
    %c0_i32_1 = arith.constant 0 : i32
    return %c0_i32, %c0_i32_0 : i32, i32
  }
  func.func @transform_5(%arg0: i32, %arg1: i32) -> (i32, i32) {
    %c0_i32 = arith.constant 0 : i32
    %c0_i32_0 = arith.constant 0 : i32
    %c0_i32_1 = arith.constant 0 : i32
    return %c0_i32, %c0_i32_0 : i32, i32
  }
  func.func @transform_6(%arg0: i32, %arg1: i32) -> (i32, i32) {
    %c0_i32 = arith.constant 0 : i32
    %c0_i32_0 = arith.constant 0 : i32
    %c0_i32_1 = arith.constant 0 : i32
    return %c0_i32, %c0_i32_0 : i32, i32
  }
  func.func @transform_7(%arg0: i32, %arg1: i32) -> (i32, i32) {
    %c0_i32 = arith.constant 0 : i32
    %c0_i32_0 = arith.constant 0 : i32
    %c0_i32_1 = arith.constant 0 : i32
    return %c0_i32, %c0_i32_0 : i32, i32
  }
  func.func @transform_8(%arg0: i32, %arg1: i32) -> (i32, i32) {
    %c0_i32 = arith.constant 0 : i32
    %c0_i32_0 = arith.constant 0 : i32
    %c0_i32_1 = arith.constant 0 : i32
    return %c0_i32, %c0_i32_0 : i32, i32
  }
  func.func @transform_9(%arg0: i32, %arg1: i32) -> (i32, i32) {
    %c0_i32 = arith.constant 0 : i32
    %c0_i32_0 = arith.constant 0 : i32
    %c0_i32_1 = arith.constant 0 : i32
    return %c0_i32, %c0_i32_0 : i32, i32
  }
  func.func @transform_10(%arg0: i32, %arg1: i32) -> (i32, i32) {
    %c0_i32 = arith.constant 0 : i32
    %c0_i32_0 = arith.constant 0 : i32
    %c0_i32_1 = arith.constant 0 : i32
    return %c0_i32, %c0_i32_0 : i32, i32
  }
  func.func @transform_11(%arg0: i32, %arg1: i32) -> (i32, i32) {
    %c0_i32 = arith.constant 0 : i32
    %c0_i32_0 = arith.constant 0 : i32
    %c0_i32_1 = arith.constant 0 : i32
    return %c0_i32, %c0_i32_0 : i32, i32
  }
  func.func @transform_12(%arg0: i32, %arg1: i32) -> (i32, i32, i32) {
    %c0_i32 = arith.constant 0 : i32
    %c0_i32_0 = arith.constant 0 : i32
    return %arg0, %c0_i32, %arg1 : i32, i32, i32
  }
}

</mosaic_0001>

<llo_original>
// kernel: tpu_custom_call.1
$region0: #{tpu_custom_call.1}
  #allocation0 [shape = 'u32[]', space=smem, size = 0x4, offset = 0x4, fixed_abs, tag = 'smem constant byte address 0x4 - core index']
  #allocation1 [shape = 'u32[144,128]{1,0:T(1,128)}', space=vmem, size = 0x12000, scoped, tag = 'internal scratch']
  %s0 = inlined_call_operand.hbm [shape: f32[2,128,1024], index: 0, kind: input, shape index: {}]
  %s1 = inlined_call_operand.vmem [shape: f32[4,128], index: 1, kind: input, shape index: {}]
  %s2 = inlined_call_operand.vmem [shape: f32[128,4], index: 2, kind: input, shape index: {}]
  %s3 = inlined_call_operand.vmem [shape: bf16[288,128], index: 3, kind: input, shape index: {}]
  %s4 = inlined_call_operand.vmem [shape: f32[288,1], index: 4, kind: input, shape index: {}]
  %s5 = inlined_call_operand.vmem [shape: f32[32,4], index: 5, kind: input, shape index: {}]
  %s6 = inlined_call_operand.vmem [shape: f32[16,32], index: 6, kind: input, shape index: {}]
  %s7 = inlined_call_operand.vmem [shape: f32[16,1], index: 7, kind: input, shape index: {}]
  %s8 = inlined_call_operand.vmem [shape: f32[4,16], index: 8, kind: input, shape index: {}]
  %s9 = inlined_call_operand.vmem [shape: f32[16,4], index: 9, kind: input, shape index: {}]
  %s10 = inlined_call_operand.vmem [shape: f32[16,1], index: 10, kind: input, shape index: {}]
  %s11 = inlined_call_operand.vmem [shape: f32[16,1], index: 11, kind: input, shape index: {}]
  %s12 = inlined_call_operand.hbm [shape: f32[2,16,1024], index: 12, kind: output, shape index: {}]
  %s13 = sld [smem:[#allocation0]]
  $region85: #{tpu_custom_call.1} parent=0
    _
  %s15 = ssub.s32 1, %s13
  %s16 = scalar_select 0, %s15, %s13
  $region1: #{tpu_custom_call.1} parent=0
    #allocation2 [shape = 'u8[524288]{0}', space=vmem, size = 0x80000, scoped, tag = 'input window, operand 0']
    #allocation3 [shape = 's32[2]{0}', space=sflag, size = 0x8, scoped, tag = 'scoped memory for tpu_custom_call.1']
    #allocation4 [shape = 's32[2]{0}', space=sflag, size = 0x8, scoped, tag = 'scoped memory for tpu_custom_call.1']
    #allocation5 [shape = 'u8[65536]{0}', space=vmem, size = 0x10000, scoped, tag = 'output window, operand 0']
    %17 = vsyncpa [#allocation3], 0
    %s18 = scalar_lea.sflag [#allocation3], 1
    %19 = vsyncpa %s18, 0
    %20 = vsyncpa [#allocation4], 0
    %s21 = scalar_lea.sflag [#allocation4], 1
    %22 = vsyncpa %s21, 0
    loop: start=0, step=1, limit=6
    $region2: #{tpu_custom_call.1} parent=1 // loop_pre_header
      _
    $region3: #{tpu_custom_call.1} parent=1 // loop_header
      %s24 = sphi 0, %s28
      %p25 = scmp.ge.s32.totalorder %s24, 6
      %s31 = sphi 0, %s43
      %s32 = sphi 0, %s39
      %s33 = sphi 0, %s31
      %s34 = sphi 0, %s32
      %s35 = sphi 0, %s33
      %s36 = sphi 0, %s34
      %s48 = sphi 0, %s50
      %s51 = sphi 0, %s48
      %s52 = sphi 0, %s51
      %s68 = sphi 0, %s52
      %s72 = sphi 0, %s72
      %s74 = sphi 0, %s72
      %s75 = sphi 0, %s74
      %s89 = sphi 0, %s75
      %s93 = sphi 0, %s93
      %s95 = sphi 0, %s93
      %s96 = sphi 0, %s95
      %s110 = sphi 0, %s96
      %s114 = sphi 0, %s114
      %s116 = sphi 0, %s114
      %s117 = sphi 0, %s116
      %s131 = sphi 0, %s117
      %s135 = sphi 0, %s135
      %s137 = sphi 0, %s135
      %s138 = sphi 0, %s137
      %s152 = sphi 0, %s138
      %s156 = sphi 0, %s156
      %s158 = sphi 0, %s156
      %s159 = sphi 0, %s158
      %s173 = sphi 0, %s159
      %s177 = sphi 0, %s177
      %s179 = sphi 0, %s177
      %s180 = sphi 0, %s179
      %s194 = sphi 0, %s180
      %s198 = sphi 0, %s198
      %s200 = sphi 0, %s198
      %s201 = sphi 0, %s200
      %s215 = sphi 0, %s201
      %s219 = sphi 0, %s219
      %s221 = sphi 0, %s219
      %s222 = sphi 0, %s221
      %s236 = sphi 0, %s222
      %s240 = sphi 0, %s240
      %s242 = sphi 0, %s240
      %s243 = sphi 0, %s242
      %s257 = sphi 0, %s243
      %s261 = sphi 0, %s261
      %s263 = sphi 0, %s261
      %s264 = sphi 0, %s263
      %s278 = sphi 0, %s264
      %s282 = sphi 0, %s282
      %s284 = sphi 0, %s282
      %s285 = sphi 0, %s284
      %s299 = sphi 0, %s285
      %s307 = sphi 0, %s309
      %s310 = sphi 0, %s307
      %s311 = sphi 0, %s310
      %s327 = sphi 0, %s311
    $region4: #{tpu_custom_call.1} parent=1 // loop_header_branch
      %27 = sbr.rel (%p25) target = $region8
    $region5: #{tpu_custom_call.1} parent=1 // loop_body
      %s29 = ssub.s32 %s24, 1
      %s30 = ssub.s32 %s24, 2
      %s37 = sadd.s32 1, %s32
      %p38 = scmp.ge.s32.totalorder %s37, 2
      %s39 = scalar_select %p38, 0, %s37
      %s40 = sadd.s32 1, %s31
      %s41 = scalar_select %p38, %s40, %s31
      %p42 = scmp.ge.s32.totalorder %s41, 2
      %s43 = scalar_select %p42, 0, %s41
      %s44 = ssub.s32 %s31, %s43
      %s45 = ssub.s32 %s32, %s39
      %s46 = sor.u32 %s44, %s45
      %p47 = scmp.eq.s32.totalorder %s46, 0
      %s49 = sadd.s32 %s48, 1
      %s50 = scalar_select %p47, %s48, %s49
      %p53 = pneg %p47
      %p54 = scmp.eq.s32.totalorder %s24, 3
      %p55 = por %p53, %p54
      %p56 = scmp.ne.s32.totalorder %s48, %s51
      %p57 = scmp.eq.s32.totalorder %s24, 0
      %p58 = por %p56, %p57
      %p59 = scmp.ne.s32.totalorder %s48, %s51
      %p60 = scmp.eq.s32.totalorder %s29, 3
      %p61 = por %p59, %p60
      %p62 = scmp.ne.s32.totalorder %s51, %s52
      %p63 = scmp.eq.s32.totalorder %s29, 0
      %p64 = por %p62, %p63
      %p65 = scmp.ne.s32.totalorder %s51, %s52
      %p66 = scmp.eq.s32.totalorder %s30, 3
      %p67 = por %p65, %p66
      %p69 = scmp.ne.s32.totalorder %s52, %s68
      %p70 = scmp.eq.s32.totalorder %s30, 0
      %p71 = por %p69, %p70
      %s73 = sadd.s32 %s72, 1
      %p76 = scmp.eq.s32.totalorder %s24, 3
      %p77 = scmp.ne.s32.totalorder %s72, %s74
      %p78 = scmp.eq.s32.totalorder %s24, 0
      %p79 = por %p77, %p78
      %p80 = scmp.ne.s32.totalorder %s72, %s74
      %p81 = scmp.eq.s32.totalorder %s29, 3
      %p82 = por %p80, %p81
      %p83 = scmp.ne.s32.totalorder %s74, %s75
      %p84 = scmp.eq.s32.totalorder %s29, 0
      %p85 = por %p83, %p84
      %p86 = scmp.ne.s32.totalorder %s74, %s75
      %p87 = scmp.eq.s32.totalorder %s30, 3
      %p88 = por %p86, %p87
      %p90 = scmp.ne.s32.totalorder %s75, %s89
      %p91 = scmp.eq.s32.totalorder %s30, 0
      %p92 = por %p90, %p91
      %s94 = sadd.s32 %s93, 1
      %p97 = scmp.eq.s32.totalorder %s24, 3
      %p98 = scmp.ne.s32.totalorder %s93, %s95
      %p99 = scmp.eq.s32.totalorder %s24, 0
      %p100 = por %p98, %p99
      %p101 = scmp.ne.s32.totalorder %s93, %s95
      %p102 = scmp.eq.s32.totalorder %s29, 3
      %p103 = por %p101, %p102
      %p104 = scmp.ne.s32.totalorder %s95, %s96
      %p105 = scmp.eq.s32.totalorder %s29, 0
      %p106 = por %p104, %p105
      %p107 = scmp.ne.s32.totalorder %s95, %s96
      %p108 = scmp.eq.s32.totalorder %s30, 3
      %p109 = por %p107, %p108
      %p111 = scmp.ne.s32.totalorder %s96, %s110
      %p112 = scmp.eq.s32.totalorder %s30, 0
      %p113 = por %p111, %p112
      %s115 = sadd.s32 %s114, 1
      %p118 = scmp.eq.s32.totalorder %s24, 3
      %p119 = scmp.ne.s32.totalorder %s114, %s116
      %p120 = scmp.eq.s32.totalorder %s24, 0
      %p121 = por %p119, %p120
      %p122 = scmp.ne.s32.totalorder %s114, %s116
      %p123 = scmp.eq.s32.totalorder %s29, 3
      %p124 = por %p122, %p123
      %p125 = scmp.ne.s32.totalorder %s116, %s117
      %p126 = scmp.eq.s32.totalorder %s29, 0
      %p127 = por %p125, %p126
      %p128 = scmp.ne.s32.totalorder %s116, %s117
      %p129 = scmp.eq.s32.totalorder %s30, 3
      %p130 = por %p128, %p129
      %p132 = scmp.ne.s32.totalorder %s117, %s131
      %p133 = scmp.eq.s32.totalorder %s30, 0
      %p134 = por %p132, %p133
      %s136 = sadd.s32 %s135, 1
      %p139 = scmp.eq.s32.totalorder %s24, 3
      %p140 = scmp.ne.s32.totalorder %s135, %s137
      %p141 = scmp.eq.s32.totalorder %s24, 0
      %p142 = por %p140, %p141
      %p143 = scmp.ne.s32.totalorder %s135, %s137
      %p144 = scmp.eq.s32.totalorder %s29, 3
      %p145 = por %p143, %p144
      %p146 = scmp.ne.s32.totalorder %s137, %s138
      %p147 = scmp.eq.s32.totalorder %s29, 0
      %p148 = por %p146, %p147
      %p149 = scmp.ne.s32.totalorder %s137, %s138
      %p150 = scmp.eq.s32.totalorder %s30, 3
      %p151 = por %p149, %p150
      %p153 = scmp.ne.s32.totalorder %s138, %s152
      %p154 = scmp.eq.s32.totalorder %s30, 0
      %p155 = por %p153, %p154
      %s157 = sadd.s32 %s156, 1
      %p160 = scmp.eq.s32.totalorder %s24, 3
      %p161 = scmp.ne.s32.totalorder %s156, %s158
      %p162 = scmp.eq.s32.totalorder %s24, 0
      %p163 = por %p161, %p162
      %p164 = scmp.ne.s32.totalorder %s156, %s158
      %p165 = scmp.eq.s32.totalorder %s29, 3
      %p166 = por %p164, %p165
      %p167 = scmp.ne.s32.totalorder %s158, %s159
      %p168 = scmp.eq.s32.totalorder %s29, 0
      %p169 = por %p167, %p168
      %p170 = scmp.ne.s32.totalorder %s158, %s159
      %p171 = scmp.eq.s32.totalorder %s30, 3
      %p172 = por %p170, %p171
      %p174 = scmp.ne.s32.totalorder %s159, %s173
      %p175 = scmp.eq.s32.totalorder %s30, 0
      %p176 = por %p174, %p175
      %s178 = sadd.s32 %s177, 1
      %p181 = scmp.eq.s32.totalorder %s24, 3
      %p182 = scmp.ne.s32.totalorder %s177, %s179
      %p183 = scmp.eq.s32.totalorder %s24, 0
      %p184 = por %p182, %p183
      %p185 = scmp.ne.s32.totalorder %s177, %s179
      %p186 = scmp.eq.s32.totalorder %s29, 3
      %p187 = por %p185, %p186
      %p188 = scmp.ne.s32.totalorder %s179, %s180
      %p189 = scmp.eq.s32.totalorder %s29, 0
      %p190 = por %p188, %p189
      %p191 = scmp.ne.s32.totalorder %s179, %s180
      %p192 = scmp.eq.s32.totalorder %s30, 3
      %p193 = por %p191, %p192
      %p195 = scmp.ne.s32.totalorder %s180, %s194
      %p196 = scmp.eq.s32.totalorder %s30, 0
      %p197 = por %p195, %p196
      %s199 = sadd.s32 %s198, 1
      %p202 = scmp.eq.s32.totalorder %s24, 3
      %p203 = scmp.ne.s32.totalorder %s198, %s200
      %p204 = scmp.eq.s32.totalorder %s24, 0
      %p205 = por %p203, %p204
      %p206 = scmp.ne.s32.totalorder %s198, %s200
      %p207 = scmp.eq.s32.totalorder %s29, 3
      %p208 = por %p206, %p207
      %p209 = scmp.ne.s32.totalorder %s200, %s201
      %p210 = scmp.eq.s32.totalorder %s29, 0
      %p211 = por %p209, %p210
      %p212 = scmp.ne.s32.totalorder %s200, %s201
      %p213 = scmp.eq.s32.totalorder %s30, 3
      %p214 = por %p212, %p213
      %p216 = scmp.ne.s32.totalorder %s201, %s215
      %p217 = scmp.eq.s32.totalorder %s30, 0
      %p218 = por %p216, %p217
      %s220 = sadd.s32 %s219, 1
      %p223 = scmp.eq.s32.totalorder %s24, 3
      %p224 = scmp.ne.s32.totalorder %s219, %s221
      %p225 = scmp.eq.s32.totalorder %s24, 0
      %p226 = por %p224, %p225
      %p227 = scmp.ne.s32.totalorder %s219, %s221
      %p228 = scmp.eq.s32.totalorder %s29, 3
      %p229 = por %p227, %p228
      %p230 = scmp.ne.s32.totalorder %s221, %s222
      %p231 = scmp.eq.s32.totalorder %s29, 0
      %p232 = por %p230, %p231
      %p233 = scmp.ne.s32.totalorder %s221, %s222
      %p234 = scmp.eq.s32.totalorder %s30, 3
      %p235 = por %p233, %p234
      %p237 = scmp.ne.s32.totalorder %s222, %s236
      %p238 = scmp.eq.s32.totalorder %s30, 0
      %p239 = por %p237, %p238
      %s241 = sadd.s32 %s240, 1
      %p244 = scmp.eq.s32.totalorder %s24, 3
      %p245 = scmp.ne.s32.totalorder %s240, %s242
      %p246 = scmp.eq.s32.totalorder %s24, 0
      %p247 = por %p245, %p246
      %p248 = scmp.ne.s32.totalorder %s240, %s242
      %p249 = scmp.eq.s32.totalorder %s29, 3
      %p250 = por %p248, %p249
      %p251 = scmp.ne.s32.totalorder %s242, %s243
      %p252 = scmp.eq.s32.totalorder %s29, 0
      %p253 = por %p251, %p252
      %p254 = scmp.ne.s32.totalorder %s242, %s243
      %p255 = scmp.eq.s32.totalorder %s30, 3
      %p256 = por %p254, %p255
      %p258 = scmp.ne.s32.totalorder %s243, %s257
      %p259 = scmp.eq.s32.totalorder %s30, 0
      %p260 = por %p258, %p259
      %s262 = sadd.s32 %s261, 1
      %p265 = scmp.eq.s32.totalorder %s24, 3
      %p266 = scmp.ne.s32.totalorder %s261, %s263
      %p267 = scmp.eq.s32.totalorder %s24, 0
      %p268 = por %p266, %p267
      %p269 = scmp.ne.s32.totalorder %s261, %s263
      %p270 = scmp.eq.s32.totalorder %s29, 3
      %p271 = por %p269, %p270
      %p272 = scmp.ne.s32.totalorder %s263, %s264
      %p273 = scmp.eq.s32.totalorder %s29, 0
      %p274 = por %p272, %p273
      %p275 = scmp.ne.s32.totalorder %s263, %s264
      %p276 = scmp.eq.s32.totalorder %s30, 3
      %p277 = por %p275, %p276
      %p279 = scmp.ne.s32.totalorder %s264, %s278
      %p280 = scmp.eq.s32.totalorder %s30, 0
      %p281 = por %p279, %p280
      %s283 = sadd.s32 %s282, 1
      %p286 = scmp.eq.s32.totalorder %s24, 3
      %p287 = scmp.ne.s32.totalorder %s282, %s284
      %p288 = scmp.eq.s32.totalorder %s24, 0
      %p289 = por %p287, %p288
      %p290 = scmp.ne.s32.totalorder %s282, %s284
      %p291 = scmp.eq.s32.totalorder %s29, 3
      %p292 = por %p290, %p291
      %p293 = scmp.ne.s32.totalorder %s284, %s285
      %p294 = scmp.eq.s32.totalorder %s29, 0
      %p295 = por %p293, %p294
      %p296 = scmp.ne.s32.totalorder %s284, %s285
      %p297 = scmp.eq.s32.totalorder %s30, 3
      %p298 = por %p296, %p297
      %p300 = scmp.ne.s32.totalorder %s285, %s299
      %p301 = scmp.eq.s32.totalorder %s30, 0
      %p302 = por %p300, %p301
      %s303 = ssub.s32 %s31, %s43
      %s304 = ssub.s32 %s32, %s39
      %s305 = sor.u32 %s303, %s304
      %p306 = scmp.eq.s32.totalorder %s305, 0
      %s308 = sadd.s32 %s307, 1
      %s309 = scalar_select %p306, %s307, %s308
      %p312 = pneg %p306
      %p313 = scmp.eq.s32.totalorder %s24, 3
      %p314 = por %p312, %p313
      %p315 = scmp.ne.s32.totalorder %s307, %s310
      %p316 = scmp.eq.s32.totalorder %s24, 0
      %p317 = por %p315, %p316
      %p318 = scmp.ne.s32.totalorder %s307, %s310
      %p319 = scmp.eq.s32.totalorder %s29, 3
      %p320 = por %p318, %p319
      %p321 = scmp.ne.s32.totalorder %s310, %s311
      %p322 = scmp.eq.s32.totalorder %s29, 0
      %p323 = por %p321, %p322
      %p324 = scmp.ne.s32.totalorder %s310, %s311
      %p325 = scmp.eq.s32.totalorder %s30, 3
      %p326 = por %p324, %p325
      %p328 = scmp.ne.s32.totalorder %s311, %s327
      %p329 = scmp.eq.s32.totalorder %s30, 0
      %p330 = por %p328, %p329
      %p331 = scmp.le.s32.totalorder 1, %s24
      %p332 = scmp.lt.s32.totalorder %s24, 5
      %p333 = pnand %p331, %p332
      %p334 = pneg %p333
      // Predicated region
      $region9: #{tpu_custom_call.1} parent=5 // pred_check
        _
      $region10: #{tpu_custom_call.1} parent=5 // pred_check_branch
        %336 = sbr.rel (%p333) target = $region12
      $region11: #{tpu_custom_call.1} parent=5 // pred_region
        %s337 = ssub.s32 %s24, 1
        // Predicated region
        $region13: #{tpu_custom_call.1} parent=11 // pred_check
          %p338 = pneg %p85
        $region14: #{tpu_custom_call.1} parent=11 // pred_check_branch
          %340 = sbr.rel (%p338) target = $region16
        $region15: #{tpu_custom_call.1} parent=11 // pred_region
          _
        $region16: #{tpu_custom_call.1} parent=11 // pred_fallthru
          _
        // Predicated region
        $region17: #{tpu_custom_call.1} parent=11 // pred_check
          %p341 = pneg %p106
        $region18: #{tpu_custom_call.1} parent=11 // pred_check_branch
          %343 = sbr.rel (%p341) target = $region20
        $region19: #{tpu_custom_call.1} parent=11 // pred_region
          _
        $region20: #{tpu_custom_call.1} parent=11 // pred_fallthru
          _
        // Predicated region
        $region21: #{tpu_custom_call.1} parent=11 // pred_check
          %p344 = pneg %p127
        $region22: #{tpu_custom_call.1} parent=11 // pred_check_branch
          %346 = sbr.rel (%p344) target = $region24
        $region23: #{tpu_custom_call.1} parent=11 // pred_region
          _
        $region24: #{tpu_custom_call.1} parent=11 // pred_fallthru
          _
        // Predicated region
        $region25: #{tpu_custom_call.1} parent=11 // pred_check
          %p347 = pneg %p148
        $region26: #{tpu_custom_call.1} parent=11 // pred_check_branch
          %349 = sbr.rel (%p347) target = $region28
        $region27: #{tpu_custom_call.1} parent=11 // pred_region
          _
        $region28: #{tpu_custom_call.1} parent=11 // pred_fallthru
          _
        // Predicated region
        $region29: #{tpu_custom_call.1} parent=11 // pred_check
          %p350 = pneg %p169
        $region30: #{tpu_custom_call.1} parent=11 // pred_check_branch
          %352 = sbr.rel (%p350) target = $region32
        $region31: #{tpu_custom_call.1} parent=11 // pred_region
          _
        $region32: #{tpu_custom_call.1} parent=11 // pred_fallthru
          _
        // Predicated region
        $region33: #{tpu_custom_call.1} parent=11 // pred_check
          %p353 = pneg %p190
        $region34: #{tpu_custom_call.1} parent=11 // pred_check_branch
          %355 = sbr.rel (%p353) target = $region36
        $region35: #{tpu_custom_call.1} parent=11 // pred_region
          _
        $region36: #{tpu_custom_call.1} parent=11 // pred_fallthru
          _
        // Predicated region
        $region37: #{tpu_custom_call.1} parent=11 // pred_check
          %p356 = pneg %p211
        $region38: #{tpu_custom_call.1} parent=11 // pred_check_branch
          %358 = sbr.rel (%p356) target = $region40
        $region39: #{tpu_custom_call.1} parent=11 // pred_region
          _
        $region40: #{tpu_custom_call.1} parent=11 // pred_fallthru
          _
        // Predicated region
        $region41: #{tpu_custom_call.1} parent=11 // pred_check
          %p359 = pneg %p232
        $region42: #{tpu_custom_call.1} parent=11 // pred_check_branch
          %361 = sbr.rel (%p359) target = $region44
        $region43: #{tpu_custom_call.1} parent=11 // pred_region
          _
        $region44: #{tpu_custom_call.1} parent=11 // pred_fallthru
          _
        // Predicated region
        $region45: #{tpu_custom_call.1} parent=11 // pred_check
          %p362 = pneg %p253
        $region46: #{tpu_custom_call.1} parent=11 // pred_check_branch
          %364 = sbr.rel (%p362) target = $region48
        $region47: #{tpu_custom_call.1} parent=11 // pred_region
          _
        $region48: #{tpu_custom_call.1} parent=11 // pred_fallthru
          _
        // Predicated region
        $region49: #{tpu_custom_call.1} parent=11 // pred_check
          %p365 = pneg %p274
        $region50: #{tpu_custom_call.1} parent=11 // pred_check_branch
          %367 = sbr.rel (%p365) target = $region52
        $region51: #{tpu_custom_call.1} parent=11 // pred_region
          _
        $region52: #{tpu_custom_call.1} parent=11 // pred_fallthru
          _
        // Predicated region
        $region53: #{tpu_custom_call.1} parent=11 // pred_check
          %p368 = pneg %p295
        $region54: #{tpu_custom_call.1} parent=11 // pred_check_branch
          %370 = sbr.rel (%p368) target = $region56
        $region55: #{tpu_custom_call.1} parent=11 // pred_region
          _
        $region56: #{tpu_custom_call.1} parent=11 // pred_fallthru
          _
      $region12: #{tpu_custom_call.1} parent=5 // pred_fallthru
        _
      %p371 = scmp.lt.s32.totalorder %s24, 4
      // Predicated region
      $region57: #{tpu_custom_call.1} parent=5 // pred_check
        %p372 = pneg %p371
      $region58: #{tpu_custom_call.1} parent=5 // pred_check_branch
        %374 = sbr.rel (%p372) target = $region60
      $region59: #{tpu_custom_call.1} parent=5 // pred_region
        // Predicated region
        $region61: #{tpu_custom_call.1} parent=59 // pred_check
          %p375 = pneg %p58
        $region62: #{tpu_custom_call.1} parent=59 // pred_check_branch
          %377 = sbr.rel (%p375) target = $region64
        $region63: #{tpu_custom_call.1} parent=59 // pred_region
          %s378 = sand.u32 %s48, 1
          %s379 = scalar_lea.sflag [#allocation3], %s378
          %s380 = sand.u32 %s48, 1
          %s381 = smul.addr %s380, 512
          %s382 = scalar_lea.vmem [#allocation2], %s381
          %s383 = smul.u32 4, %s32
          %s385 = ssub.s32 8192, 8192
          %386 = vsyncadd %s379, %s385
          %s387 = smul.addr %s31, 128
          %s388 = sadd.s32 %s383, %s387
          %s389 = smul.addr %s388, 128
          %s390 = scalar_lea.hbm %s0, %s389
          %s391 = sshll.u32 %s382, 4
          %s392 = int_to_ptr.vmem [resolvable:$true] %s391
          %397 = dma.hbm_to_vmem [thread:$0]  %s390, 8192, %s392, %s379, 1024, 512, 32
        $region64: #{tpu_custom_call.1} parent=59 // pred_fallthru
          _
      $region60: #{tpu_custom_call.1} parent=5 // pred_fallthru
        _
      %p398 = scmp.le.s32.totalorder 1, %s24
      %p399 = scmp.lt.s32.totalorder %s24, 5
      %p400 = pnand %p398, %p399
      %p401 = pneg %p400
      // Predicated region
      $region65: #{tpu_custom_call.1} parent=5 // pred_check
        _
      $region66: #{tpu_custom_call.1} parent=5 // pred_check_branch
        %403 = sbr.rel (%p400) target = $region68
      $region67: #{tpu_custom_call.1} parent=5 // pred_region
        %s404 = ssub.s32 %s24, 1
        %s405 = sand.u32 %s51, 1
        %s406 = scalar_lea.sflag [#allocation3], %s405
        %s407 = sand.u32 %s51, 1
        %s408 = smul.addr %s407, 512
        %s409 = scalar_lea.vmem [#allocation2], %s408
        // Predicated region
        $region69: #{tpu_custom_call.1} parent=67 // pred_check
          %p410 = pneg %p64
        $region70: #{tpu_custom_call.1} parent=67 // pred_check_branch
          %412 = sbr.rel (%p410) target = $region72
        $region71: #{tpu_custom_call.1} parent=67 // pred_region
          %413 = dma.done %s406, 8192
        $region72: #{tpu_custom_call.1} parent=67 // pred_fallthru
          _
        %s414 = sand.u32 %s51, 1
        %s415 = scalar_lea.sflag [#allocation3], %s414
        %s416 = sand.u32 %s51, 1
        %s417 = smul.addr %s416, 512
        %s418 = scalar_lea.vmem [#allocation2], %s417
        %p419 = pneg %p64
        %p420 = pneg %p61
        %p421 = pneg %p85
        %p422 = pneg %p82
        %p423 = pneg %p106
        %p424 = pneg %p103
        %p425 = pneg %p127
        %p426 = pneg %p124
        %p427 = pneg %p148
        %p428 = pneg %p145
        %p429 = pneg %p169
        %p430 = pneg %p166
        %p431 = pneg %p190
        %p432 = pneg %p187
        %p433 = pneg %p211
        %p434 = pneg %p208
        %p435 = pneg %p232
        %p436 = pneg %p229
        %p437 = pneg %p253
        %p438 = pneg %p250
        %p439 = pneg %p274
        %p440 = pneg %p271
        %p441 = pneg %p295
        %p442 = pneg %p292
        %p443 = pneg %p323
        %p444 = pneg %p320
        %s445 = sand.u32 %s310, 1
        %s446 = scalar_lea.sflag [#allocation4], %s445
        %s447 = sand.u32 %s310, 1
        %s448 = smul.addr %s447, 64
        %s449 = scalar_lea.vmem [#allocation5], %s448
        %s450 = smul.u32 4, %s34
        %s451 = smul.u32 4, %s34
        %v453 = vld [vmem:[%s409] sm:$0xff]
        %v454 = vld [vmem:[%s409 + $0x8] sm:$0xff]
        %v455 = vld [vmem:[%s409 + $0x10] sm:$0xff]
        %v456 = vld [vmem:[%s409 + $0x18] sm:$0xff]
        %v457 = vld [vmem:[%s409 + $0x20] sm:$0xff]
        %v458 = vld [vmem:[%s409 + $0x28] sm:$0xff]
        %v459 = vld [vmem:[%s409 + $0x30] sm:$0xff]
        %v460 = vld [vmem:[%s409 + $0x38] sm:$0xff]
        %v461 = vld [vmem:[%s409 + $0x40] sm:$0xff]
        %v462 = vld [vmem:[%s409 + $0x48] sm:$0xff]
        %v463 = vld [vmem:[%s409 + $0x50] sm:$0xff]
        %v464 = vld [vmem:[%s409 + $0x58] sm:$0xff]
        %v465 = vld [vmem:[%s409 + $0x60] sm:$0xff]
        %v466 = vld [vmem:[%s409 + $0x68] sm:$0xff]
        %v467 = vld [vmem:[%s409 + $0x70] sm:$0xff]
        %v468 = vld [vmem:[%s409 + $0x78] sm:$0xff]
        %v469 = vld [vmem:[%s409 + $0x80] sm:$0xff]
        %v470 = vld [vmem:[%s409 + $0x88] sm:$0xff]
        %v471 = vld [vmem:[%s409 + $0x90] sm:$0xff]
        %v472 = vld [vmem:[%s409 + $0x98] sm:$0xff]
        %v473 = vld [vmem:[%s409 + $0xa0] sm:$0xff]
        %v474 = vld [vmem:[%s409 + $0xa8] sm:$0xff]
        %v475 = vld [vmem:[%s409 + $0xb0] sm:$0xff]
        %v476 = vld [vmem:[%s409 + $0xb8] sm:$0xff]
        %v477 = vld [vmem:[%s409 + $0xc0] sm:$0xff]
        %v478 = vld [vmem:[%s409 + $0xc8] sm:$0xff]
        %v479 = vld [vmem:[%s409 + $0xd0] sm:$0xff]
        %v480 = vld [vmem:[%s409 + $0xd8] sm:$0xff]
        %v481 = vld [vmem:[%s409 + $0xe0] sm:$0xff]
        %v482 = vld [vmem:[%s409 + $0xe8] sm:$0xff]
        %v483 = vld [vmem:[%s409 + $0xf0] sm:$0xff]
        %v484 = vld [vmem:[%s409 + $0xf8] sm:$0xff]
        %v485 = vld [vmem:[%s409 + $0x100] sm:$0xff]
        %v486 = vld [vmem:[%s409 + $0x108] sm:$0xff]
        %v487 = vld [vmem:[%s409 + $0x110] sm:$0xff]
        %v488 = vld [vmem:[%s409 + $0x118] sm:$0xff]
        %v489 = vld [vmem:[%s409 + $0x120] sm:$0xff]
        %v490 = vld [vmem:[%s409 + $0x128] sm:$0xff]
        %v491 = vld [vmem:[%s409 + $0x130] sm:$0xff]
        %v492 = vld [vmem:[%s409 + $0x138] sm:$0xff]
        %v493 = vld [vmem:[%s409 + $0x140] sm:$0xff]
        %v494 = vld [vmem:[%s409 + $0x148] sm:$0xff]
        %v495 = vld [vmem:[%s409 + $0x150] sm:$0xff]
        %v496 = vld [vmem:[%s409 + $0x158] sm:$0xff]
        %v497 = vld [vmem:[%s409 + $0x160] sm:$0xff]
        %v498 = vld [vmem:[%s409 + $0x168] sm:$0xff]
        %v499 = vld [vmem:[%s409 + $0x170] sm:$0xff]
        %v500 = vld [vmem:[%s409 + $0x178] sm:$0xff]
        %v501 = vld [vmem:[%s409 + $0x180] sm:$0xff]
        %v502 = vld [vmem:[%s409 + $0x188] sm:$0xff]
        %v503 = vld [vmem:[%s409 + $0x190] sm:$0xff]
        %v504 = vld [vmem:[%s409 + $0x198] sm:$0xff]
        %v505 = vld [vmem:[%s409 + $0x1a0] sm:$0xff]
        %v506 = vld [vmem:[%s409 + $0x1a8] sm:$0xff]
        %v507 = vld [vmem:[%s409 + $0x1b0] sm:$0xff]
        %v508 = vld [vmem:[%s409 + $0x1b8] sm:$0xff]
        %v509 = vld [vmem:[%s409 + $0x1c0] sm:$0xff]
        %v510 = vld [vmem:[%s409 + $0x1c8] sm:$0xff]
        %v511 = vld [vmem:[%s409 + $0x1d0] sm:$0xff]
        %v512 = vld [vmem:[%s409 + $0x1d8] sm:$0xff]
        %v513 = vld [vmem:[%s409 + $0x1e0] sm:$0xff]
        %v514 = vld [vmem:[%s409 + $0x1e8] sm:$0xff]
        %v515 = vld [vmem:[%s409 + $0x1f0] sm:$0xff]
        %v516 = vld [vmem:[%s409 + $0x1f8] sm:$0xff]
        %v517 = vld [vmem:[%s1] sm:$0xf]
        %v518 = vld [vmem:[%s2] sm:$0xff]
        %v519 = vld [vmem:[%s2 + $0x8] sm:$0xff]
        %v520 = vld [vmem:[%s2 + $0x10] sm:$0xff]
        %v521 = vld [vmem:[%s2 + $0x18] sm:$0xff]
        %v522 = vld [vmem:[%s2 + $0x20] sm:$0xff]
        %v523 = vld [vmem:[%s2 + $0x28] sm:$0xff]
        %v524 = vld [vmem:[%s2 + $0x30] sm:$0xff]
        %v525 = vld [vmem:[%s2 + $0x38] sm:$0xff]
        %v526 = vld [vmem:[%s2 + $0x40] sm:$0xff]
        %v527 = vld [vmem:[%s2 + $0x48] sm:$0xff]
        %v528 = vld [vmem:[%s2 + $0x50] sm:$0xff]
        %v529 = vld [vmem:[%s2 + $0x58] sm:$0xff]
        %v530 = vld [vmem:[%s2 + $0x60] sm:$0xff]
        %v531 = vld [vmem:[%s2 + $0x68] sm:$0xff]
        %v532 = vld [vmem:[%s2 + $0x70] sm:$0xff]
        %v533 = vld [vmem:[%s2 + $0x78] sm:$0xff]
        %534 = vmatprep.subr.mxu0 %v454
        %535 = vmatpush1.msra.mxu0 %v453
        %536 = vmatprep.subr.mxu0 %v458
        %537 = vmatpush1.msra.mxu0 %v457
        %538 = vmatprep.subr.mxu0 %v462
        %539 = vmatpush1.msra.mxu0 %v461
        %540 = vmatprep.subr.mxu0 %v466
        %541 = vmatpush1.msra.mxu0 %v465
        %542 = vmatprep.subr.mxu0 %v470
        %543 = vmatpush1.msra.mxu0 %v469
        %544 = vmatprep.subr.mxu0 %v474
        %545 = vmatpush1.msra.mxu0 %v473
        %546 = vmatprep.subr.mxu0 %v478
        %547 = vmatpush1.msra.mxu0 %v477
        %548 = vmatprep.subr.mxu0 %v482
        %549 = vmatpush1.msra.mxu0 %v481
        %550 = vmatprep.subr.mxu0 %v486
        %551 = vmatpush1.msra.mxu0 %v485
        %552 = vmatprep.subr.mxu0 %v490
        %553 = vmatpush1.msra.mxu0 %v489
        %554 = vmatprep.subr.mxu0 %v494
        %555 = vmatpush1.msra.mxu0 %v493
        %556 = vmatprep.subr.mxu0 %v498
        %557 = vmatpush1.msra.mxu0 %v497
        %558 = vmatprep.subr.mxu0 %v502
        %559 = vmatpush1.msra.mxu0 %v501
        %560 = vmatprep.subr.mxu0 %v506
        %561 = vmatpush1.msra.mxu0 %v505
        %562 = vmatprep.subr.mxu0 %v510
        %563 = vmatpush1.msra.mxu0 %v509
        %564 = vmatprep.subr.mxu0 %v514
        %565 = vmatpush1.msra.mxu0 %v513
        %566 = vmatprep.subr.mxu0 0.0
        %567 = vmatpush1.msra.mxu0 0.0
        %568 = vmatprep.subr.mxu0 0.0
        %569 = vmatpush1.msra.mxu0 0.0
        %570 = vmatprep.subr.mxu0 0.0
        %571 = vmatpush1.msra.mxu0 0.0
        %572 = vmatprep.subr.mxu0 0.0
        %573 = vmatpush1.msra.mxu0 0.0
        %574 = vmatprep.subr.mxu0 0.0
        %575 = vmatpush1.msra.mxu0 0.0
        %576 = vmatprep.subr.mxu0 0.0
        %577 = vmatpush1.msra.mxu0 0.0
        %578 = vmatprep.subr.mxu0 0.0
        %579 = vmatpush1.msra.mxu0 0.0
        %580 = vmatprep.subr.mxu0 0.0
        %581 = vmatpush1.msra.mxu0 0.0
        %582 = vmatprep.subr.mxu0 0.0
        %583 = vmatpush1.msra.mxu0 0.0
        %584 = vmatprep.subr.mxu0 0.0
        %585 = vmatpush1.msra.mxu0 0.0
        %586 = vmatprep.subr.mxu0 0.0
        %587 = vmatpush1.msra.mxu0 0.0
        %588 = vmatprep.subr.mxu0 0.0
        %589 = vmatpush1.msra.mxu0 0.0
        %590 = vmatprep.subr.mxu0 0.0
        %591 = vmatpush1.msra.mxu0 0.0
        %592 = vmatprep.subr.mxu0 0.0
        %593 = vmatpush1.msra.mxu0 0.0
        %594 = vmatprep.subr.mxu0 0.0
        %595 = vmatpush1.msra.mxu0 0.0
        %596 = vmatprep.subr.mxu0 0.0
        %597 = vmatpush1.msra.mxu0 0.0
        %598 = vmatprep.mubr.f32.mxu0 0.0
        %599 = vmatmul.mubr.f32.gmra.mrb[0].mxu0 %v517
        %v600 = vpop.f32.mrb[0].mxu0
        %v601 = vadd.f32 0.0, %v600
        %v602 = vpop.f32.mrb[0].mxu0
        %v603 = vadd.f32 0.0, %v602
        %604 = vdwg.mxu0
        %605 = vmatprep.subr.mxu0 %v456
        %606 = vmatpush1.msra.mxu0 %v455
        %607 = vmatprep.subr.mxu0 %v460
        %608 = vmatpush1.msra.mxu0 %v459
        %609 = vmatprep.subr.mxu0 %v464
        %610 = vmatpush1.msra.mxu0 %v463
        %611 = vmatprep.subr.mxu0 %v468
        %612 = vmatpush1.msra.mxu0 %v467
        %613 = vmatprep.subr.mxu0 %v472
        %614 = vmatpush1.msra.mxu0 %v471
        %615 = vmatprep.subr.mxu0 %v476
        %616 = vmatpush1.msra.mxu0 %v475
        %617 = vmatprep.subr.mxu0 %v480
        %618 = vmatpush1.msra.mxu0 %v479
        %619 = vmatprep.subr.mxu0 %v484
        %620 = vmatpush1.msra.mxu0 %v483
        %621 = vmatprep.subr.mxu0 %v488
        %622 = vmatpush1.msra.mxu0 %v487
        %623 = vmatprep.subr.mxu0 %v492
        %624 = vmatpush1.msra.mxu0 %v491
        %625 = vmatprep.subr.mxu0 %v496
        %626 = vmatpush1.msra.mxu0 %v495
        %627 = vmatprep.subr.mxu0 %v500
        %628 = vmatpush1.msra.mxu0 %v499
        %629 = vmatprep.subr.mxu0 %v504
        %630 = vmatpush1.msra.mxu0 %v503
        %631 = vmatprep.subr.mxu0 %v508
        %632 = vmatpush1.msra.mxu0 %v507
        %633 = vmatprep.subr.mxu0 %v512
        %634 = vmatpush1.msra.mxu0 %v511
        %635 = vmatprep.subr.mxu0 %v516
        %636 = vmatpush1.msra.mxu0 %v515
        %637 = vmatprep.subr.mxu0 0.0
        %638 = vmatpush1.msra.mxu0 0.0
        %639 = vmatprep.subr.mxu0 0.0
        %640 = vmatpush1.msra.mxu0 0.0
        %641 = vmatprep.subr.mxu0 0.0
        %642 = vmatpush1.msra.mxu0 0.0
        %643 = vmatprep.subr.mxu0 0.0
        %644 = vmatpush1.msra.mxu0 0.0
        %645 = vmatprep.subr.mxu0 0.0
        %646 = vmatpush1.msra.mxu0 0.0
        %647 = vmatprep.subr.mxu0 0.0
        %648 = vmatpush1.msra.mxu0 0.0
        %649 = vmatprep.subr.mxu0 0.0
        %650 = vmatpush1.msra.mxu0 0.0
        %651 = vmatprep.subr.mxu0 0.0
        %652 = vmatpush1.msra.mxu0 0.0
        %653 = vmatprep.subr.mxu0 0.0
        %654 = vmatpush1.msra.mxu0 0.0
        %655 = vmatprep.subr.mxu0 0.0
        %656 = vmatpush1.msra.mxu0 0.0
        %657 = vmatprep.subr.mxu0 0.0
        %658 = vmatpush1.msra.mxu0 0.0
        %659 = vmatprep.subr.mxu0 0.0
        %660 = vmatpush1.msra.mxu0 0.0
        %661 = vmatprep.subr.mxu0 0.0
        %662 = vmatpush1.msra.mxu0 0.0
        %663 = vmatprep.subr.mxu0 0.0
        %664 = vmatpush1.msra.mxu0 0.0
        %665 = vmatprep.subr.mxu0 0.0
        %666 = vmatpush1.msra.mxu0 0.0
        %667 = vmatprep.subr.mxu0 0.0
        %668 = vmatpush1.msra.mxu0 0.0
        %669 = vmatprep.mubr.f32.mxu0 0.0
        %670 = vmatmul.mubr.f32.gmra.mrb[0].mxu0 %v517
        %v671 = vpop.f32.mrb[0].mxu0
        %v672 = vadd.f32 0.0, %v671
        %v673 = vpop.f32.mrb[0].mxu0
        %v674 = vadd.f32 0.0, %v673
        %675 = vdwg.mxu0
        %vm676 = vcmask 31744
        %v678 = vsel %vm676, %v518, 0
        %v681 = vsel %vm676, %v519, 0
        %v684 = vsel %vm676, %v520, 0
        %v687 = vsel %vm676, %v521, 0
        %v690 = vsel %vm676, %v522, 0
        %v693 = vsel %vm676, %v523, 0
        %v696 = vsel %vm676, %v524, 0
        %v699 = vsel %vm676, %v525, 0
        %v702 = vsel %vm676, %v526, 0
        %v705 = vsel %vm676, %v527, 0
        %v708 = vsel %vm676, %v528, 0
        %v711 = vsel %vm676, %v529, 0
        %v714 = vsel %vm676, %v530, 0
        %v717 = vsel %vm676, %v531, 0
        %v720 = vsel %vm676, %v532, 0
        %v723 = vsel %vm676, %v533, 0
        %vm725 = vcmask 1043456
        %v727 = vsel %vm725, %v601, 0
        %v730 = vsel %vm725, %v603, 0
        %v733 = vsel %vm725, %v672, 0
        %v736 = vsel %vm725, %v674, 0
        %738 = vmatprep.subr.mxu0 %v730
        %739 = vmatpush1.msra.mxu0 %v727
        %740 = vmatprep.subr.mxu0 0.0
        %741 = vmatpush1.msra.mxu0 0.0
        %742 = vmatprep.subr.mxu0 0.0
        %743 = vmatpush1.msra.mxu0 0.0
        %744 = vmatprep.subr.mxu0 0.0
        %745 = vmatpush1.msra.mxu0 0.0
        %746 = vmatprep.subr.mxu0 0.0
        %747 = vmatpush1.msra.mxu0 0.0
        %748 = vmatprep.subr.mxu0 0.0
        %749 = vmatpush1.msra.mxu0 0.0
        %750 = vmatprep.subr.mxu0 0.0
        %751 = vmatpush1.msra.mxu0 0.0
        %752 = vmatprep.subr.mxu0 0.0
        %753 = vmatpush1.msra.mxu0 0.0
        %754 = vmatprep.subr.mxu0 0.0
        %755 = vmatpush1.msra.mxu0 0.0
        %756 = vmatprep.subr.mxu0 0.0
        %757 = vmatpush1.msra.mxu0 0.0
        %758 = vmatprep.subr.mxu0 0.0
        %759 = vmatpush1.msra.mxu0 0.0
        %760 = vmatprep.subr.mxu0 0.0
        %761 = vmatpush1.msra.mxu0 0.0
        %762 = vmatprep.subr.mxu0 0.0
        %763 = vmatpush1.msra.mxu0 0.0
        %764 = vmatprep.subr.mxu0 0.0
        %765 = vmatpush1.msra.mxu0 0.0
        %766 = vmatprep.subr.mxu0 0.0
        %767 = vmatpush1.msra.mxu0 0.0
        %768 = vmatprep.subr.mxu0 0.0
        %769 = vmatpush1.msra.mxu0 0.0
        %770 = vmatprep.subr.mxu0 0.0
        %771 = vmatpush1.msra.mxu0 0.0
        %772 = vmatprep.subr.mxu0 0.0
        %773 = vmatpush1.msra.mxu0 0.0
        %774 = vmatprep.subr.mxu0 0.0
        %775 = vmatpush1.msra.mxu0 0.0
        %776 = vmatprep.subr.mxu0 0.0
        %777 = vmatpush1.msra.mxu0 0.0
        %778 = vmatprep.subr.mxu0 0.0
        %779 = vmatpush1.msra.mxu0 0.0
        %780 = vmatprep.subr.mxu0 0.0
        %781 = vmatpush1.msra.mxu0 0.0
        %782 = vmatprep.subr.mxu0 0.0
        %783 = vmatpush1.msra.mxu0 0.0
        %784 = vmatprep.subr.mxu0 0.0
        %785 = vmatpush1.msra.mxu0 0.0
        %786 = vmatprep.subr.mxu0 0.0
        %787 = vmatpush1.msra.mxu0 0.0
        %788 = vmatprep.subr.mxu0 0.0
        %789 = vmatpush1.msra.mxu0 0.0
        %790 = vmatprep.subr.mxu0 0.0
        %791 = vmatpush1.msra.mxu0 0.0
        %792 = vmatprep.subr.mxu0 0.0
        %793 = vmatpush1.msra.mxu0 0.0
        %794 = vmatprep.subr.mxu0 0.0
        %795 = vmatpush1.msra.mxu0 0.0
        %796 = vmatprep.subr.mxu0 0.0
        %797 = vmatpush1.msra.mxu0 0.0
        %798 = vmatprep.subr.mxu0 0.0
        %799 = vmatpush1.msra.mxu0 0.0
        %800 = vmatprep.subr.mxu0 0.0
        %801 = vmatpush1.msra.mxu0 0.0
        %802 = vmatprep.mubr.f32.mxu0 0.0
        %803 = vmatmul.mubr.f32.gmra.mrb[0].mxu0 %v678
        %v804 = vpop.f32.mrb[0].mxu0
        %v805 = vadd.f32 0.0, %v804
        %v806 = vpop.f32.mrb[0].mxu0
        %v807 = vadd.f32 0.0, %v806
        %808 = vmatprep.mubr.f32.mxu0 0.0
        %809 = vmatmul.mubr.f32.gmra.mrb[0].mxu0 %v681
        %v810 = vpop.f32.mrb[0].mxu0
        %v811 = vadd.f32 0.0, %v810
        %v812 = vpop.f32.mrb[0].mxu0
        %v813 = vadd.f32 0.0, %v812
        %814 = vmatprep.mubr.f32.mxu0 0.0
        %815 = vmatmul.mubr.f32.gmra.mrb[0].mxu0 %v684
        %v816 = vpop.f32.mrb[0].mxu0
        %v817 = vadd.f32 0.0, %v816
        %v818 = vpop.f32.mrb[0].mxu0
        %v819 = vadd.f32 0.0, %v818
        %820 = vmatprep.mubr.f32.mxu0 0.0
        %821 = vmatmul.mubr.f32.gmra.mrb[0].mxu0 %v687
        %v822 = vpop.f32.mrb[0].mxu0
        %v823 = vadd.f32 0.0, %v822
        %v824 = vpop.f32.mrb[0].mxu0
        %v825 = vadd.f32 0.0, %v824
        %826 = vmatprep.mubr.f32.mxu0 0.0
        %827 = vmatmul.mubr.f32.gmra.mrb[0].mxu0 %v690
        %v828 = vpop.f32.mrb[0].mxu0
        %v829 = vadd.f32 0.0, %v828
        %v830 = vpop.f32.mrb[0].mxu0
        %v831 = vadd.f32 0.0, %v830
        %832 = vmatprep.mubr.f32.mxu0 0.0
        %833 = vmatmul.mubr.f32.gmra.mrb[0].mxu0 %v693
        %v834 = vpop.f32.mrb[0].mxu0
        %v835 = vadd.f32 0.0, %v834
        %v836 = vpop.f32.mrb[0].mxu0
        %v837 = vadd.f32 0.0, %v836
        %838 = vmatprep.mubr.f32.mxu0 0.0
        %839 = vmatmul.mubr.f32.gmra.mrb[0].mxu0 %v696
        %v840 = vpop.f32.mrb[0].mxu0
        %v841 = vadd.f32 0.0, %v840
        %v842 = vpop.f32.mrb[0].mxu0
        %v843 = vadd.f32 0.0, %v842
        %844 = vmatprep.mubr.f32.mxu0 0.0
        %845 = vmatmul.mubr.f32.gmra.mrb[0].mxu0 %v699
        %v846 = vpop.f32.mrb[0].mxu0
        %v847 = vadd.f32 0.0, %v846
        %v848 = vpop.f32.mrb[0].mxu0
        %v849 = vadd.f32 0.0, %v848
        %850 = vmatprep.mubr.f32.mxu0 0.0
        %851 = vmatmul.mubr.f32.gmra.mrb[0].mxu0 %v702
        %v852 = vpop.f32.mrb[0].mxu0
        %v853 = vadd.f32 0.0, %v852
        %v854 = vpop.f32.mrb[0].mxu0
        %v855 = vadd.f32 0.0, %v854
        %856 = vmatprep.mubr.f32.mxu0 0.0
        %857 = vmatmul.mubr.f32.gmra.mrb[0].mxu0 %v705
        %v858 = vpop.f32.mrb[0].mxu0
        %v859 = vadd.f32 0.0, %v858
        %v860 = vpop.f32.mrb[0].mxu0
        %v861 = vadd.f32 0.0, %v860
        %862 = vmatprep.mubr.f32.mxu0 0.0
        %863 = vmatmul.mubr.f32.gmra.mrb[0].mxu0 %v708
        %v864 = vpop.f32.mrb[0].mxu0
        %v865 = vadd.f32 0.0, %v864
        %v866 = vpop.f32.mrb[0].mxu0
        %v867 = vadd.f32 0.0, %v866
        %868 = vmatprep.mubr.f32.mxu0 0.0
        %869 = vmatmul.mubr.f32.gmra.mrb[0].mxu0 %v711
        %v870 = vpop.f32.mrb[0].mxu0
        %v871 = vadd.f32 0.0, %v870
        %v872 = vpop.f32.mrb[0].mxu0
        %v873 = vadd.f32 0.0, %v872
        %874 = vmatprep.mubr.f32.mxu0 0.0
        %875 = vmatmul.mubr.f32.gmra.mrb[0].mxu0 %v714
        %v876 = vpop.f32.mrb[0].mxu0
        %v877 = vadd.f32 0.0, %v876
        %v878 = vpop.f32.mrb[0].mxu0
        %v879 = vadd.f32 0.0, %v878
        %880 = vmatprep.mubr.f32.mxu0 0.0
        %881 = vmatmul.mubr.f32.gmra.mrb[0].mxu0 %v717
        %v882 = vpop.f32.mrb[0].mxu0
        %v883 = vadd.f32 0.0, %v882
        %v884 = vpop.f32.mrb[0].mxu0
        %v885 = vadd.f32 0.0, %v884
        %886 = vmatprep.mubr.f32.mxu0 0.0
        %887 = vmatmul.mubr.f32.gmra.mrb[0].mxu0 %v720
        %v888 = vpop.f32.mrb[0].mxu0
        %v889 = vadd.f32 0.0, %v888
        %v890 = vpop.f32.mrb[0].mxu0
        %v891 = vadd.f32 0.0, %v890
        %892 = vmatprep.mubr.f32.mxu0 0.0
        %893 = vmatmul.mubr.f32.gmra.mrb[0].mxu0 %v723
        %v894 = vpop.f32.mrb[0].mxu0
        %v895 = vadd.f32 0.0, %v894
        %v896 = vpop.f32.mrb[0].mxu0
        %v897 = vadd.f32 0.0, %v896
        %898 = vdwg.mxu0
        %899 = vmatprep.subr.mxu0 %v736
        %900 = vmatpush1.msra.mxu0 %v733
        %901 = vmatprep.subr.mxu0 0.0
        %902 = vmatpush1.msra.mxu0 0.0
        %903 = vmatprep.subr.mxu0 0.0
        %904 = vmatpush1.msra.mxu0 0.0
        %905 = vmatprep.subr.mxu0 0.0
        %906 = vmatpush1.msra.mxu0 0.0
        %907 = vmatprep.subr.mxu0 0.0
        %908 = vmatpush1.msra.mxu0 0.0
        %909 = vmatprep.subr.mxu0 0.0
        %910 = vmatpush1.msra.mxu0 0.0
        %911 = vmatprep.subr.mxu0 0.0
        %912 = vmatpush1.msra.mxu0 0.0
        %913 = vmatprep.subr.mxu0 0.0
        %914 = vmatpush1.msra.mxu0 0.0
        %915 = vmatprep.subr.mxu0 0.0
        %916 = vmatpush1.msra.mxu0 0.0
        %917 = vmatprep.subr.mxu0 0.0
        %918 = vmatpush1.msra.mxu0 0.0
        %919 = vmatprep.subr.mxu0 0.0
        %920 = vmatpush1.msra.mxu0 0.0
        %921 = vmatprep.subr.mxu0 0.0
        %922 = vmatpush1.msra.mxu0 0.0
        %923 = vmatprep.subr.mxu0 0.0
        %924 = vmatpush1.msra.mxu0 0.0
        %925 = vmatprep.subr.mxu0 0.0
        %926 = vmatpush1.msra.mxu0 0.0
        %927 = vmatprep.subr.mxu0 0.0
        %928 = vmatpush1.msra.mxu0 0.0
        %929 = vmatprep.subr.mxu0 0.0
        %930 = vmatpush1.msra.mxu0 0.0
        %931 = vmatprep.subr.mxu0 0.0
        %932 = vmatpush1.msra.mxu0 0.0
        %933 = vmatprep.subr.mxu0 0.0
        %934 = vmatpush1.msra.mxu0 0.0
        %935 = vmatprep.subr.mxu0 0.0
        %936 = vmatpush1.msra.mxu0 0.0
        %937 = vmatprep.subr.mxu0 0.0
        %938 = vmatpush1.msra.mxu0 0.0
        %939 = vmatprep.subr.mxu0 0.0
        %940 = vmatpush1.msra.mxu0 0.0
        %941 = vmatprep.subr.mxu0 0.0
        %942 = vmatpush1.msra.mxu0 0.0
        %943 = vmatprep.subr.mxu0 0.0
        %944 = vmatpush1.msra.mxu0 0.0
        %945 = vmatprep.subr.mxu0 0.0
        %946 = vmatpush1.msra.mxu0 0.0
        %947 = vmatprep.subr.mxu0 0.0
        %948 = vmatpush1.msra.mxu0 0.0
        %949 = vmatprep.subr.mxu0 0.0
        %950 = vmatpush1.msra.mxu0 0.0
        %951 = vmatprep.subr.mxu0 0.0
        %952 = vmatpush1.msra.mxu0 0.0
        %953 = vmatprep.subr.mxu0 0.0
        %954 = vmatpush1.msra.mxu0 0.0
        %955 = vmatprep.subr.mxu0 0.0
        %956 = vmatpush1.msra.mxu0 0.0
        %957 = vmatprep.subr.mxu0 0.0
        %958 = vmatpush1.msra.mxu0 0.0
        %959 = vmatprep.subr.mxu0 0.0
        %960 = vmatpush1.msra.mxu0 0.0
        %961 = vmatprep.subr.mxu0 0.0
        %962 = vmatpush1.msra.mxu0 0.0
        %963 = vmatprep.mubr.f32.mxu0 0.0
        %964 = vmatmul.mubr.f32.gmra.mrb[0].mxu0 %v678
        %v965 = vpop.f32.mrb[0].mxu0
        %v966 = vadd.f32 0.0, %v965
        %v967 = vpop.f32.mrb[0].mxu0
        %v968 = vadd.f32 0.0, %v967
        %969 = vmatprep.mubr.f32.mxu0 0.0
        %970 = vmatmul.mubr.f32.gmra.mrb[0].mxu0 %v681
        %v971 = vpop.f32.mrb[0].mxu0
        %v972 = vadd.f32 0.0, %v971
        %v973 = vpop.f32.mrb[0].mxu0
        %v974 = vadd.f32 0.0, %v973
        %975 = vmatprep.mubr.f32.mxu0 0.0
        %976 = vmatmul.mubr.f32.gmra.mrb[0].mxu0 %v684
        %v977 = vpop.f32.mrb[0].mxu0
        %v978 = vadd.f32 0.0, %v977
        %v979 = vpop.f32.mrb[0].mxu0
        %v980 = vadd.f32 0.0, %v979
        %981 = vmatprep.mubr.f32.mxu0 0.0
        %982 = vmatmul.mubr.f32.gmra.mrb[0].mxu0 %v687
        %v983 = vpop.f32.mrb[0].mxu0
        %v984 = vadd.f32 0.0, %v983
        %v985 = vpop.f32.mrb[0].mxu0
        %v986 = vadd.f32 0.0, %v985
        %987 = vmatprep.mubr.f32.mxu0 0.0
        %988 = vmatmul.mubr.f32.gmra.mrb[0].mxu0 %v690
        %v989 = vpop.f32.mrb[0].mxu0
        %v990 = vadd.f32 0.0, %v989
        %v991 = vpop.f32.mrb[0].mxu0
        %v992 = vadd.f32 0.0, %v991
        %993 = vmatprep.mubr.f32.mxu0 0.0
        %994 = vmatmul.mubr.f32.gmra.mrb[0].mxu0 %v693
        %v995 = vpop.f32.mrb[0].mxu0
        %v996 = vadd.f32 0.0, %v995
        %v997 = vpop.f32.mrb[0].mxu0
        %v998 = vadd.f32 0.0, %v997
        %999 = vmatprep.mubr.f32.mxu0 0.0
        %1000 = vmatmul.mubr.f32.gmra.mrb[0].mxu0 %v696
        %v1001 = vpop.f32.mrb[0].mxu0
        %v1002 = vadd.f32 0.0, %v1001
        %v1003 = vpop.f32.mrb[0].mxu0
        %v1004 = vadd.f32 0.0, %v1003
        %1005 = vmatprep.mubr.f32.mxu0 0.0
        %1006 = vmatmul.mubr.f32.gmra.mrb[0].mxu0 %v699
        %v1007 = vpop.f32.mrb[0].mxu0
        %v1008 = vadd.f32 0.0, %v1007
        %v1009 = vpop.f32.mrb[0].mxu0
        %v1010 = vadd.f32 0.0, %v1009
        %1011 = vmatprep.mubr.f32.mxu0 0.0
        %1012 = vmatmul.mubr.f32.gmra.mrb[0].mxu0 %v702
        %v1013 = vpop.f32.mrb[0].mxu0
        %v1014 = vadd.f32 0.0, %v1013
        %v1015 = vpop.f32.mrb[0].mxu0
        %v1016 = vadd.f32 0.0, %v1015
        %1017 = vmatprep.mubr.f32.mxu0 0.0
        %1018 = vmatmul.mubr.f32.gmra.mrb[0].mxu0 %v705
        %v1019 = vpop.f32.mrb[0].mxu0
        %v1020 = vadd.f32 0.0, %v1019
        %v1021 = vpop.f32.mrb[0].mxu0
        %v1022 = vadd.f32 0.0, %v1021
        %1023 = vmatprep.mubr.f32.mxu0 0.0
        %1024 = vmatmul.mubr.f32.gmra.mrb[0].mxu0 %v708
        %v1025 = vpop.f32.mrb[0].mxu0
        %v1026 = vadd.f32 0.0, %v1025
        %v1027 = vpop.f32.mrb[0].mxu0
        %v1028 = vadd.f32 0.0, %v1027
        %1029 = vmatprep.mubr.f32.mxu0 0.0
        %1030 = vmatmul.mubr.f32.gmra.mrb[0].mxu0 %v711
        %v1031 = vpop.f32.mrb[0].mxu0
        %v1032 = vadd.f32 0.0, %v1031
        %v1033 = vpop.f32.mrb[0].mxu0
        %v1034 = vadd.f32 0.0, %v1033
        %1035 = vmatprep.mubr.f32.mxu0 0.0
        %1036 = vmatmul.mubr.f32.gmra.mrb[0].mxu0 %v714
        %v1037 = vpop.f32.mrb[0].mxu0
        %v1038 = vadd.f32 0.0, %v1037
        %v1039 = vpop.f32.mrb[0].mxu0
        %v1040 = vadd.f32 0.0, %v1039
        %1041 = vmatprep.mubr.f32.mxu0 0.0
        %1042 = vmatmul.mubr.f32.gmra.mrb[0].mxu0 %v717
        %v1043 = vpop.f32.mrb[0].mxu0
        %v1044 = vadd.f32 0.0, %v1043
        %v1045 = vpop.f32.mrb[0].mxu0
        %v1046 = vadd.f32 0.0, %v1045
        %1047 = vmatprep.mubr.f32.mxu0 0.0
        %1048 = vmatmul.mubr.f32.gmra.mrb[0].mxu0 %v720
        %v1049 = vpop.f32.mrb[0].mxu0
        %v1050 = vadd.f32 0.0, %v1049
        %v1051 = vpop.f32.mrb[0].mxu0
        %v1052 = vadd.f32 0.0, %v1051
        %1053 = vmatprep.mubr.f32.mxu0 0.0
        %1054 = vmatmul.mubr.f32.gmra.mrb[0].mxu0 %v723
        %v1055 = vpop.f32.mrb[0].mxu0
        %v1056 = vadd.f32 0.0, %v1055
        %v1057 = vpop.f32.mrb[0].mxu0
        %v1058 = vadd.f32 0.0, %v1057
        %1059 = vdwg.mxu0
        %v1060 = vsub.f32 %v453, %v805
        %v1061 = vsub.f32 %v454, %v807
        %v1062 = vsub.f32 %v455, %v966
        %v1063 = vsub.f32 %v456, %v968
        %v1064 = vsub.f32 %v457, %v811
        %v1065 = vsub.f32 %v458, %v813
        %v1066 = vsub.f32 %v459, %v972
        %v1067 = vsub.f32 %v460, %v974
        %v1068 = vsub.f32 %v461, %v817
        %v1069 = vsub.f32 %v462, %v819
        %v1070 = vsub.f32 %v463, %v978
        %v1071 = vsub.f32 %v464, %v980
        %v1072 = vsub.f32 %v465, %v823
        %v1073 = vsub.f32 %v466, %v825
        %v1074 = vsub.f32 %v467, %v984
        %v1075 = vsub.f32 %v468, %v986
        %v1076 = vsub.f32 %v469, %v829
        %v1077 = vsub.f32 %v470, %v831
        %v1078 = vsub.f32 %v471, %v990
        %v1079 = vsub.f32 %v472, %v992
        %v1080 = vsub.f32 %v473, %v835
        %v1081 = vsub.f32 %v474, %v837
        %v1082 = vsub.f32 %v475, %v996
        %v1083 = vsub.f32 %v476, %v998
        %v1084 = vsub.f32 %v477, %v841
        %v1085 = vsub.f32 %v478, %v843
        %v1086 = vsub.f32 %v479, %v1002
        %v1087 = vsub.f32 %v480, %v1004
        %v1088 = vsub.f32 %v481, %v847
        %v1089 = vsub.f32 %v482, %v849
        %v1090 = vsub.f32 %v483, %v1008
        %v1091 = vsub.f32 %v484, %v1010
        %v1092 = vsub.f32 %v485, %v853
        %v1093 = vsub.f32 %v486, %v855
        %v1094 = vsub.f32 %v487, %v1014
        %v1095 = vsub.f32 %v488, %v1016
        %v1096 = vsub.f32 %v489, %v859
        %v1097 = vsub.f32 %v490, %v861
        %v1098 = vsub.f32 %v491, %v1020
        %v1099 = vsub.f32 %v492, %v1022
        %v1100 = vsub.f32 %v493, %v865
        %v1101 = vsub.f32 %v494, %v867
        %v1102 = vsub.f32 %v495, %v1026
        %v1103 = vsub.f32 %v496, %v1028
        %v1104 = vsub.f32 %v497, %v871
        %v1105 = vsub.f32 %v498, %v873
        %v1106 = vsub.f32 %v499, %v1032
        %v1107 = vsub.f32 %v500, %v1034
        %v1108 = vsub.f32 %v501, %v877
        %v1109 = vsub.f32 %v502, %v879
        %v1110 = vsub.f32 %v503, %v1038
        %v1111 = vsub.f32 %v504, %v1040
        %v1112 = vsub.f32 %v505, %v883
        %v1113 = vsub.f32 %v506, %v885
        %v1114 = vsub.f32 %v507, %v1044
        %v1115 = vsub.f32 %v508, %v1046
        %v1116 = vsub.f32 %v509, %v889
        %v1117 = vsub.f32 %v510, %v891
        %v1118 = vsub.f32 %v511, %v1050
        %v1119 = vsub.f32 %v512, %v1052
        %v1120 = vsub.f32 %v513, %v895
        %v1121 = vsub.f32 %v514, %v897
        %v1122 = vsub.f32 %v515, %v1056
        %v1123 = vsub.f32 %v516, %v1058
        %v1124 = vmul.f32 %v1060, %v1060
        %v1125 = vmul.f32 %v1061, %v1061
        %v1126 = vmul.f32 %v1062, %v1062
        %v1127 = vmul.f32 %v1063, %v1063
        %v1128 = vmul.f32 %v1064, %v1064
        %v1129 = vmul.f32 %v1065, %v1065
        %v1130 = vmul.f32 %v1066, %v1066
        %v1131 = vmul.f32 %v1067, %v1067
        %v1132 = vmul.f32 %v1068, %v1068
        %v1133 = vmul.f32 %v1069, %v1069
        %v1134 = vmul.f32 %v1070, %v1070
        %v1135 = vmul.f32 %v1071, %v1071
        %v1136 = vmul.f32 %v1072, %v1072
        %v1137 = vmul.f32 %v1073, %v1073
        %v1138 = vmul.f32 %v1074, %v1074
        %v1139 = vmul.f32 %v1075, %v1075
        %v1140 = vmul.f32 %v1076, %v1076
        %v1141 = vmul.f32 %v1077, %v1077
        %v1142 = vmul.f32 %v1078, %v1078
        %v1143 = vmul.f32 %v1079, %v1079
        %v1144 = vmul.f32 %v1080, %v1080
        %v1145 = vmul.f32 %v1081, %v1081
        %v1146 = vmul.f32 %v1082, %v1082
        %v1147 = vmul.f32 %v1083, %v1083
        %v1148 = vmul.f32 %v1084, %v1084
        %v1149 = vmul.f32 %v1085, %v1085
        %v1150 = vmul.f32 %v1086, %v1086
        %v1151 = vmul.f32 %v1087, %v1087
        %v1152 = vmul.f32 %v1088, %v1088
        %v1153 = vmul.f32 %v1089, %v1089
        %v1154 = vmul.f32 %v1090, %v1090
        %v1155 = vmul.f32 %v1091, %v1091
        %v1156 = vmul.f32 %v1092, %v1092
        %v1157 = vmul.f32 %v1093, %v1093
        %v1158 = vmul.f32 %v1094, %v1094
        %v1159 = vmul.f32 %v1095, %v1095
        %v1160 = vmul.f32 %v1096, %v1096
        %v1161 = vmul.f32 %v1097, %v1097
        %v1162 = vmul.f32 %v1098, %v1098
        %v1163 = vmul.f32 %v1099, %v1099
        %v1164 = vmul.f32 %v1100, %v1100
        %v1165 = vmul.f32 %v1101, %v1101
        %v1166 = vmul.f32 %v1102, %v1102
        %v1167 = vmul.f32 %v1103, %v1103
        %v1168 = vmul.f32 %v1104, %v1104
        %v1169 = vmul.f32 %v1105, %v1105
        %v1170 = vmul.f32 %v1106, %v1106
        %v1171 = vmul.f32 %v1107, %v1107
        %v1172 = vmul.f32 %v1108, %v1108
        %v1173 = vmul.f32 %v1109, %v1109
        %v1174 = vmul.f32 %v1110, %v1110
        %v1175 = vmul.f32 %v1111, %v1111
        %v1176 = vmul.f32 %v1112, %v1112
        %v1177 = vmul.f32 %v1113, %v1113
        %v1178 = vmul.f32 %v1114, %v1114
        %v1179 = vmul.f32 %v1115, %v1115
        %v1180 = vmul.f32 %v1116, %v1116
        %v1181 = vmul.f32 %v1117, %v1117
        %v1182 = vmul.f32 %v1118, %v1118
        %v1183 = vmul.f32 %v1119, %v1119
        %v1184 = vmul.f32 %v1120, %v1120
        %v1185 = vmul.f32 %v1121, %v1121
        %v1186 = vmul.f32 %v1122, %v1122
        %v1187 = vmul.f32 %v1123, %v1123
        %1188 = vmatprep.subr.mxu0 %v1125
        %1189 = vmatpush1.msra.mxu0 %v1124
        %1190 = vmatprep.subr.mxu0 %v1129
        %1191 = vmatpush1.msra.mxu0 %v1128
        %1192 = vmatprep.subr.mxu0 %v1133
        %1193 = vmatpush1.msra.mxu0 %v1132
        %1194 = vmatprep.subr.mxu0 %v1137
        %1195 = vmatpush1.msra.mxu0 %v1136
        %1196 = vmatprep.subr.mxu0 %v1141
        %1197 = vmatpush1.msra.mxu0 %v1140
        %1198 = vmatprep.subr.mxu0 %v1145
        %1199 = vmatpush1.msra.mxu0 %v1144
        %1200 = vmatprep.subr.mxu0 %v1149
        %1201 = vmatpush1.msra.mxu0 %v1148
        %1202 = vmatprep.subr.mxu0 %v1153
        %1203 = vmatpush1.msra.mxu0 %v1152
        %1204 = vmatprep.subr.mxu0 %v1157
        %1205 = vmatpush1.msra.mxu0 %v1156
        %1206 = vmatprep.subr.mxu0 %v1161
        %1207 = vmatpush1.msra.mxu0 %v1160
        %1208 = vmatprep.subr.mxu0 %v1165
        %1209 = vmatpush1.msra.mxu0 %v1164
        %1210 = vmatprep.subr.mxu0 %v1169
        %1211 = vmatpush1.msra.mxu0 %v1168
        %1212 = vmatprep.subr.mxu0 %v1173
        %1213 = vmatpush1.msra.mxu0 %v1172
        %1214 = vmatprep.subr.mxu0 %v1177
        %1215 = vmatpush1.msra.mxu0 %v1176
        %1216 = vmatprep.subr.mxu0 %v1181
        %1217 = vmatpush1.msra.mxu0 %v1180
        %1218 = vmatprep.subr.mxu0 %v1185
        %1219 = vmatpush1.msra.mxu0 %v1184
        %1220 = vmatprep.subr.mxu0 0.0
        %1221 = vmatpush1.msra.mxu0 0.0
        %1222 = vmatprep.subr.mxu0 0.0
        %1223 = vmatpush1.msra.mxu0 0.0
        %1224 = vmatprep.subr.mxu0 0.0
        %1225 = vmatpush1.msra.mxu0 0.0
        %1226 = vmatprep.subr.mxu0 0.0
        %1227 = vmatpush1.msra.mxu0 0.0
        %1228 = vmatprep.subr.mxu0 0.0
        %1229 = vmatpush1.msra.mxu0 0.0
        %1230 = vmatprep.subr.mxu0 0.0
        %1231 = vmatpush1.msra.mxu0 0.0
        %1232 = vmatprep.subr.mxu0 0.0
        %1233 = vmatpush1.msra.mxu0 0.0
        %1234 = vmatprep.subr.mxu0 0.0
        %1235 = vmatpush1.msra.mxu0 0.0
        %1236 = vmatprep.subr.mxu0 0.0
        %1237 = vmatpush1.msra.mxu0 0.0
        %1238 = vmatprep.subr.mxu0 0.0
        %1239 = vmatpush1.msra.mxu0 0.0
        %1240 = vmatprep.subr.mxu0 0.0
        %1241 = vmatpush1.msra.mxu0 0.0
        %1242 = vmatprep.subr.mxu0 0.0
        %1243 = vmatpush1.msra.mxu0 0.0
        %1244 = vmatprep.subr.mxu0 0.0
        %1245 = vmatpush1.msra.mxu0 0.0
        %1246 = vmatprep.subr.mxu0 0.0
        %1247 = vmatpush1.msra.mxu0 0.0
        %1248 = vmatprep.subr.mxu0 0.0
        %1249 = vmatpush1.msra.mxu0 0.0
        %1250 = vmatprep.subr.mxu0 0.0
        %1251 = vmatpush1.msra.mxu0 0.0
        %1252 = vmatprep.mubr.f32.mxu0 0.0
        %1253 = vmatmul.mubr.f32.gmra.mrb[0].mxu0 %v517
        %v1254 = vpop.f32.mrb[0].mxu0
        %v1255 = vadd.f32 0.0, %v1254
        %v1256 = vpop.f32.mrb[0].mxu0
        %v1257 = vadd.f32 0.0, %v1256
        %1258 = vdwg.mxu0
        %1259 = vmatprep.subr.mxu0 %v1127
        %1260 = vmatpush1.msra.mxu0 %v1126
        %1261 = vmatprep.subr.mxu0 %v1131
        %1262 = vmatpush1.msra.mxu0 %v1130
        %1263 = vmatprep.subr.mxu0 %v1135
        %1264 = vmatpush1.msra.mxu0 %v1134
        %1265 = vmatprep.subr.mxu0 %v1139
        %1266 = vmatpush1.msra.mxu0 %v1138
        %1267 = vmatprep.subr.mxu0 %v1143
        %1268 = vmatpush1.msra.mxu0 %v1142
        %1269 = vmatprep.subr.mxu0 %v1147
        %1270 = vmatpush1.msra.mxu0 %v1146
        %1271 = vmatprep.subr.mxu0 %v1151
        %1272 = vmatpush1.msra.mxu0 %v1150
        %1273 = vmatprep.subr.mxu0 %v1155
        %1274 = vmatpush1.msra.mxu0 %v1154
        %1275 = vmatprep.subr.mxu0 %v1159
        %1276 = vmatpush1.msra.mxu0 %v1158
        %1277 = vmatprep.subr.mxu0 %v1163
        %1278 = vmatpush1.msra.mxu0 %v1162
        %1279 = vmatprep.subr.mxu0 %v1167
        %1280 = vmatpush1.msra.mxu0 %v1166
        %1281 = vmatprep.subr.mxu0 %v1171
        %1282 = vmatpush1.msra.mxu0 %v1170
        %1283 = vmatprep.subr.mxu0 %v1175
        %1284 = vmatpush1.msra.mxu0 %v1174
        %1285 = vmatprep.subr.mxu0 %v1179
        %1286 = vmatpush1.msra.mxu0 %v1178
        %1287 = vmatprep.subr.mxu0 %v1183
        %1288 = vmatpush1.msra.mxu0 %v1182
        %1289 = vmatprep.subr.mxu0 %v1187
        %1290 = vmatpush1.msra.mxu0 %v1186
        %1291 = vmatprep.subr.mxu0 0.0
        %1292 = vmatpush1.msra.mxu0 0.0
        %1293 = vmatprep.subr.mxu0 0.0
        %1294 = vmatpush1.msra.mxu0 0.0
        %1295 = vmatprep.subr.mxu0 0.0
        %1296 = vmatpush1.msra.mxu0 0.0
        %1297 = vmatprep.subr.mxu0 0.0
        %1298 = vmatpush1.msra.mxu0 0.0
        %1299 = vmatprep.subr.mxu0 0.0
        %1300 = vmatpush1.msra.mxu0 0.0
        %1301 = vmatprep.subr.mxu0 0.0
        %1302 = vmatpush1.msra.mxu0 0.0
        %1303 = vmatprep.subr.mxu0 0.0
        %1304 = vmatpush1.msra.mxu0 0.0
        %1305 = vmatprep.subr.mxu0 0.0
        %1306 = vmatpush1.msra.mxu0 0.0
        %1307 = vmatprep.subr.mxu0 0.0
        %1308 = vmatpush1.msra.mxu0 0.0
        %1309 = vmatprep.subr.mxu0 0.0
        %1310 = vmatpush1.msra.mxu0 0.0
        %1311 = vmatprep.subr.mxu0 0.0
        %1312 = vmatpush1.msra.mxu0 0.0
        %1313 = vmatprep.subr.mxu0 0.0
        %1314 = vmatpush1.msra.mxu0 0.0
        %1315 = vmatprep.subr.mxu0 0.0
        %1316 = vmatpush1.msra.mxu0 0.0
        %1317 = vmatprep.subr.mxu0 0.0
        %1318 = vmatpush1.msra.mxu0 0.0
        %1319 = vmatprep.subr.mxu0 0.0
        %1320 = vmatpush1.msra.mxu0 0.0
        %1321 = vmatprep.subr.mxu0 0.0
        %1322 = vmatpush1.msra.mxu0 0.0
        %1323 = vmatprep.mubr.f32.mxu0 0.0
        %1324 = vmatmul.mubr.f32.gmra.mrb[0].mxu0 %v517
        %v1325 = vpop.f32.mrb[0].mxu0
        %v1326 = vadd.f32 0.0, %v1325
        %v1327 = vpop.f32.mrb[0].mxu0
        %v1328 = vadd.f32 0.0, %v1327
        %1329 = vdwg.mxu0
        %v1331 = vsel %vm725, %v1255, 0
        %v1334 = vsel %vm725, %v1257, 0
        %v1337 = vsel %vm725, %v1326, 0
        %v1340 = vsel %vm725, %v1328, 0
        %1342 = vmatprep.subr.mxu0 %v1334
        %1343 = vmatpush1.msra.mxu0 %v1331
        %1344 = vmatprep.subr.mxu0 0.0
        %1345 = vmatpush1.msra.mxu0 0.0
        %1346 = vmatprep.subr.mxu0 0.0
        %1347 = vmatpush1.msra.mxu0 0.0
        %1348 = vmatprep.subr.mxu0 0.0
        %1349 = vmatpush1.msra.mxu0 0.0
        %1350 = vmatprep.subr.mxu0 0.0
        %1351 = vmatpush1.msra.mxu0 0.0
        %1352 = vmatprep.subr.mxu0 0.0
        %1353 = vmatpush1.msra.mxu0 0.0
        %1354 = vmatprep.subr.mxu0 0.0
        %1355 = vmatpush1.msra.mxu0 0.0
        %1356 = vmatprep.subr.mxu0 0.0
        %1357 = vmatpush1.msra.mxu0 0.0
        %1358 = vmatprep.subr.mxu0 0.0
        %1359 = vmatpush1.msra.mxu0 0.0
        %1360 = vmatprep.subr.mxu0 0.0
        %1361 = vmatpush1.msra.mxu0 0.0
        %1362 = vmatprep.subr.mxu0 0.0
        %1363 = vmatpush1.msra.mxu0 0.0
        %1364 = vmatprep.subr.mxu0 0.0
        %1365 = vmatpush1.msra.mxu0 0.0
        %1366 = vmatprep.subr.mxu0 0.0
        %1367 = vmatpush1.msra.mxu0 0.0
        %1368 = vmatprep.subr.mxu0 0.0
        %1369 = vmatpush1.msra.mxu0 0.0
        %1370 = vmatprep.subr.mxu0 0.0
        %1371 = vmatpush1.msra.mxu0 0.0
        %1372 = vmatprep.subr.mxu0 0.0
        %1373 = vmatpush1.msra.mxu0 0.0
        %1374 = vmatprep.subr.mxu0 0.0
        %1375 = vmatpush1.msra.mxu0 0.0
        %1376 = vmatprep.subr.mxu0 0.0
        %1377 = vmatpush1.msra.mxu0 0.0
        %1378 = vmatprep.subr.mxu0 0.0
        %1379 = vmatpush1.msra.mxu0 0.0
        %1380 = vmatprep.subr.mxu0 0.0
        %1381 = vmatpush1.msra.mxu0 0.0
        %1382 = vmatprep.subr.mxu0 0.0
        %1383 = vmatpush1.msra.mxu0 0.0
        %1384 = vmatprep.subr.mxu0 0.0
        %1385 = vmatpush1.msra.mxu0 0.0
        %1386 = vmatprep.subr.mxu0 0.0
        %1387 = vmatpush1.msra.mxu0 0.0
        %1388 = vmatprep.subr.mxu0 0.0
        %1389 = vmatpush1.msra.mxu0 0.0
        %1390 = vmatprep.subr.mxu0 0.0
        %1391 = vmatpush1.msra.mxu0 0.0
        %1392 = vmatprep.subr.mxu0 0.0
        %1393 = vmatpush1.msra.mxu0 0.0
        %1394 = vmatprep.subr.mxu0 0.0
        %1395 = vmatpush1.msra.mxu0 0.0
        %1396 = vmatprep.subr.mxu0 0.0
        %1397 = vmatpush1.msra.mxu0 0.0
        %1398 = vmatprep.subr.mxu0 0.0
        %1399 = vmatpush1.msra.mxu0 0.0
        %1400 = vmatprep.subr.mxu0 0.0
        %1401 = vmatpush1.msra.mxu0 0.0
        %1402 = vmatprep.subr.mxu0 0.0
        %1403 = vmatpush1.msra.mxu0 0.0
        %1404 = vmatprep.subr.mxu0 0.0
        %1405 = vmatpush1.msra.mxu0 0.0
        %1406 = vmatprep.mubr.f32.mxu0 0.0
        %1407 = vmatmul.mubr.f32.gmra.mrb[0].mxu0 %v678
        %v1408 = vpop.f32.mrb[0].mxu0
        %v1409 = vadd.f32 1e-05, %v1408
        %v1410 = vpop.f32.mrb[0].mxu0
        %v1411 = vadd.f32 1e-05, %v1410
        %1412 = vmatprep.mubr.f32.mxu0 0.0
        %1413 = vmatmul.mubr.f32.gmra.mrb[0].mxu0 %v681
        %v1414 = vpop.f32.mrb[0].mxu0
        %v1415 = vadd.f32 1e-05, %v1414
        %v1416 = vpop.f32.mrb[0].mxu0
        %v1417 = vadd.f32 1e-05, %v1416
        %1418 = vmatprep.mubr.f32.mxu0 0.0
        %1419 = vmatmul.mubr.f32.gmra.mrb[0].mxu0 %v684
        %v1420 = vpop.f32.mrb[0].mxu0
        %v1421 = vadd.f32 1e-05, %v1420
        %v1422 = vpop.f32.mrb[0].mxu0
        %v1423 = vadd.f32 1e-05, %v1422
        %1424 = vmatprep.mubr.f32.mxu0 0.0
        %1425 = vmatmul.mubr.f32.gmra.mrb[0].mxu0 %v687
        %v1426 = vpop.f32.mrb[0].mxu0
        %v1427 = vadd.f32 1e-05, %v1426
        %v1428 = vpop.f32.mrb[0].mxu0
        %v1429 = vadd.f32 1e-05, %v1428
        %1430 = vmatprep.mubr.f32.mxu0 0.0
        %1431 = vmatmul.mubr.f32.gmra.mrb[0].mxu0 %v690
        %v1432 = vpop.f32.mrb[0].mxu0
        %v1433 = vadd.f32 1e-05, %v1432
        %v1434 = vpop.f32.mrb[0].mxu0
        %v1435 = vadd.f32 1e-05, %v1434
        %1436 = vmatprep.mubr.f32.mxu0 0.0
        %1437 = vmatmul.mubr.f32.gmra.mrb[0].mxu0 %v693
        %v1438 = vpop.f32.mrb[0].mxu0
        %v1439 = vadd.f32 1e-05, %v1438
        %v1440 = vpop.f32.mrb[0].mxu0
        %v1441 = vadd.f32 1e-05, %v1440
        %1442 = vmatprep.mubr.f32.mxu0 0.0
        %1443 = vmatmul.mubr.f32.gmra.mrb[0].mxu0 %v696
        %v1444 = vpop.f32.mrb[0].mxu0
        %v1445 = vadd.f32 1e-05, %v1444
        %v1446 = vpop.f32.mrb[0].mxu0
        %v1447 = vadd.f32 1e-05, %v1446
        %1448 = vmatprep.mubr.f32.mxu0 0.0
        %1449 = vmatmul.mubr.f32.gmra.mrb[0].mxu0 %v699
        %v1450 = vpop.f32.mrb[0].mxu0
        %v1451 = vadd.f32 1e-05, %v1450
        %v1452 = vpop.f32.mrb[0].mxu0
        %v1453 = vadd.f32 1e-05, %v1452
        %1454 = vmatprep.mubr.f32.mxu0 0.0
        %1455 = vmatmul.mubr.f32.gmra.mrb[0].mxu0 %v702
        %v1456 = vpop.f32.mrb[0].mxu0
        %v1457 = vadd.f32 1e-05, %v1456
        %v1458 = vpop.f32.mrb[0].mxu0
        %v1459 = vadd.f32 1e-05, %v1458
        %1460 = vmatprep.mubr.f32.mxu0 0.0
        %1461 = vmatmul.mubr.f32.gmra.mrb[0].mxu0 %v705
        %v1462 = vpop.f32.mrb[0].mxu0
        %v1463 = vadd.f32 1e-05, %v1462
        %v1464 = vpop.f32.mrb[0].mxu0
        %v1465 = vadd.f32 1e-05, %v1464
        %1466 = vmatprep.mubr.f32.mxu0 0.0
        %1467 = vmatmul.mubr.f32.gmra.mrb[0].mxu0 %v708
        %v1468 = vpop.f32.mrb[0].mxu0
        %v1469 = vadd.f32 1e-05, %v1468
        %v1470 = vpop.f32.mrb[0].mxu0
        %v1471 = vadd.f32 1e-05, %v1470
        %1472 = vmatprep.mubr.f32.mxu0 0.0
        %1473 = vmatmul.mubr.f32.gmra.mrb[0].mxu0 %v711
        %v1474 = vpop.f32.mrb[0].mxu0
        %v1475 = vadd.f32 1e-05, %v1474
        %v1476 = vpop.f32.mrb[0].mxu0
        %v1477 = vadd.f32 1e-05, %v1476
        %1478 = vmatprep.mubr.f32.mxu0 0.0
        %1479 = vmatmul.mubr.f32.gmra.mrb[0].mxu0 %v714
        %v1480 = vpop.f32.mrb[0].mxu0
        %v1481 = vadd.f32 1e-05, %v1480
        %v1482 = vpop.f32.mrb[0].mxu0
        %v1483 = vadd.f32 1e-05, %v1482
        %1484 = vmatprep.mubr.f32.mxu0 0.0
        %1485 = vmatmul.mubr.f32.gmra.mrb[0].mxu0 %v717
        %v1486 = vpop.f32.mrb[0].mxu0
        %v1487 = vadd.f32 1e-05, %v1486
        %v1488 = vpop.f32.mrb[0].mxu0
        %v1489 = vadd.f32 1e-05, %v1488
        %1490 = vmatprep.mubr.f32.mxu0 0.0
        %1491 = vmatmul.mubr.f32.gmra.mrb[0].mxu0 %v720
        %v1492 = vpop.f32.mrb[0].mxu0
        %v1493 = vadd.f32 1e-05, %v1492
        %v1494 = vpop.f32.mrb[0].mxu0
        %v1495 = vadd.f32 1e-05, %v1494
        %1496 = vmatprep.mubr.f32.mxu0 0.0
        %1497 = vmatmul.mubr.f32.gmra.mrb[0].mxu0 %v723
        %v1498 = vpop.f32.mrb[0].mxu0
        %v1499 = vadd.f32 1e-05, %v1498
        %v1500 = vpop.f32.mrb[0].mxu0
        %v1501 = vadd.f32 1e-05, %v1500
        %1502 = vdwg.mxu0
        %1503 = vmatprep.subr.mxu0 %v1340
        %1504 = vmatpush1.msra.mxu0 %v1337
        %1505 = vmatprep.subr.mxu0 0.0
        %1506 = vmatpush1.msra.mxu0 0.0
        %1507 = vmatprep.subr.mxu0 0.0
        %1508 = vmatpush1.msra.mxu0 0.0
        %1509 = vmatprep.subr.mxu0 0.0
        %1510 = vmatpush1.msra.mxu0 0.0
        %1511 = vmatprep.subr.mxu0 0.0
        %1512 = vmatpush1.msra.mxu0 0.0
        %1513 = vmatprep.subr.mxu0 0.0
        %1514 = vmatpush1.msra.mxu0 0.0
        %1515 = vmatprep.subr.mxu0 0.0
        %1516 = vmatpush1.msra.mxu0 0.0
        %1517 = vmatprep.subr.mxu0 0.0
        %1518 = vmatpush1.msra.mxu0 0.0
        %1519 = vmatprep.subr.mxu0 0.0
        %1520 = vmatpush1.msra.mxu0 0.0
        %1521 = vmatprep.subr.mxu0 0.0
        %1522 = vmatpush1.msra.mxu0 0.0
        %1523 = vmatprep.subr.mxu0 0.0
        %1524 = vmatpush1.msra.mxu0 0.0
        %1525 = vmatprep.subr.mxu0 0.0
        %1526 = vmatpush1.msra.mxu0 0.0
        %1527 = vmatprep.subr.mxu0 0.0
        %1528 = vmatpush1.msra.mxu0 0.0
        %1529 = vmatprep.subr.mxu0 0.0
        %1530 = vmatpush1.msra.mxu0 0.0
        %1531 = vmatprep.subr.mxu0 0.0
        %1532 = vmatpush1.msra.mxu0 0.0
        %1533 = vmatprep.subr.mxu0 0.0
        %1534 = vmatpush1.msra.mxu0 0.0
        %1535 = vmatprep.subr.mxu0 0.0
        %1536 = vmatpush1.msra.mxu0 0.0
        %1537 = vmatprep.subr.mxu0 0.0
        %1538 = vmatpush1.msra.mxu0 0.0
        %1539 = vmatprep.subr.mxu0 0.0
        %1540 = vmatpush1.msra.mxu0 0.0
        %1541 = vmatprep.subr.mxu0 0.0
        %1542 = vmatpush1.msra.mxu0 0.0
        %1543 = vmatprep.subr.mxu0 0.0
        %1544 = vmatpush1.msra.mxu0 0.0
        %1545 = vmatprep.subr.mxu0 0.0
        %1546 = vmatpush1.msra.mxu0 0.0
        %1547 = vmatprep.subr.mxu0 0.0
        %1548 = vmatpush1.msra.mxu0 0.0
        %1549 = vmatprep.subr.mxu0 0.0
        %1550 = vmatpush1.msra.mxu0 0.0
        %1551 = vmatprep.subr.mxu0 0.0
        %1552 = vmatpush1.msra.mxu0 0.0
        %1553 = vmatprep.subr.mxu0 0.0
        %1554 = vmatpush1.msra.mxu0 0.0
        %1555 = vmatprep.subr.mxu0 0.0
        %1556 = vmatpush1.msra.mxu0 0.0
        %1557 = vmatprep.subr.mxu0 0.0
        %1558 = vmatpush1.msra.mxu0 0.0
        %1559 = vmatprep.subr.mxu0 0.0
        %1560 = vmatpush1.msra.mxu0 0.0
        %1561 = vmatprep.subr.mxu0 0.0
        %1562 = vmatpush1.msra.mxu0 0.0
        %1563 = vmatprep.subr.mxu0 0.0
        %1564 = vmatpush1.msra.mxu0 0.0
        %1565 = vmatprep.subr.mxu0 0.0
        %1566 = vmatpush1.msra.mxu0 0.0
        %1567 = vmatprep.mubr.f32.mxu0 0.0
        %1568 = vmatmul.mubr.f32.gmra.mrb[0].mxu0 %v678
        %v1569 = vpop.f32.mrb[0].mxu0
        %v1570 = vadd.f32 1e-05, %v1569
        %v1571 = vpop.f32.mrb[0].mxu0
        %v1572 = vadd.f32 1e-05, %v1571
        %1573 = vmatprep.mubr.f32.mxu0 0.0
        %1574 = vmatmul.mubr.f32.gmra.mrb[0].mxu0 %v681
        %v1575 = vpop.f32.mrb[0].mxu0
        %v1576 = vadd.f32 1e-05, %v1575
        %v1577 = vpop.f32.mrb[0].mxu0
        %v1578 = vadd.f32 1e-05, %v1577
        %1579 = vmatprep.mubr.f32.mxu0 0.0
        %1580 = vmatmul.mubr.f32.gmra.mrb[0].mxu0 %v684
        %v1581 = vpop.f32.mrb[0].mxu0
        %v1582 = vadd.f32 1e-05, %v1581
        %v1583 = vpop.f32.mrb[0].mxu0
        %v1584 = vadd.f32 1e-05, %v1583
        %1585 = vmatprep.mubr.f32.mxu0 0.0
        %1586 = vmatmul.mubr.f32.gmra.mrb[0].mxu0 %v687
        %v1587 = vpop.f32.mrb[0].mxu0
        %v1588 = vadd.f32 1e-05, %v1587
        %v1589 = vpop.f32.mrb[0].mxu0
        %v1590 = vadd.f32 1e-05, %v1589
        %1591 = vmatprep.mubr.f32.mxu0 0.0
        %1592 = vmatmul.mubr.f32.gmra.mrb[0].mxu0 %v690
        %v1593 = vpop.f32.mrb[0].mxu0
        %v1594 = vadd.f32 1e-05, %v1593
        %v1595 = vpop.f32.mrb[0].mxu0
        %v1596 = vadd.f32 1e-05, %v1595
        %1597 = vmatprep.mubr.f32.mxu0 0.0
        %1598 = vmatmul.mubr.f32.gmra.mrb[0].mxu0 %v693
        %v1599 = vpop.f32.mrb[0].mxu0
        %v1600 = vadd.f32 1e-05, %v1599
        %v1601 = vpop.f32.mrb[0].mxu0
        %v1602 = vadd.f32 1e-05, %v1601
        %1603 = vmatprep.mubr.f32.mxu0 0.0
        %1604 = vmatmul.mubr.f32.gmra.mrb[0].mxu0 %v696
        %v1605 = vpop.f32.mrb[0].mxu0
        %v1606 = vadd.f32 1e-05, %v1605
        %v1607 = vpop.f32.mrb[0].mxu0
        %v1608 = vadd.f32 1e-05, %v1607
        %1609 = vmatprep.mubr.f32.mxu0 0.0
        %1610 = vmatmul.mubr.f32.gmra.mrb[0].mxu0 %v699
        %v1611 = vpop.f32.mrb[0].mxu0
        %v1612 = vadd.f32 1e-05, %v1611
        %v1613 = vpop.f32.mrb[0].mxu0
        %v1614 = vadd.f32 1e-05, %v1613
        %1615 = vmatprep.mubr.f32.mxu0 0.0
        %1616 = vmatmul.mubr.f32.gmra.mrb[0].mxu0 %v702
        %v1617 = vpop.f32.mrb[0].mxu0
        %v1618 = vadd.f32 1e-05, %v1617
        %v1619 = vpop.f32.mrb[0].mxu0
        %v1620 = vadd.f32 1e-05, %v1619
        %1621 = vmatprep.mubr.f32.mxu0 0.0
        %1622 = vmatmul.mubr.f32.gmra.mrb[0].mxu0 %v705
        %v1623 = vpop.f32.mrb[0].mxu0
        %v1624 = vadd.f32 1e-05, %v1623
        %v1625 = vpop.f32.mrb[0].mxu0
        %v1626 = vadd.f32 1e-05, %v1625
        %1627 = vmatprep.mubr.f32.mxu0 0.0
        %1628 = vmatmul.mubr.f32.gmra.mrb[0].mxu0 %v708
        %v1629 = vpop.f32.mrb[0].mxu0
        %v1630 = vadd.f32 1e-05, %v1629
        %v1631 = vpop.f32.mrb[0].mxu0
        %v1632 = vadd.f32 1e-05, %v1631
        %1633 = vmatprep.mubr.f32.mxu0 0.0
        %1634 = vmatmul.mubr.f32.gmra.mrb[0].mxu0 %v711
        %v1635 = vpop.f32.mrb[0].mxu0
        %v1636 = vadd.f32 1e-05, %v1635
        %v1637 = vpop.f32.mrb[0].mxu0
        %v1638 = vadd.f32 1e-05, %v1637
        %1639 = vmatprep.mubr.f32.mxu0 0.0
        %1640 = vmatmul.mubr.f32.gmra.mrb[0].mxu0 %v714
        %v1641 = vpop.f32.mrb[0].mxu0
        %v1642 = vadd.f32 1e-05, %v1641
        %v1643 = vpop.f32.mrb[0].mxu0
        %v1644 = vadd.f32 1e-05, %v1643
        %1645 = vmatprep.mubr.f32.mxu0 0.0
        %1646 = vmatmul.mubr.f32.gmra.mrb[0].mxu0 %v717
        %v1647 = vpop.f32.mrb[0].mxu0
        %v1648 = vadd.f32 1e-05, %v1647
        %v1649 = vpop.f32.mrb[0].mxu0
        %v1650 = vadd.f32 1e-05, %v1649
        %1651 = vmatprep.mubr.f32.mxu0 0.0
        %1652 = vmatmul.mubr.f32.gmra.mrb[0].mxu0 %v720
        %v1653 = vpop.f32.mrb[0].mxu0
        %v1654 = vadd.f32 1e-05, %v1653
        %v1655 = vpop.f32.mrb[0].mxu0
        %v1656 = vadd.f32 1e-05, %v1655
        %1657 = vmatprep.mubr.f32.mxu0 0.0
        %1658 = vmatmul.mubr.f32.gmra.mrb[0].mxu0 %v723
        %v1659 = vpop.f32.mrb[0].mxu0
        %v1660 = vadd.f32 1e-05, %v1659
        %v1661 = vpop.f32.mrb[0].mxu0
        %v1662 = vadd.f32 1e-05, %v1661
        %1663 = vdwg.mxu0
        %v1664 = vrsqrt.pop %v1409
        %v1665 = vrsqrt.pop %v1411
        %v1666 = vrsqrt.pop %v1570
        %v1667 = vrsqrt.pop %v1572
        %v1668 = vrsqrt.pop %v1415
        %v1669 = vrsqrt.pop %v1417
        %v1670 = vrsqrt.pop %v1576
        %v1671 = vrsqrt.pop %v1578
        %v1672 = vrsqrt.pop %v1421
        %v1673 = vrsqrt.pop %v1423
        %v1674 = vrsqrt.pop %v1582
        %v1675 = vrsqrt.pop %v1584
        %v1676 = vrsqrt.pop %v1427
        %v1677 = vrsqrt.pop %v1429
        %v1678 = vrsqrt.pop %v1588
        %v1679 = vrsqrt.pop %v1590
        %v1680 = vrsqrt.pop %v1433
        %v1681 = vrsqrt.pop %v1435
        %v1682 = vrsqrt.pop %v1594
        %v1683 = vrsqrt.pop %v1596
        %v1684 = vrsqrt.pop %v1439
        %v1685 = vrsqrt.pop %v1441
        %v1686 = vrsqrt.pop %v1600
        %v1687 = vrsqrt.pop %v1602
        %v1688 = vrsqrt.pop %v1445
        %v1689 = vrsqrt.pop %v1447
        %v1690 = vrsqrt.pop %v1606
        %v1691 = vrsqrt.pop %v1608
        %v1692 = vrsqrt.pop %v1451
        %v1693 = vrsqrt.pop %v1453
        %v1694 = vrsqrt.pop %v1612
        %v1695 = vrsqrt.pop %v1614
        %v1696 = vrsqrt.pop %v1457
        %v1697 = vrsqrt.pop %v1459
        %v1698 = vrsqrt.pop %v1618
        %v1699 = vrsqrt.pop %v1620
        %v1700 = vrsqrt.pop %v1463
        %v1701 = vrsqrt.pop %v1465
        %v1702 = vrsqrt.pop %v1624
        %v1703 = vrsqrt.pop %v1626
        %v1704 = vrsqrt.pop %v1469
        %v1705 = vrsqrt.pop %v1471
        %v1706 = vrsqrt.pop %v1630
        %v1707 = vrsqrt.pop %v1632
        %v1708 = vrsqrt.pop %v1475
        %v1709 = vrsqrt.pop %v1477
        %v1710 = vrsqrt.pop %v1636
        %v1711 = vrsqrt.pop %v1638
        %v1712 = vrsqrt.pop %v1481
        %v1713 = vrsqrt.pop %v1483
        %v1714 = vrsqrt.pop %v1642
        %v1715 = vrsqrt.pop %v1644
        %v1716 = vrsqrt.pop %v1487
        %v1717 = vrsqrt.pop %v1489
        %v1718 = vrsqrt.pop %v1648
        %v1719 = vrsqrt.pop %v1650
        %v1720 = vrsqrt.pop %v1493
        %v1721 = vrsqrt.pop %v1495
        %v1722 = vrsqrt.pop %v1654
        %v1723 = vrsqrt.pop %v1656
        %v1724 = vrsqrt.pop %v1499
        %v1725 = vrsqrt.pop %v1501
        %v1726 = vrsqrt.pop %v1660
        %v1727 = vrsqrt.pop %v1662
        %v1728 = vmul.f32 %v1060, %v1664
        %v1729 = vmul.f32 %v1061, %v1665
        %v1730 = vmul.f32 %v1062, %v1666
        %v1731 = vmul.f32 %v1063, %v1667
        %v1732 = vmul.f32 %v1064, %v1668
        %v1733 = vmul.f32 %v1065, %v1669
        %v1734 = vmul.f32 %v1066, %v1670
        %v1735 = vmul.f32 %v1067, %v1671
        %v1736 = vmul.f32 %v1068, %v1672
        %v1737 = vmul.f32 %v1069, %v1673
        %v1738 = vmul.f32 %v1070, %v1674
        %v1739 = vmul.f32 %v1071, %v1675
        %v1740 = vmul.f32 %v1072, %v1676
        %v1741 = vmul.f32 %v1073, %v1677
        %v1742 = vmul.f32 %v1074, %v1678
        %v1743 = vmul.f32 %v1075, %v1679
        %v1744 = vmul.f32 %v1076, %v1680
        %v1745 = vmul.f32 %v1077, %v1681
        %v1746 = vmul.f32 %v1078, %v1682
        %v1747 = vmul.f32 %v1079, %v1683
        %v1748 = vmul.f32 %v1080, %v1684
        %v1749 = vmul.f32 %v1081, %v1685
        %v1750 = vmul.f32 %v1082, %v1686
        %v1751 = vmul.f32 %v1083, %v1687
        %v1752 = vmul.f32 %v1084, %v1688
        %v1753 = vmul.f32 %v1085, %v1689
        %v1754 = vmul.f32 %v1086, %v1690
        %v1755 = vmul.f32 %v1087, %v1691
        %v1756 = vmul.f32 %v1088, %v1692
        %v1757 = vmul.f32 %v1089, %v1693
        %v1758 = vmul.f32 %v1090, %v1694
        %v1759 = vmul.f32 %v1091, %v1695
        %v1760 = vmul.f32 %v1092, %v1696
        %v1761 = vmul.f32 %v1093, %v1697
        %v1762 = vmul.f32 %v1094, %v1698
        %v1763 = vmul.f32 %v1095, %v1699
        %v1764 = vmul.f32 %v1096, %v1700
        %v1765 = vmul.f32 %v1097, %v1701
        %v1766 = vmul.f32 %v1098, %v1702
        %v1767 = vmul.f32 %v1099, %v1703
        %v1768 = vmul.f32 %v1100, %v1704
        %v1769 = vmul.f32 %v1101, %v1705
        %v1770 = vmul.f32 %v1102, %v1706
        %v1771 = vmul.f32 %v1103, %v1707
        %v1772 = vmul.f32 %v1104, %v1708
        %v1773 = vmul.f32 %v1105, %v1709
        %v1774 = vmul.f32 %v1106, %v1710
        %v1775 = vmul.f32 %v1107, %v1711
        %v1776 = vmul.f32 %v1108, %v1712
        %v1777 = vmul.f32 %v1109, %v1713
        %v1778 = vmul.f32 %v1110, %v1714
        %v1779 = vmul.f32 %v1111, %v1715
        %v1780 = vmul.f32 %v1112, %v1716
        %v1781 = vmul.f32 %v1113, %v1717
        %v1782 = vmul.f32 %v1114, %v1718
        %v1783 = vmul.f32 %v1115, %v1719
        %v1784 = vmul.f32 %v1116, %v1720
        %v1785 = vmul.f32 %v1117, %v1721
        %v1786 = vmul.f32 %v1118, %v1722
        %v1787 = vmul.f32 %v1119, %v1723
        %v1788 = vmul.f32 %v1120, %v1724
        %v1789 = vmul.f32 %v1121, %v1725
        %v1790 = vmul.f32 %v1122, %v1726
        %v1791 = vmul.f32 %v1123, %v1727
        %v1792 = vld [vmem:[%s3] sm:$0xf]
        %v1793 = vld [vmem:[%s3 + $0x4] sm:$0xf]
        %v1794 = vld [vmem:[%s3 + $0x8] sm:$0xf]
        %v1795 = vld [vmem:[%s3 + $0xc] sm:$0xf]
        %v1796 = vld [vmem:[%s3 + $0x10] sm:$0xf]
        %v1797 = vld [vmem:[%s3 + $0x14] sm:$0xf]
        %v1798 = vld [vmem:[%s3 + $0x18] sm:$0xf]
        %v1799 = vld [vmem:[%s3 + $0x1c] sm:$0xf]
        %v1800 = vld [vmem:[%s3 + $0x20] sm:$0xf]
        %v1801 = vld [vmem:[%s3 + $0x24] sm:$0xf]
        %v1802 = vld [vmem:[%s3 + $0x28] sm:$0xf]
        %v1803 = vld [vmem:[%s3 + $0x2c] sm:$0xf]
        %v1804 = vld [vmem:[%s3 + $0x30] sm:$0xf]
        %v1805 = vld [vmem:[%s3 + $0x34] sm:$0xf]
        %v1806 = vld [vmem:[%s3 + $0x38] sm:$0xf]
        %v1807 = vld [vmem:[%s3 + $0x3c] sm:$0xf]
        %v1808 = vld [vmem:[%s3 + $0x40] sm:$0xf]
        %v1809 = vld [vmem:[%s3 + $0x44] sm:$0xf]
        %v1810 = vld [vmem:[%s3 + $0x48] sm:$0xf]
        %v1811 = vld [vmem:[%s3 + $0x4c] sm:$0xf]
        %v1812 = vld [vmem:[%s3 + $0x50] sm:$0xf]
        %v1813 = vld [vmem:[%s3 + $0x54] sm:$0xf]
        %v1814 = vld [vmem:[%s3 + $0x58] sm:$0xf]
        %v1815 = vld [vmem:[%s3 + $0x5c] sm:$0xf]
        %v1816 = vld [vmem:[%s3 + $0x60] sm:$0xf]
        %v1817 = vld [vmem:[%s3 + $0x64] sm:$0xf]
        %v1818 = vld [vmem:[%s3 + $0x68] sm:$0xf]
        %v1819 = vld [vmem:[%s3 + $0x6c] sm:$0xf]
        %v1820 = vld [vmem:[%s3 + $0x70] sm:$0xf]
        %v1821 = vld [vmem:[%s3 + $0x74] sm:$0xf]
        %v1822 = vld [vmem:[%s3 + $0x78] sm:$0xf]
        %v1823 = vld [vmem:[%s3 + $0x7c] sm:$0xf]
        %v1824 = vld [vmem:[%s3 + $0x80] sm:$0xf]
        %v1825 = vld [vmem:[%s3 + $0x84] sm:$0xf]
        %v1826 = vld [vmem:[%s3 + $0x88] sm:$0xf]
        %v1827 = vld [vmem:[%s3 + $0x8c] sm:$0xf]
        %v1828 = vpack.c.bf16 %v1732, %v1728
        %v1829 = vpack.c.bf16 %v1733, %v1729
        %v1830 = vpack.c.bf16 %v1734, %v1730
        %v1831 = vpack.c.bf16 %v1735, %v1731
        %v1832 = vpack.c.bf16 %v1740, %v1736
        %v1833 = vpack.c.bf16 %v1741, %v1737
        %v1834 = vpack.c.bf16 %v1742, %v1738
        %v1835 = vpack.c.bf16 %v1743, %v1739
        %v1836 = vpack.c.bf16 %v1748, %v1744
        %v1837 = vpack.c.bf16 %v1749, %v1745
        %v1838 = vpack.c.bf16 %v1750, %v1746
        %v1839 = vpack.c.bf16 %v1751, %v1747
        %v1840 = vpack.c.bf16 %v1756, %v1752
        %v1841 = vpack.c.bf16 %v1757, %v1753
        %v1842 = vpack.c.bf16 %v1758, %v1754
        %v1843 = vpack.c.bf16 %v1759, %v1755
        %v1844 = vpack.c.bf16 %v1764, %v1760
        %v1845 = vpack.c.bf16 %v1765, %v1761
        %v1846 = vpack.c.bf16 %v1766, %v1762
        %v1847 = vpack.c.bf16 %v1767, %v1763
        %v1848 = vpack.c.bf16 %v1772, %v1768
        %v1849 = vpack.c.bf16 %v1773, %v1769
        %v1850 = vpack.c.bf16 %v1774, %v1770
        %v1851 = vpack.c.bf16 %v1775, %v1771
        %v1852 = vpack.c.bf16 %v1780, %v1776
        %v1853 = vpack.c.bf16 %v1781, %v1777
        %v1854 = vpack.c.bf16 %v1782, %v1778
        %v1855 = vpack.c.bf16 %v1783, %v1779
        %v1856 = vpack.c.bf16 %v1788, %v1784
        %v1857 = vpack.c.bf16 %v1789, %v1785
        %v1858 = vpack.c.bf16 %v1790, %v1786
        %v1859 = vpack.c.bf16 %v1791, %v1787
        %v1860 = vld [vmem:[%s4] sm:$0xff]
        %v1861 = vld [vmem:[%s4 + $0x8] sm:$0xff]
        %v1862 = vld [vmem:[%s4 + $0x10] sm:$0xff]
        %v1863 = vld [vmem:[%s4 + $0x18] sm:$0xff]
        %v1864 = vld [vmem:[%s4 + $0x20] sm:$0xff]
        %v1865 = vld [vmem:[%s4 + $0x28] sm:$0xff]
        %v1866 = vld [vmem:[%s4 + $0x30] sm:$0xff]
        %v1867 = vld [vmem:[%s4 + $0x38] sm:$0xff]
        %v1868 = vld [vmem:[%s4 + $0x40] sm:$0xff]
        %v1869 = vld [vmem:[%s4 + $0x48] sm:$0xff]
        %v1870 = vld [vmem:[%s4 + $0x50] sm:$0xff]
        %v1871 = vld [vmem:[%s4 + $0x58] sm:$0xff]
        %v1872 = vld [vmem:[%s4 + $0x60] sm:$0xff]
        %v1873 = vld [vmem:[%s4 + $0x68] sm:$0xff]
        %v1874 = vld [vmem:[%s4 + $0x70] sm:$0xff]
        %v1875 = vld [vmem:[%s4 + $0x78] sm:$0xff]
        %v1876 = vld [vmem:[%s4 + $0x80] sm:$0xff]
        %v1877 = vld [vmem:[%s4 + $0x88] sm:$0xff]
        %v1878 = vld [vmem:[%s4 + $0x90] sm:$0xff]
        %v1879 = vld [vmem:[%s4 + $0x98] sm:$0xff]
        %v1880 = vld [vmem:[%s4 + $0xa0] sm:$0xff]
        %v1881 = vld [vmem:[%s4 + $0xa8] sm:$0xff]
        %v1882 = vld [vmem:[%s4 + $0xb0] sm:$0xff]
        %v1883 = vld [vmem:[%s4 + $0xb8] sm:$0xff]
        %v1884 = vld [vmem:[%s4 + $0xc0] sm:$0xff]
        %v1885 = vld [vmem:[%s4 + $0xc8] sm:$0xff]
        %v1886 = vld [vmem:[%s4 + $0xd0] sm:$0xff]
        %v1887 = vld [vmem:[%s4 + $0xd8] sm:$0xff]
        %v1888 = vld [vmem:[%s4 + $0xe0] sm:$0xff]
        %v1889 = vld [vmem:[%s4 + $0xe8] sm:$0xff]
        %v1890 = vld [vmem:[%s4 + $0xf0] sm:$0xff]
        %v1891 = vld [vmem:[%s4 + $0xf8] sm:$0xff]
        %v1892 = vld [vmem:[%s4 + $0x100] sm:$0xff]
        %v1893 = vld [vmem:[%s4 + $0x108] sm:$0xff]
        %v1894 = vld [vmem:[%s4 + $0x110] sm:$0xff]
        %v1895 = vld [vmem:[%s4 + $0x118] sm:$0xff]
        %1897 = vset.pattern.permute.xlu0 0
        %1898 = vperm.xlu0 %1897, %v1860
        %v1899 = vpop.permute.xlu0 %1898
        %1902 = vset.pattern.permute.xlu0 0
        %1903 = vperm.xlu0 %1902, %v1861
        %v1904 = vpop.permute.xlu0 %1903
        %1907 = vset.pattern.permute.xlu0 0
        %1908 = vperm.xlu0 %1907, %v1862
        %v1909 = vpop.permute.xlu0 %1908
        %1912 = vset.pattern.permute.xlu0 0
        %1913 = vperm.xlu0 %1912, %v1863
        %v1914 = vpop.permute.xlu0 %1913
        %1917 = vset.pattern.permute.xlu0 0
        %1918 = vperm.xlu0 %1917, %v1864
        %v1919 = vpop.permute.xlu0 %1918
        %1922 = vset.pattern.permute.xlu0 0
        %1923 = vperm.xlu0 %1922, %v1865
        %v1924 = vpop.permute.xlu0 %1923
        %1927 = vset.pattern.permute.xlu0 0
        %1928 = vperm.xlu0 %1927, %v1866
        %v1929 = vpop.permute.xlu0 %1928
        %1932 = vset.pattern.permute.xlu0 0
        %1933 = vperm.xlu0 %1932, %v1867
        %v1934 = vpop.permute.xlu0 %1933
        %1937 = vset.pattern.permute.xlu0 0
        %1938 = vperm.xlu0 %1937, %v1868
        %v1939 = vpop.permute.xlu0 %1938
        %1942 = vset.pattern.permute.xlu0 0
        %1943 = vperm.xlu0 %1942, %v1869
        %v1944 = vpop.permute.xlu0 %1943
        %1947 = vset.pattern.permute.xlu0 0
        %1948 = vperm.xlu0 %1947, %v1870
        %v1949 = vpop.permute.xlu0 %1948
        %1952 = vset.pattern.permute.xlu0 0
        %1953 = vperm.xlu0 %1952, %v1871
        %v1954 = vpop.permute.xlu0 %1953
        %1957 = vset.pattern.permute.xlu0 0
        %1958 = vperm.xlu0 %1957, %v1872
        %v1959 = vpop.permute.xlu0 %1958
        %1962 = vset.pattern.permute.xlu0 0
        %1963 = vperm.xlu0 %1962, %v1873
        %v1964 = vpop.permute.xlu0 %1963
        %1967 = vset.pattern.permute.xlu0 0
        %1968 = vperm.xlu0 %1967, %v1874
        %v1969 = vpop.permute.xlu0 %1968
        %1972 = vset.pattern.permute.xlu0 0
        %1973 = vperm.xlu0 %1972, %v1875
        %v1974 = vpop.permute.xlu0 %1973
        %1977 = vset.pattern.permute.xlu0 0
        %1978 = vperm.xlu0 %1977, %v1876
        %v1979 = vpop.permute.xlu0 %1978
        %1982 = vset.pattern.permute.xlu0 0
        %1983 = vperm.xlu0 %1982, %v1877
        %v1984 = vpop.permute.xlu0 %1983
        %1987 = vset.pattern.permute.xlu0 0
        %1988 = vperm.xlu0 %1987, %v1878
        %v1989 = vpop.permute.xlu0 %1988
        %1992 = vset.pattern.permute.xlu0 0
        %1993 = vperm.xlu0 %1992, %v1879
        %v1994 = vpop.permute.xlu0 %1993
        %1997 = vset.pattern.permute.xlu0 0
        %1998 = vperm.xlu0 %1997, %v1880
        %v1999 = vpop.permute.xlu0 %1998
        %2002 = vset.pattern.permute.xlu0 0
        %2003 = vperm.xlu0 %2002, %v1881
        %v2004 = vpop.permute.xlu0 %2003
        %2007 = vset.pattern.permute.xlu0 0
        %2008 = vperm.xlu0 %2007, %v1882
        %v2009 = vpop.permute.xlu0 %2008
        %2012 = vset.pattern.permute.xlu0 0
        %2013 = vperm.xlu0 %2012, %v1883
        %v2014 = vpop.permute.xlu0 %2013
        %2017 = vset.pattern.permute.xlu0 0
        %2018 = vperm.xlu0 %2017, %v1884
        %v2019 = vpop.permute.xlu0 %2018
        %2022 = vset.pattern.permute.xlu0 0
        %2023 = vperm.xlu0 %2022, %v1885
        %v2024 = vpop.permute.xlu0 %2023
        %2027 = vset.pattern.permute.xlu0 0
        %2028 = vperm.xlu0 %2027, %v1886
        %v2029 = vpop.permute.xlu0 %2028
        %2032 = vset.pattern.permute.xlu0 0
        %2033 = vperm.xlu0 %2032, %v1887
        %v2034 = vpop.permute.xlu0 %2033
        %2037 = vset.pattern.permute.xlu0 0
        %2038 = vperm.xlu0 %2037, %v1888
        %v2039 = vpop.permute.xlu0 %2038
        %2042 = vset.pattern.permute.xlu0 0
        %2043 = vperm.xlu0 %2042, %v1889
        %v2044 = vpop.permute.xlu0 %2043
        %2047 = vset.pattern.permute.xlu0 0
        %2048 = vperm.xlu0 %2047, %v1890
        %v2049 = vpop.permute.xlu0 %2048
        %2052 = vset.pattern.permute.xlu0 0
        %2053 = vperm.xlu0 %2052, %v1891
        %v2054 = vpop.permute.xlu0 %2053
        %2057 = vset.pattern.permute.xlu0 0
        %2058 = vperm.xlu0 %2057, %v1892
        %v2059 = vpop.permute.xlu0 %2058
        %2062 = vset.pattern.permute.xlu0 0
        %2063 = vperm.xlu0 %2062, %v1893
        %v2064 = vpop.permute.xlu0 %2063
        %2067 = vset.pattern.permute.xlu0 0
        %2068 = vperm.xlu0 %2067, %v1894
        %v2069 = vpop.permute.xlu0 %2068
        %2072 = vset.pattern.permute.xlu0 0
        %2073 = vperm.xlu0 %2072, %v1895
        %v2074 = vpop.permute.xlu0 %2073
        %v2112 = vunpack.c.l.b16 %v1792
        %v2113 = vunpack.c.l.b16 %v1793
        %v2114 = vunpack.c.l.b16 %v1794
        %v2115 = vunpack.c.l.b16 %v1795
        %v2116 = vunpack.c.l.b16 %v1796
        %v2117 = vunpack.c.l.b16 %v1797
        %v2118 = vunpack.c.l.b16 %v1798
        %v2119 = vunpack.c.l.b16 %v1799
        %v2120 = vunpack.c.l.b16 %v1800
        %v2121 = vunpack.c.l.b16 %v1801
        %v2122 = vunpack.c.l.b16 %v1802
        %v2123 = vunpack.c.l.b16 %v1803
        %v2124 = vunpack.c.l.b16 %v1804
        %v2125 = vunpack.c.l.b16 %v1805
        %v2126 = vunpack.c.l.b16 %v1806
        %v2127 = vunpack.c.l.b16 %v1807
        %v2128 = vunpack.c.l.b16 %v1808
        %v2129 = vunpack.c.l.b16 %v1809
        %v2130 = vunpack.c.l.b16 %v1810
        %v2131 = vunpack.c.l.b16 %v1811
        %v2132 = vunpack.c.l.b16 %v1812
        %v2133 = vunpack.c.l.b16 %v1813
        %v2134 = vunpack.c.l.b16 %v1814
        %v2135 = vunpack.c.l.b16 %v1815
        %v2136 = vunpack.c.l.b16 %v1816
        %v2137 = vunpack.c.l.b16 %v1817
        %v2138 = vunpack.c.l.b16 %v1818
        %v2139 = vunpack.c.l.b16 %v1819
        %v2140 = vunpack.c.l.b16 %v1820
        %v2141 = vunpack.c.l.b16 %v1821
        %v2142 = vunpack.c.l.b16 %v1822
        %v2143 = vunpack.c.l.b16 %v1823
        %v2144 = vunpack.c.l.b16 %v1824
        %v2145 = vunpack.c.l.b16 %v1825
        %v2146 = vunpack.c.l.b16 %v1826
        %v2147 = vunpack.c.l.b16 %v1827
        %v2148 = vpack.c.b16 %v2113, %v2112
        %v2149 = vpack.c.b16 %v2115, %v2114
        %v2150 = vpack.c.b16 %v2117, %v2116
        %v2151 = vpack.c.b16 %v2119, %v2118
        %v2152 = vpack.c.b16 %v2121, %v2120
        %v2153 = vpack.c.b16 %v2123, %v2122
        %v2154 = vpack.c.b16 %v2125, %v2124
        %v2155 = vpack.c.b16 %v2127, %v2126
        %v2156 = vpack.c.b16 %v2129, %v2128
        %v2157 = vpack.c.b16 %v2131, %v2130
        %v2158 = vpack.c.b16 %v2133, %v2132
        %v2159 = vpack.c.b16 %v2135, %v2134
        %v2160 = vpack.c.b16 %v2137, %v2136
        %v2161 = vpack.c.b16 %v2139, %v2138
        %v2162 = vpack.c.b16 %v2141, %v2140
        %v2163 = vpack.c.b16 %v2143, %v2142
        %v2164 = vpack.c.b16 %v2145, %v2144
        %v2165 = vpack.c.b16 %v2147, %v2146
        %2184 = vmatprep.subr.bf16.mxu0 %v1829
        %2185 = vmatpush1.bf16.msra.mxu0 %v1828
        %2186 = vmatprep.subr.bf16.mxu0 %v1833
        %2187 = vmatpush1.bf16.msra.mxu0 %v1832
        %2188 = vmatprep.subr.bf16.mxu0 %v1837
        %2189 = vmatpush1.bf16.msra.mxu0 %v1836
        %2190 = vmatprep.subr.bf16.mxu0 %v1841
        %2191 = vmatpush1.bf16.msra.mxu0 %v1840
        %2192 = vmatprep.subr.bf16.mxu0 %v1845
        %2193 = vmatpush1.bf16.msra.mxu0 %v1844
        %2194 = vmatprep.subr.bf16.mxu0 %v1849
        %2195 = vmatpush1.bf16.msra.mxu0 %v1848
        %2196 = vmatprep.subr.bf16.mxu0 %v1853
        %2197 = vmatpush1.bf16.msra.mxu0 %v1852
        %2198 = vmatprep.subr.bf16.mxu0 %v1857
        %2199 = vmatpush1.bf16.msra.mxu0 %v1856
        %2200 = vmatprep.subr.bf16.mxu0 0
        %2201 = vmatpush1.bf16.msra.mxu0 0
        %2202 = vmatprep.subr.bf16.mxu0 0
        %2203 = vmatpush1.bf16.msra.mxu0 0
        %2204 = vmatprep.subr.bf16.mxu0 0
        %2205 = vmatpush1.bf16.msra.mxu0 0
        %2206 = vmatprep.subr.bf16.mxu0 0
        %2207 = vmatpush1.bf16.msra.mxu0 0
        %2208 = vmatprep.subr.bf16.mxu0 0
        %2209 = vmatpush1.bf16.msra.mxu0 0
        %2210 = vmatprep.subr.bf16.mxu0 0
        %2211 = vmatpush1.bf16.msra.mxu0 0
        %2212 = vmatprep.subr.bf16.mxu0 0
        %2213 = vmatpush1.bf16.msra.mxu0 0
        %2214 = vmatprep.subr.bf16.mxu0 0
        %2215 = vmatpush1.bf16.msra.mxu0 0
        %2216 = vmatprep.mubr.bf16.mxu0 0
        %2217 = vmatmul.mubr.bf16.gmra.mrb[0].mxu0 %v2148
        %v2218 = vpop.f32.mrb[0].mxu0
        %v2219 = vadd.f32 %v1899, %v2218
        %v2220 = vpop.f32.mrb[0].mxu0
        %v2221 = vadd.f32 %v1899, %v2220
        %v2222 = vpop.f32.mrb[0].mxu0
        %v2223 = vadd.f32 %v1904, %v2222
        %v2224 = vpop.f32.mrb[0].mxu0
        %v2225 = vadd.f32 %v1904, %v2224
        %2226 = vmatprep.mubr.bf16.mxu0 0
        %2227 = vmatmul.mubr.bf16.gmra.mrb[0].mxu0 %v2149
        %v2228 = vpop.f32.mrb[0].mxu0
        %v2229 = vadd.f32 %v1909, %v2228
        %v2230 = vpop.f32.mrb[0].mxu0
        %v2231 = vadd.f32 %v1909, %v2230
        %v2232 = vpop.f32.mrb[0].mxu0
        %v2233 = vadd.f32 %v1914, %v2232
        %v2234 = vpop.f32.mrb[0].mxu0
        %v2235 = vadd.f32 %v1914, %v2234
        %2236 = vmatprep.mubr.bf16.mxu0 0
        %2237 = vmatmul.mubr.bf16.gmra.mrb[0].mxu0 %v2150
        %v2238 = vpop.f32.mrb[0].mxu0
        %v2239 = vadd.f32 %v1919, %v2238
        %v2240 = vpop.f32.mrb[0].mxu0
        %v2241 = vadd.f32 %v1919, %v2240
        %v2242 = vpop.f32.mrb[0].mxu0
        %v2243 = vadd.f32 %v1924, %v2242
        %v2244 = vpop.f32.mrb[0].mxu0
        %v2245 = vadd.f32 %v1924, %v2244
        %2246 = vmatprep.mubr.bf16.mxu0 0
        %2247 = vmatmul.mubr.bf16.gmra.mrb[0].mxu0 %v2151
        %v2248 = vpop.f32.mrb[0].mxu0
        %v2249 = vadd.f32 %v1929, %v2248
        %v2250 = vpop.f32.mrb[0].mxu0
        %v2251 = vadd.f32 %v1929, %v2250
        %v2252 = vpop.f32.mrb[0].mxu0
        %v2253 = vadd.f32 %v1934, %v2252
        %v2254 = vpop.f32.mrb[0].mxu0
        %v2255 = vadd.f32 %v1934, %v2254
        %2256 = vmatprep.mubr.bf16.mxu0 0
        %2257 = vmatmul.mubr.bf16.gmra.mrb[0].mxu0 %v2152
        %v2258 = vpop.f32.mrb[0].mxu0
        %v2259 = vadd.f32 %v1939, %v2258
        %v2260 = vpop.f32.mrb[0].mxu0
        %v2261 = vadd.f32 %v1939, %v2260
        %v2262 = vpop.f32.mrb[0].mxu0
        %v2263 = vadd.f32 %v1944, %v2262
        %v2264 = vpop.f32.mrb[0].mxu0
        %v2265 = vadd.f32 %v1944, %v2264
        %2266 = vmatprep.mubr.bf16.mxu0 0
        %2267 = vmatmul.mubr.bf16.gmra.mrb[0].mxu0 %v2153
        %v2268 = vpop.f32.mrb[0].mxu0
        %v2269 = vadd.f32 %v1949, %v2268
        %v2270 = vpop.f32.mrb[0].mxu0
        %v2271 = vadd.f32 %v1949, %v2270
        %v2272 = vpop.f32.mrb[0].mxu0
        %v2273 = vadd.f32 %v1954, %v2272
        %v2274 = vpop.f32.mrb[0].mxu0
        %v2275 = vadd.f32 %v1954, %v2274
        %2276 = vmatprep.mubr.bf16.mxu0 0
        %2277 = vmatmul.mubr.bf16.gmra.mrb[0].mxu0 %v2154
        %v2278 = vpop.f32.mrb[0].mxu0
        %v2279 = vadd.f32 %v1959, %v2278
        %v2280 = vpop.f32.mrb[0].mxu0
        %v2281 = vadd.f32 %v1959, %v2280
        %v2282 = vpop.f32.mrb[0].mxu0
        %v2283 = vadd.f32 %v1964, %v2282
        %v2284 = vpop.f32.mrb[0].mxu0
        %v2285 = vadd.f32 %v1964, %v2284
        %2286 = vmatprep.mubr.bf16.mxu0 0
        %2287 = vmatmul.mubr.bf16.gmra.mrb[0].mxu0 %v2155
        %v2288 = vpop.f32.mrb[0].mxu0
        %v2289 = vadd.f32 %v1969, %v2288
        %v2290 = vpop.f32.mrb[0].mxu0
        %v2291 = vadd.f32 %v1969, %v2290
        %v2292 = vpop.f32.mrb[0].mxu0
        %v2293 = vadd.f32 %v1974, %v2292
        %v2294 = vpop.f32.mrb[0].mxu0
        %v2295 = vadd.f32 %v1974, %v2294
        %2296 = vmatprep.mubr.bf16.mxu0 0
        %2297 = vmatmul.mubr.bf16.gmra.mrb[0].mxu0 %v2156
        %v2298 = vpop.f32.mrb[0].mxu0
        %v2299 = vadd.f32 %v1979, %v2298
        %v2300 = vpop.f32.mrb[0].mxu0
        %v2301 = vadd.f32 %v1979, %v2300
        %v2302 = vpop.f32.mrb[0].mxu0
        %v2303 = vadd.f32 %v1984, %v2302
        %v2304 = vpop.f32.mrb[0].mxu0
        %v2305 = vadd.f32 %v1984, %v2304
        %2306 = vmatprep.mubr.bf16.mxu0 0
        %2307 = vmatmul.mubr.bf16.gmra.mrb[0].mxu0 %v2157
        %v2308 = vpop.f32.mrb[0].mxu0
        %v2309 = vadd.f32 %v1989, %v2308
        %v2310 = vpop.f32.mrb[0].mxu0
        %v2311 = vadd.f32 %v1989, %v2310
        %v2312 = vpop.f32.mrb[0].mxu0
        %v2313 = vadd.f32 %v1994, %v2312
        %v2314 = vpop.f32.mrb[0].mxu0
        %v2315 = vadd.f32 %v1994, %v2314
        %2316 = vmatprep.mubr.bf16.mxu0 0
        %2317 = vmatmul.mubr.bf16.gmra.mrb[0].mxu0 %v2158
        %v2318 = vpop.f32.mrb[0].mxu0
        %v2319 = vadd.f32 %v1999, %v2318
        %v2320 = vpop.f32.mrb[0].mxu0
        %v2321 = vadd.f32 %v1999, %v2320
        %v2322 = vpop.f32.mrb[0].mxu0
        %v2323 = vadd.f32 %v2004, %v2322
        %v2324 = vpop.f32.mrb[0].mxu0
        %v2325 = vadd.f32 %v2004, %v2324
        %2326 = vmatprep.mubr.bf16.mxu0 0
        %2327 = vmatmul.mubr.bf16.gmra.mrb[0].mxu0 %v2159
        %v2328 = vpop.f32.mrb[0].mxu0
        %v2329 = vadd.f32 %v2009, %v2328
        %v2330 = vpop.f32.mrb[0].mxu0
        %v2331 = vadd.f32 %v2009, %v2330
        %v2332 = vpop.f32.mrb[0].mxu0
        %v2333 = vadd.f32 %v2014, %v2332
        %v2334 = vpop.f32.mrb[0].mxu0
        %v2335 = vadd.f32 %v2014, %v2334
        %2336 = vmatprep.mubr.bf16.mxu0 0
        %2337 = vmatmul.mubr.bf16.gmra.mrb[0].mxu0 %v2160
        %v2338 = vpop.f32.mrb[0].mxu0
        %v2339 = vadd.f32 %v2019, %v2338
        %v2340 = vpop.f32.mrb[0].mxu0
        %v2341 = vadd.f32 %v2019, %v2340
        %v2342 = vpop.f32.mrb[0].mxu0
        %v2343 = vadd.f32 %v2024, %v2342
        %v2344 = vpop.f32.mrb[0].mxu0
        %v2345 = vadd.f32 %v2024, %v2344
        %2346 = vmatprep.mubr.bf16.mxu0 0
        %2347 = vmatmul.mubr.bf16.gmra.mrb[0].mxu0 %v2161
        %v2348 = vpop.f32.mrb[0].mxu0
        %v2349 = vadd.f32 %v2029, %v2348
        %v2350 = vpop.f32.mrb[0].mxu0
        %v2351 = vadd.f32 %v2029, %v2350
        %v2352 = vpop.f32.mrb[0].mxu0
        %v2353 = vadd.f32 %v2034, %v2352
        %v2354 = vpop.f32.mrb[0].mxu0
        %v2355 = vadd.f32 %v2034, %v2354
        %2356 = vmatprep.mubr.bf16.mxu0 0
        %2357 = vmatmul.mubr.bf16.gmra.mrb[0].mxu0 %v2162
        %v2358 = vpop.f32.mrb[0].mxu0
        %v2359 = vadd.f32 %v2039, %v2358
        %v2360 = vpop.f32.mrb[0].mxu0
        %v2361 = vadd.f32 %v2039, %v2360
        %v2362 = vpop.f32.mrb[0].mxu0
        %v2363 = vadd.f32 %v2044, %v2362
        %v2364 = vpop.f32.mrb[0].mxu0
        %v2365 = vadd.f32 %v2044, %v2364
        %2366 = vmatprep.mubr.bf16.mxu0 0
        %2367 = vmatmul.mubr.bf16.gmra.mrb[0].mxu0 %v2163
        %v2368 = vpop.f32.mrb[0].mxu0
        %v2369 = vadd.f32 %v2049, %v2368
        %v2370 = vpop.f32.mrb[0].mxu0
        %v2371 = vadd.f32 %v2049, %v2370
        %v2372 = vpop.f32.mrb[0].mxu0
        %v2373 = vadd.f32 %v2054, %v2372
        %v2374 = vpop.f32.mrb[0].mxu0
        %v2375 = vadd.f32 %v2054, %v2374
        %2376 = vmatprep.mubr.bf16.mxu0 0
        %2377 = vmatmul.mubr.bf16.gmra.mrb[0].mxu0 %v2164
        %v2378 = vpop.f32.mrb[0].mxu0
        %v2379 = vadd.f32 %v2059, %v2378
        %v2380 = vpop.f32.mrb[0].mxu0
        %v2381 = vadd.f32 %v2059, %v2380
        %v2382 = vpop.f32.mrb[0].mxu0
        %v2383 = vadd.f32 %v2064, %v2382
        %v2384 = vpop.f32.mrb[0].mxu0
        %v2385 = vadd.f32 %v2064, %v2384
        %2386 = vmatprep.mubr.bf16.mxu0 0
        %2387 = vmatmul.mubr.bf16.gmra.mrb[0].mxu0 %v2165
        %v2388 = vpop.f32.mrb[0].mxu0
        %v2389 = vadd.f32 %v2069, %v2388
        %v2390 = vpop.f32.mrb[0].mxu0
        %v2391 = vadd.f32 %v2069, %v2390
        %v2392 = vpop.f32.mrb[0].mxu0
        %v2393 = vadd.f32 %v2074, %v2392
        %v2394 = vpop.f32.mrb[0].mxu0
        %v2395 = vadd.f32 %v2074, %v2394
        %2396 = vdwg.mxu0
        %2397 = vmatprep.subr.bf16.mxu0 %v1831
        %2398 = vmatpush1.bf16.msra.mxu0 %v1830
        %2399 = vmatprep.subr.bf16.mxu0 %v1835
        %2400 = vmatpush1.bf16.msra.mxu0 %v1834
        %2401 = vmatprep.subr.bf16.mxu0 %v1839
        %2402 = vmatpush1.bf16.msra.mxu0 %v1838
        %2403 = vmatprep.subr.bf16.mxu0 %v1843
        %2404 = vmatpush1.bf16.msra.mxu0 %v1842
        %2405 = vmatprep.subr.bf16.mxu0 %v1847
        %2406 = vmatpush1.bf16.msra.mxu0 %v1846
        %2407 = vmatprep.subr.bf16.mxu0 %v1851
        %2408 = vmatpush1.bf16.msra.mxu0 %v1850
        %2409 = vmatprep.subr.bf16.mxu0 %v1855
        %2410 = vmatpush1.bf16.msra.mxu0 %v1854
        %2411 = vmatprep.subr.bf16.mxu0 %v1859
        %2412 = vmatpush1.bf16.msra.mxu0 %v1858
        %2413 = vmatprep.subr.bf16.mxu0 0
        %2414 = vmatpush1.bf16.msra.mxu0 0
        %2415 = vmatprep.subr.bf16.mxu0 0
        %2416 = vmatpush1.bf16.msra.mxu0 0
        %2417 = vmatprep.subr.bf16.mxu0 0
        %2418 = vmatpush1.bf16.msra.mxu0 0
        %2419 = vmatprep.subr.bf16.mxu0 0
        %2420 = vmatpush1.bf16.msra.mxu0 0
        %2421 = vmatprep.subr.bf16.mxu0 0
        %2422 = vmatpush1.bf16.msra.mxu0 0
        %2423 = vmatprep.subr.bf16.mxu0 0
        %2424 = vmatpush1.bf16.msra.mxu0 0
        %2425 = vmatprep.subr.bf16.mxu0 0
        %2426 = vmatpush1.bf16.msra.mxu0 0
        %2427 = vmatprep.subr.bf16.mxu0 0
        %2428 = vmatpush1.bf16.msra.mxu0 0
        %2429 = vmatprep.mubr.bf16.mxu0 0
        %2430 = vmatmul.mubr.bf16.gmra.mrb[0].mxu0 %v2148
        %v2431 = vpop.f32.mrb[0].mxu0
        %v2432 = vadd.f32 %v1899, %v2431
        %v2433 = vpop.f32.mrb[0].mxu0
        %v2434 = vadd.f32 %v1899, %v2433
        %v2435 = vpop.f32.mrb[0].mxu0
        %v2436 = vadd.f32 %v1904, %v2435
        %v2437 = vpop.f32.mrb[0].mxu0
        %v2438 = vadd.f32 %v1904, %v2437
        %2439 = vmatprep.mubr.bf16.mxu0 0
        %2440 = vmatmul.mubr.bf16.gmra.mrb[0].mxu0 %v2149
        %v2441 = vpop.f32.mrb[0].mxu0
        %v2442 = vadd.f32 %v1909, %v2441
        %v2443 = vpop.f32.mrb[0].mxu0
        %v2444 = vadd.f32 %v1909, %v2443
        %v2445 = vpop.f32.mrb[0].mxu0
        %v2446 = vadd.f32 %v1914, %v2445
        %v2447 = vpop.f32.mrb[0].mxu0
        %v2448 = vadd.f32 %v1914, %v2447
        %2449 = vmatprep.mubr.bf16.mxu0 0
        %2450 = vmatmul.mubr.bf16.gmra.mrb[0].mxu0 %v2150
        %v2451 = vpop.f32.mrb[0].mxu0
        %v2452 = vadd.f32 %v1919, %v2451
        %v2453 = vpop.f32.mrb[0].mxu0
        %v2454 = vadd.f32 %v1919, %v2453
        %v2455 = vpop.f32.mrb[0].mxu0
        %v2456 = vadd.f32 %v1924, %v2455
        %v2457 = vpop.f32.mrb[0].mxu0
        %v2458 = vadd.f32 %v1924, %v2457
        %2459 = vmatprep.mubr.bf16.mxu0 0
        %2460 = vmatmul.mubr.bf16.gmra.mrb[0].mxu0 %v2151
        %v2461 = vpop.f32.mrb[0].mxu0
        %v2462 = vadd.f32 %v1929, %v2461
        %v2463 = vpop.f32.mrb[0].mxu0
        %v2464 = vadd.f32 %v1929, %v2463
        %v2465 = vpop.f32.mrb[0].mxu0
        %v2466 = vadd.f32 %v1934, %v2465
        %v2467 = vpop.f32.mrb[0].mxu0
        %v2468 = vadd.f32 %v1934, %v2467
        %2469 = vmatprep.mubr.bf16.mxu0 0
        %2470 = vmatmul.mubr.bf16.gmra.mrb[0].mxu0 %v2152
        %v2471 = vpop.f32.mrb[0].mxu0
        %v2472 = vadd.f32 %v1939, %v2471
        %v2473 = vpop.f32.mrb[0].mxu0
        %v2474 = vadd.f32 %v1939, %v2473
        %v2475 = vpop.f32.mrb[0].mxu0
        %v2476 = vadd.f32 %v1944, %v2475
        %v2477 = vpop.f32.mrb[0].mxu0
        %v2478 = vadd.f32 %v1944, %v2477
        %2479 = vmatprep.mubr.bf16.mxu0 0
        %2480 = vmatmul.mubr.bf16.gmra.mrb[0].mxu0 %v2153
        %v2481 = vpop.f32.mrb[0].mxu0
        %v2482 = vadd.f32 %v1949, %v2481
        %v2483 = vpop.f32.mrb[0].mxu0
        %v2484 = vadd.f32 %v1949, %v2483
        %v2485 = vpop.f32.mrb[0].mxu0
        %v2486 = vadd.f32 %v1954, %v2485
        %v2487 = vpop.f32.mrb[0].mxu0
        %v2488 = vadd.f32 %v1954, %v2487
        %2489 = vmatprep.mubr.bf16.mxu0 0
        %2490 = vmatmul.mubr.bf16.gmra.mrb[0].mxu0 %v2154
        %v2491 = vpop.f32.mrb[0].mxu0
        %v2492 = vadd.f32 %v1959, %v2491
        %v2493 = vpop.f32.mrb[0].mxu0
        %v2494 = vadd.f32 %v1959, %v2493
        %v2495 = vpop.f32.mrb[0].mxu0
        %v2496 = vadd.f32 %v1964, %v2495
        %v2497 = vpop.f32.mrb[0].mxu0
        %v2498 = vadd.f32 %v1964, %v2497
        %2499 = vmatprep.mubr.bf16.mxu0 0
        %2500 = vmatmul.mubr.bf16.gmra.mrb[0].mxu0 %v2155
        %v2501 = vpop.f32.mrb[0].mxu0
        %v2502 = vadd.f32 %v1969, %v2501
        %v2503 = vpop.f32.mrb[0].mxu0
        %v2504 = vadd.f32 %v1969, %v2503
        %v2505 = vpop.f32.mrb[0].mxu0
        %v2506 = vadd.f32 %v1974, %v2505
        %v2507 = vpop.f32.mrb[0].mxu0
        %v2508 = vadd.f32 %v1974, %v2507
        %2509 = vmatprep.mubr.bf16.mxu0 0
        %2510 = vmatmul.mubr.bf16.gmra.mrb[0].mxu0 %v2156
        %v2511 = vpop.f32.mrb[0].mxu0
        %v2512 = vadd.f32 %v1979, %v2511
        %v2513 = vpop.f32.mrb[0].mxu0
        %v2514 = vadd.f32 %v1979, %v2513
        %v2515 = vpop.f32.mrb[0].mxu0
        %v2516 = vadd.f32 %v1984, %v2515
        %v2517 = vpop.f32.mrb[0].mxu0
        %v2518 = vadd.f32 %v1984, %v2517
        %2519 = vmatprep.mubr.bf16.mxu0 0
        %2520 = vmatmul.mubr.bf16.gmra.mrb[0].mxu0 %v2157
        %v2521 = vpop.f32.mrb[0].mxu0
        %v2522 = vadd.f32 %v1989, %v2521
        %v2523 = vpop.f32.mrb[0].mxu0
        %v2524 = vadd.f32 %v1989, %v2523
        %v2525 = vpop.f32.mrb[0].mxu0
        %v2526 = vadd.f32 %v1994, %v2525
        %v2527 = vpop.f32.mrb[0].mxu0
        %v2528 = vadd.f32 %v1994, %v2527
        %2529 = vmatprep.mubr.bf16.mxu0 0
        %2530 = vmatmul.mubr.bf16.gmra.mrb[0].mxu0 %v2158
        %v2531 = vpop.f32.mrb[0].mxu0
        %v2532 = vadd.f32 %v1999, %v2531
        %v2533 = vpop.f32.mrb[0].mxu0
        %v2534 = vadd.f32 %v1999, %v2533
        %v2535 = vpop.f32.mrb[0].mxu0
        %v2536 = vadd.f32 %v2004, %v2535
        %v2537 = vpop.f32.mrb[0].mxu0
        %v2538 = vadd.f32 %v2004, %v2537
        %2539 = vmatprep.mubr.bf16.mxu0 0
        %2540 = vmatmul.mubr.bf16.gmra.mrb[0].mxu0 %v2159
        %v2541 = vpop.f32.mrb[0].mxu0
        %v2542 = vadd.f32 %v2009, %v2541
        %v2543 = vpop.f32.mrb[0].mxu0
        %v2544 = vadd.f32 %v2009, %v2543
        %v2545 = vpop.f32.mrb[0].mxu0
        %v2546 = vadd.f32 %v2014, %v2545
        %v2547 = vpop.f32.mrb[0].mxu0
        %v2548 = vadd.f32 %v2014, %v2547
        %2549 = vmatprep.mubr.bf16.mxu0 0
        %2550 = vmatmul.mubr.bf16.gmra.mrb[0].mxu0 %v2160
        %v2551 = vpop.f32.mrb[0].mxu0
        %v2552 = vadd.f32 %v2019, %v2551
        %v2553 = vpop.f32.mrb[0].mxu0
        %v2554 = vadd.f32 %v2019, %v2553
        %v2555 = vpop.f32.mrb[0].mxu0
        %v2556 = vadd.f32 %v2024, %v2555
        %v2557 = vpop.f32.mrb[0].mxu0
        %v2558 = vadd.f32 %v2024, %v2557
        %2559 = vmatprep.mubr.bf16.mxu0 0
        %2560 = vmatmul.mubr.bf16.gmra.mrb[0].mxu0 %v2161
        %v2561 = vpop.f32.mrb[0].mxu0
        %v2562 = vadd.f32 %v2029, %v2561
        %v2563 = vpop.f32.mrb[0].mxu0
        %v2564 = vadd.f32 %v2029, %v2563
        %v2565 = vpop.f32.mrb[0].mxu0
        %v2566 = vadd.f32 %v2034, %v2565
        %v2567 = vpop.f32.mrb[0].mxu0
        %v2568 = vadd.f32 %v2034, %v2567
        %2569 = vmatprep.mubr.bf16.mxu0 0
        %2570 = vmatmul.mubr.bf16.gmra.mrb[0].mxu0 %v2162
        %v2571 = vpop.f32.mrb[0].mxu0
        %v2572 = vadd.f32 %v2039, %v2571
        %v2573 = vpop.f32.mrb[0].mxu0
        %v2574 = vadd.f32 %v2039, %v2573
        %v2575 = vpop.f32.mrb[0].mxu0
        %v2576 = vadd.f32 %v2044, %v2575
        %v2577 = vpop.f32.mrb[0].mxu0
        %v2578 = vadd.f32 %v2044, %v2577
        %2579 = vmatprep.mubr.bf16.mxu0 0
        %2580 = vmatmul.mubr.bf16.gmra.mrb[0].mxu0 %v2163
        %v2581 = vpop.f32.mrb[0].mxu0
        %v2582 = vadd.f32 %v2049, %v2581
        %v2583 = vpop.f32.mrb[0].mxu0
        %v2584 = vadd.f32 %v2049, %v2583
        %v2585 = vpop.f32.mrb[0].mxu0
        %v2586 = vadd.f32 %v2054, %v2585
        %v2587 = vpop.f32.mrb[0].mxu0
        %v2588 = vadd.f32 %v2054, %v2587
        %2589 = vmatprep.mubr.bf16.mxu0 0
        %2590 = vmatmul.mubr.bf16.gmra.mrb[0].mxu0 %v2164
        %v2591 = vpop.f32.mrb[0].mxu0
        %v2592 = vadd.f32 %v2059, %v2591
        %v2593 = vpop.f32.mrb[0].mxu0
        %v2594 = vadd.f32 %v2059, %v2593
        %v2595 = vpop.f32.mrb[0].mxu0
        %v2596 = vadd.f32 %v2064, %v2595
        %v2597 = vpop.f32.mrb[0].mxu0
        %v2598 = vadd.f32 %v2064, %v2597
        %2599 = vmatprep.mubr.bf16.mxu0 0
        %2600 = vmatmul.mubr.bf16.gmra.mrb[0].mxu0 %v2165
        %v2601 = vpop.f32.mrb[0].mxu0
        %v2602 = vadd.f32 %v2069, %v2601
        %v2603 = vpop.f32.mrb[0].mxu0
        %v2604 = vadd.f32 %v2069, %v2603
        %v2605 = vpop.f32.mrb[0].mxu0
        %v2606 = vadd.f32 %v2074, %v2605
        %v2607 = vpop.f32.mrb[0].mxu0
        %v2608 = vadd.f32 %v2074, %v2607
        %2609 = vdwg.mxu0
        %v2614 = vrot.slane %v2379, 4
        %v2615 = vrot.slane %v2381, 4
        %v2616 = vrot.slane %v2592, 4
        %v2617 = vrot.slane %v2594, 4
        %v2622 = vmax.f32 %v2379, %v2614
        %v2623 = vmax.f32 %v2381, %v2615
        %v2624 = vmax.f32 %v2592, %v2616
        %v2625 = vmax.f32 %v2594, %v2617
        %v2626 = vmax.f32 %v2622, %v2383
        %v2627 = vmax.f32 %v2623, %v2385
        %v2628 = vmax.f32 %v2624, %v2596
        %v2629 = vmax.f32 %v2625, %v2598
        %v2634 = vrot.slane %v2383, 4
        %v2635 = vrot.slane %v2385, 4
        %v2636 = vrot.slane %v2596, 4
        %v2637 = vrot.slane %v2598, 4
        %v2642 = vmax.f32 %v2626, %v2634
        %v2643 = vmax.f32 %v2627, %v2635
        %v2644 = vmax.f32 %v2628, %v2636
        %v2645 = vmax.f32 %v2629, %v2637
        %v2646 = vmax.f32 %v2642, %v2389
        %v2647 = vmax.f32 %v2643, %v2391
        %v2648 = vmax.f32 %v2644, %v2602
        %v2649 = vmax.f32 %v2645, %v2604
        %v2654 = vrot.slane %v2389, 4
        %v2655 = vrot.slane %v2391, 4
        %v2656 = vrot.slane %v2602, 4
        %v2657 = vrot.slane %v2604, 4
        %v2662 = vmax.f32 %v2646, %v2654
        %v2663 = vmax.f32 %v2647, %v2655
        %v2664 = vmax.f32 %v2648, %v2656
        %v2665 = vmax.f32 %v2649, %v2657
        %v2666 = vmax.f32 %v2662, %v2393
        %v2667 = vmax.f32 %v2663, %v2395
        %v2668 = vmax.f32 %v2664, %v2606
        %v2669 = vmax.f32 %v2665, %v2608
        %v2674 = vrot.slane %v2393, 4
        %v2675 = vrot.slane %v2395, 4
        %v2676 = vrot.slane %v2606, 4
        %v2677 = vrot.slane %v2608, 4
        %v2682 = vmax.f32 %v2666, %v2674
        %v2683 = vmax.f32 %v2667, %v2675
        %v2684 = vmax.f32 %v2668, %v2676
        %v2685 = vmax.f32 %v2669, %v2677
        %v2686 = vld [vmem:[%s5] sm:$0xff]
        %v2687 = vld [vmem:[%s5 + $0x8] sm:$0xff]
        %v2688 = vld [vmem:[%s5 + $0x10] sm:$0xff]
        %v2689 = vld [vmem:[%s5 + $0x18] sm:$0xff]
        %v2690 = vsub.f32 %v2379, %v2682
        %v2691 = vsub.f32 %v2381, %v2683
        %v2692 = vsub.f32 %v2592, %v2684
        %v2693 = vsub.f32 %v2594, %v2685
        %v2694 = vmul.f32 %v2690, 1.442695
        %v2695 = vpow.pop %v2694
        %v2696 = vmul.f32 %v2691, 1.442695
        %v2697 = vpow.pop %v2696
        %v2698 = vmul.f32 %v2692, 1.442695
        %v2699 = vpow.pop %v2698
        %v2700 = vmul.f32 %v2693, 1.442695
        %v2701 = vpow.pop %v2700
        %v2702 = vadd.f32 %v2695, 0.0
        %v2703 = vadd.f32 %v2697, 0.0
        %v2704 = vadd.f32 %v2699, 0.0
        %v2705 = vadd.f32 %v2701, 0.0
        %v2707 = vsel %vm676, %v2686, 0
        %v2710 = vsel %vm676, %v2687, 0
        %v2713 = vsel %vm676, %v2688, 0
        %v2716 = vsel %vm676, %v2689, 0
        %v2719 = vsel %vm725, %v2695, 0
        %v2722 = vsel %vm725, %v2697, 0
        %v2725 = vsel %vm725, %v2699, 0
        %v2728 = vsel %vm725, %v2701, 0
        %2730 = vmatprep.subr.mxu0 %v2722
        %2731 = vmatpush1.msra.mxu0 %v2719
        %2732 = vmatprep.subr.mxu0 0.0
        %2733 = vmatpush1.msra.mxu0 0.0
        %2734 = vmatprep.subr.mxu0 0.0
        %2735 = vmatpush1.msra.mxu0 0.0
        %2736 = vmatprep.subr.mxu0 0.0
        %2737 = vmatpush1.msra.mxu0 0.0
        %2738 = vmatprep.subr.mxu0 0.0
        %2739 = vmatpush1.msra.mxu0 0.0
        %2740 = vmatprep.subr.mxu0 0.0
        %2741 = vmatpush1.msra.mxu0 0.0
        %2742 = vmatprep.subr.mxu0 0.0
        %2743 = vmatpush1.msra.mxu0 0.0
        %2744 = vmatprep.subr.mxu0 0.0
        %2745 = vmatpush1.msra.mxu0 0.0
        %2746 = vmatprep.subr.mxu0 0.0
        %2747 = vmatpush1.msra.mxu0 0.0
        %2748 = vmatprep.subr.mxu0 0.0
        %2749 = vmatpush1.msra.mxu0 0.0
        %2750 = vmatprep.subr.mxu0 0.0
        %2751 = vmatpush1.msra.mxu0 0.0
        %2752 = vmatprep.subr.mxu0 0.0
        %2753 = vmatpush1.msra.mxu0 0.0
        %2754 = vmatprep.subr.mxu0 0.0
        %2755 = vmatpush1.msra.mxu0 0.0
        %2756 = vmatprep.subr.mxu0 0.0
        %2757 = vmatpush1.msra.mxu0 0.0
        %2758 = vmatprep.subr.mxu0 0.0
        %2759 = vmatpush1.msra.mxu0 0.0
        %2760 = vmatprep.subr.mxu0 0.0
        %2761 = vmatpush1.msra.mxu0 0.0
        %2762 = vmatprep.subr.mxu0 0.0
        %2763 = vmatpush1.msra.mxu0 0.0
        %2764 = vmatprep.subr.mxu0 0.0
        %2765 = vmatpush1.msra.mxu0 0.0
        %2766 = vmatprep.subr.mxu0 0.0
        %2767 = vmatpush1.msra.mxu0 0.0
        %2768 = vmatprep.subr.mxu0 0.0
        %2769 = vmatpush1.msra.mxu0 0.0
        %2770 = vmatprep.subr.mxu0 0.0
        %2771 = vmatpush1.msra.mxu0 0.0
        %2772 = vmatprep.subr.mxu0 0.0
        %2773 = vmatpush1.msra.mxu0 0.0
        %2774 = vmatprep.subr.mxu0 0.0
        %2775 = vmatpush1.msra.mxu0 0.0
        %2776 = vmatprep.subr.mxu0 0.0
        %2777 = vmatpush1.msra.mxu0 0.0
        %2778 = vmatprep.subr.mxu0 0.0
        %2779 = vmatpush1.msra.mxu0 0.0
        %2780 = vmatprep.subr.mxu0 0.0
        %2781 = vmatpush1.msra.mxu0 0.0
        %2782 = vmatprep.subr.mxu0 0.0
        %2783 = vmatpush1.msra.mxu0 0.0
        %2784 = vmatprep.subr.mxu0 0.0
        %2785 = vmatpush1.msra.mxu0 0.0
        %2786 = vmatprep.subr.mxu0 0.0
        %2787 = vmatpush1.msra.mxu0 0.0
        %2788 = vmatprep.subr.mxu0 0.0
        %2789 = vmatpush1.msra.mxu0 0.0
        %2790 = vmatprep.subr.mxu0 0.0
        %2791 = vmatpush1.msra.mxu0 0.0
        %2792 = vmatprep.subr.mxu0 0.0
        %2793 = vmatpush1.msra.mxu0 0.0
        %2794 = vmatprep.mubr.f32.mxu0 0.0
        %2795 = vmatmul.mubr.f32.gmra.mrb[0].mxu0 %v2707
        %v2796 = vpop.f32.mrb[0].mxu0
        %v2797 = vadd.f32 0.0, %v2796
        %v2798 = vpop.f32.mrb[0].mxu0
        %v2799 = vadd.f32 0.0, %v2798
        %2800 = vmatprep.mubr.f32.mxu0 0.0
        %2801 = vmatmul.mubr.f32.gmra.mrb[0].mxu0 %v2710
        %v2802 = vpop.f32.mrb[0].mxu0
        %v2803 = vadd.f32 0.0, %v2802
        %v2804 = vpop.f32.mrb[0].mxu0
        %v2805 = vadd.f32 0.0, %v2804
        %2806 = vmatprep.mubr.f32.mxu0 0.0
        %2807 = vmatmul.mubr.f32.gmra.mrb[0].mxu0 %v2713
        %v2808 = vpop.f32.mrb[0].mxu0
        %v2809 = vadd.f32 0.0, %v2808
        %v2810 = vpop.f32.mrb[0].mxu0
        %v2811 = vadd.f32 0.0, %v2810
        %2812 = vmatprep.mubr.f32.mxu0 0.0
        %2813 = vmatmul.mubr.f32.gmra.mrb[0].mxu0 %v2716
        %v2814 = vpop.f32.mrb[0].mxu0
        %v2815 = vadd.f32 0.0, %v2814
        %v2816 = vpop.f32.mrb[0].mxu0
        %v2817 = vadd.f32 0.0, %v2816
        %2818 = vdwg.mxu0
        %2819 = vmatprep.subr.mxu0 %v2728
        %2820 = vmatpush1.msra.mxu0 %v2725
        %2821 = vmatprep.subr.mxu0 0.0
        %2822 = vmatpush1.msra.mxu0 0.0
        %2823 = vmatprep.subr.mxu0 0.0
        %2824 = vmatpush1.msra.mxu0 0.0
        %2825 = vmatprep.subr.mxu0 0.0
        %2826 = vmatpush1.msra.mxu0 0.0
        %2827 = vmatprep.subr.mxu0 0.0
        %2828 = vmatpush1.msra.mxu0 0.0
        %2829 = vmatprep.subr.mxu0 0.0
        %2830 = vmatpush1.msra.mxu0 0.0
        %2831 = vmatprep.subr.mxu0 0.0
        %2832 = vmatpush1.msra.mxu0 0.0
        %2833 = vmatprep.subr.mxu0 0.0
        %2834 = vmatpush1.msra.mxu0 0.0
        %2835 = vmatprep.subr.mxu0 0.0
        %2836 = vmatpush1.msra.mxu0 0.0
        %2837 = vmatprep.subr.mxu0 0.0
        %2838 = vmatpush1.msra.mxu0 0.0
        %2839 = vmatprep.subr.mxu0 0.0
        %2840 = vmatpush1.msra.mxu0 0.0
        %2841 = vmatprep.subr.mxu0 0.0
        %2842 = vmatpush1.msra.mxu0 0.0
        %2843 = vmatprep.subr.mxu0 0.0
        %2844 = vmatpush1.msra.mxu0 0.0
        %2845 = vmatprep.subr.mxu0 0.0
        %2846 = vmatpush1.msra.mxu0 0.0
        %2847 = vmatprep.subr.mxu0 0.0
        %2848 = vmatpush1.msra.mxu0 0.0
        %2849 = vmatprep.subr.mxu0 0.0
        %2850 = vmatpush1.msra.mxu0 0.0
        %2851 = vmatprep.subr.mxu0 0.0
        %2852 = vmatpush1.msra.mxu0 0.0
        %2853 = vmatprep.subr.mxu0 0.0
        %2854 = vmatpush1.msra.mxu0 0.0
        %2855 = vmatprep.subr.mxu0 0.0
        %2856 = vmatpush1.msra.mxu0 0.0
        %2857 = vmatprep.subr.mxu0 0.0
        %2858 = vmatpush1.msra.mxu0 0.0
        %2859 = vmatprep.subr.mxu0 0.0
        %2860 = vmatpush1.msra.mxu0 0.0
        %2861 = vmatprep.subr.mxu0 0.0
        %2862 = vmatpush1.msra.mxu0 0.0
        %2863 = vmatprep.subr.mxu0 0.0
        %2864 = vmatpush1.msra.mxu0 0.0
        %2865 = vmatprep.subr.mxu0 0.0
        %2866 = vmatpush1.msra.mxu0 0.0
        %2867 = vmatprep.subr.mxu0 0.0
        %2868 = vmatpush1.msra.mxu0 0.0
        %2869 = vmatprep.subr.mxu0 0.0
        %2870 = vmatpush1.msra.mxu0 0.0
        %2871 = vmatprep.subr.mxu0 0.0
        %2872 = vmatpush1.msra.mxu0 0.0
        %2873 = vmatprep.subr.mxu0 0.0
        %2874 = vmatpush1.msra.mxu0 0.0
        %2875 = vmatprep.subr.mxu0 0.0
        %2876 = vmatpush1.msra.mxu0 0.0
        %2877 = vmatprep.subr.mxu0 0.0
        %2878 = vmatpush1.msra.mxu0 0.0
        %2879 = vmatprep.subr.mxu0 0.0
        %2880 = vmatpush1.msra.mxu0 0.0
        %2881 = vmatprep.subr.mxu0 0.0
        %2882 = vmatpush1.msra.mxu0 0.0
        %2883 = vmatprep.mubr.f32.mxu0 0.0
        %2884 = vmatmul.mubr.f32.gmra.mrb[0].mxu0 %v2707
        %v2885 = vpop.f32.mrb[0].mxu0
        %v2886 = vadd.f32 0.0, %v2885
        %v2887 = vpop.f32.mrb[0].mxu0
        %v2888 = vadd.f32 0.0, %v2887
        %2889 = vmatprep.mubr.f32.mxu0 0.0
        %2890 = vmatmul.mubr.f32.gmra.mrb[0].mxu0 %v2710
        %v2891 = vpop.f32.mrb[0].mxu0
        %v2892 = vadd.f32 0.0, %v2891
        %v2893 = vpop.f32.mrb[0].mxu0
        %v2894 = vadd.f32 0.0, %v2893
        %2895 = vmatprep.mubr.f32.mxu0 0.0
        %2896 = vmatmul.mubr.f32.gmra.mrb[0].mxu0 %v2713
        %v2897 = vpop.f32.mrb[0].mxu0
        %v2898 = vadd.f32 0.0, %v2897
        %v2899 = vpop.f32.mrb[0].mxu0
        %v2900 = vadd.f32 0.0, %v2899
        %2901 = vmatprep.mubr.f32.mxu0 0.0
        %2902 = vmatmul.mubr.f32.gmra.mrb[0].mxu0 %v2716
        %v2903 = vpop.f32.mrb[0].mxu0
        %v2904 = vadd.f32 0.0, %v2903
        %v2905 = vpop.f32.mrb[0].mxu0
        %v2906 = vadd.f32 0.0, %v2905
        %2907 = vdwg.mxu0
        %v2908 = vmul.f32 %v2797, %v2219
        %v2909 = vmul.f32 %v2799, %v2221
        %v2910 = vmul.f32 %v2886, %v2432
        %v2911 = vmul.f32 %v2888, %v2434
        %v2912 = vmul.f32 %v2803, %v2223
        %v2913 = vmul.f32 %v2805, %v2225
        %v2914 = vmul.f32 %v2892, %v2436
        %v2915 = vmul.f32 %v2894, %v2438
        %v2916 = vmul.f32 %v2809, %v2229
        %v2917 = vmul.f32 %v2811, %v2231
        %v2918 = vmul.f32 %v2898, %v2442
        %v2919 = vmul.f32 %v2900, %v2444
        %v2920 = vmul.f32 %v2815, %v2233
        %v2921 = vmul.f32 %v2817, %v2235
        %v2922 = vmul.f32 %v2904, %v2446
        %v2923 = vmul.f32 %v2906, %v2448
        %v2924 = vadd.f32 %v2908, 0.0
        %v2925 = vadd.f32 %v2909, 0.0
        %v2926 = vadd.f32 %v2910, 0.0
        %v2927 = vadd.f32 %v2911, 0.0
        %v2928 = vadd.f32 %v2912, 0.0
        %v2929 = vadd.f32 %v2913, 0.0
        %v2930 = vadd.f32 %v2914, 0.0
        %v2931 = vadd.f32 %v2915, 0.0
        %v2932 = vadd.f32 %v2916, 0.0
        %v2933 = vadd.f32 %v2917, 0.0
        %v2934 = vadd.f32 %v2918, 0.0
        %v2935 = vadd.f32 %v2919, 0.0
        %v2936 = vadd.f32 %v2920, 0.0
        %v2937 = vadd.f32 %v2921, 0.0
        %v2938 = vadd.f32 %v2922, 0.0
        %v2939 = vadd.f32 %v2923, 0.0
        %v2944 = vrot.slane %v2682, 4
        %v2945 = vrot.slane %v2683, 4
        %v2946 = vrot.slane %v2684, 4
        %v2947 = vrot.slane %v2685, 4
        %v2952 = vsub.f32 %v2379, %v2944
        %v2953 = vsub.f32 %v2381, %v2945
        %v2954 = vsub.f32 %v2592, %v2946
        %v2955 = vsub.f32 %v2594, %v2947
        %v2956 = vmul.f32 %v2952, 1.442695
        %v2957 = vpow.pop %v2956
        %v2958 = vmul.f32 %v2953, 1.442695
        %v2959 = vpow.pop %v2958
        %v2960 = vmul.f32 %v2954, 1.442695
        %v2961 = vpow.pop %v2960
        %v2962 = vmul.f32 %v2955, 1.442695
        %v2963 = vpow.pop %v2962
        %v2968 = vrot.slane %v2957, 4
        %v2969 = vrot.slane %v2959, 4
        %v2970 = vrot.slane %v2961, 4
        %v2971 = vrot.slane %v2963, 4
        %v2976 = vadd.f32 %v2702, %v2968
        %v2977 = vadd.f32 %v2703, %v2969
        %v2978 = vadd.f32 %v2704, %v2970
        %v2979 = vadd.f32 %v2705, %v2971
        %v2980 = vsel %vm725, %v2968, 0
        %v2982 = vsel %vm725, %v2969, 0
        %v2984 = vsel %vm725, %v2970, 0
        %v2986 = vsel %vm725, %v2971, 0
        %2988 = vmatprep.subr.mxu0 %v2982
        %2989 = vmatpush1.msra.mxu0 %v2980
        %2990 = vmatprep.subr.mxu0 0.0
        %2991 = vmatpush1.msra.mxu0 0.0
        %2992 = vmatprep.subr.mxu0 0.0
        %2993 = vmatpush1.msra.mxu0 0.0
        %2994 = vmatprep.subr.mxu0 0.0
        %2995 = vmatpush1.msra.mxu0 0.0
        %2996 = vmatprep.subr.mxu0 0.0
        %2997 = vmatpush1.msra.mxu0 0.0
        %2998 = vmatprep.subr.mxu0 0.0
        %2999 = vmatpush1.msra.mxu0 0.0
        %3000 = vmatprep.subr.mxu0 0.0
        %3001 = vmatpush1.msra.mxu0 0.0
        %3002 = vmatprep.subr.mxu0 0.0
        %3003 = vmatpush1.msra.mxu0 0.0
        %3004 = vmatprep.subr.mxu0 0.0
        %3005 = vmatpush1.msra.mxu0 0.0
        %3006 = vmatprep.subr.mxu0 0.0
        %3007 = vmatpush1.msra.mxu0 0.0
        %3008 = vmatprep.subr.mxu0 0.0
        %3009 = vmatpush1.msra.mxu0 0.0
        %3010 = vmatprep.subr.mxu0 0.0
        %3011 = vmatpush1.msra.mxu0 0.0
        %3012 = vmatprep.subr.mxu0 0.0
        %3013 = vmatpush1.msra.mxu0 0.0
        %3014 = vmatprep.subr.mxu0 0.0
        %3015 = vmatpush1.msra.mxu0 0.0
        %3016 = vmatprep.subr.mxu0 0.0
        %3017 = vmatpush1.msra.mxu0 0.0
        %3018 = vmatprep.subr.mxu0 0.0
        %3019 = vmatpush1.msra.mxu0 0.0
        %3020 = vmatprep.subr.mxu0 0.0
        %3021 = vmatpush1.msra.mxu0 0.0
        %3022 = vmatprep.subr.mxu0 0.0
        %3023 = vmatpush1.msra.mxu0 0.0
        %3024 = vmatprep.subr.mxu0 0.0
        %3025 = vmatpush1.msra.mxu0 0.0
        %3026 = vmatprep.subr.mxu0 0.0
        %3027 = vmatpush1.msra.mxu0 0.0
        %3028 = vmatprep.subr.mxu0 0.0
        %3029 = vmatpush1.msra.mxu0 0.0
        %3030 = vmatprep.subr.mxu0 0.0
        %3031 = vmatpush1.msra.mxu0 0.0
        %3032 = vmatprep.subr.mxu0 0.0
        %3033 = vmatpush1.msra.mxu0 0.0
        %3034 = vmatprep.subr.mxu0 0.0
        %3035 = vmatpush1.msra.mxu0 0.0
        %3036 = vmatprep.subr.mxu0 0.0
        %3037 = vmatpush1.msra.mxu0 0.0
        %3038 = vmatprep.subr.mxu0 0.0
        %3039 = vmatpush1.msra.mxu0 0.0
        %3040 = vmatprep.subr.mxu0 0.0
        %3041 = vmatpush1.msra.mxu0 0.0
        %3042 = vmatprep.subr.mxu0 0.0
        %3043 = vmatpush1.msra.mxu0 0.0
        %3044 = vmatprep.subr.mxu0 0.0
        %3045 = vmatpush1.msra.mxu0 0.0
        %3046 = vmatprep.subr.mxu0 0.0
        %3047 = vmatpush1.msra.mxu0 0.0
        %3048 = vmatprep.subr.mxu0 0.0
        %3049 = vmatpush1.msra.mxu0 0.0
        %3050 = vmatprep.subr.mxu0 0.0
        %3051 = vmatpush1.msra.mxu0 0.0
        %3052 = vmatprep.mubr.f32.mxu0 0.0
        %3053 = vmatmul.mubr.f32.gmra.mrb[0].mxu0 %v2707
        %v3054 = vpop.f32.mrb[0].mxu0
        %v3055 = vadd.f32 0.0, %v3054
        %v3056 = vpop.f32.mrb[0].mxu0
        %v3057 = vadd.f32 0.0, %v3056
        %3058 = vmatprep.mubr.f32.mxu0 0.0
        %3059 = vmatmul.mubr.f32.gmra.mrb[0].mxu0 %v2710
        %v3060 = vpop.f32.mrb[0].mxu0
        %v3061 = vadd.f32 0.0, %v3060
        %v3062 = vpop.f32.mrb[0].mxu0
        %v3063 = vadd.f32 0.0, %v3062
        %3064 = vmatprep.mubr.f32.mxu0 0.0
        %3065 = vmatmul.mubr.f32.gmra.mrb[0].mxu0 %v2713
        %v3066 = vpop.f32.mrb[0].mxu0
        %v3067 = vadd.f32 0.0, %v3066
        %v3068 = vpop.f32.mrb[0].mxu0
        %v3069 = vadd.f32 0.0, %v3068
        %3070 = vmatprep.mubr.f32.mxu0 0.0
        %3071 = vmatmul.mubr.f32.gmra.mrb[0].mxu0 %v2716
        %v3072 = vpop.f32.mrb[0].mxu0
        %v3073 = vadd.f32 0.0, %v3072
        %v3074 = vpop.f32.mrb[0].mxu0
        %v3075 = vadd.f32 0.0, %v3074
        %3076 = vdwg.mxu0
        %3077 = vmatprep.subr.mxu0 %v2986
        %3078 = vmatpush1.msra.mxu0 %v2984
        %3079 = vmatprep.subr.mxu0 0.0
        %3080 = vmatpush1.msra.mxu0 0.0
        %3081 = vmatprep.subr.mxu0 0.0
        %3082 = vmatpush1.msra.mxu0 0.0
        %3083 = vmatprep.subr.mxu0 0.0
        %3084 = vmatpush1.msra.mxu0 0.0
        %3085 = vmatprep.subr.mxu0 0.0
        %3086 = vmatpush1.msra.mxu0 0.0
        %3087 = vmatprep.subr.mxu0 0.0
        %3088 = vmatpush1.msra.mxu0 0.0
        %3089 = vmatprep.subr.mxu0 0.0
        %3090 = vmatpush1.msra.mxu0 0.0
        %3091 = vmatprep.subr.mxu0 0.0
        %3092 = vmatpush1.msra.mxu0 0.0
        %3093 = vmatprep.subr.mxu0 0.0
        %3094 = vmatpush1.msra.mxu0 0.0
        %3095 = vmatprep.subr.mxu0 0.0
        %3096 = vmatpush1.msra.mxu0 0.0
        %3097 = vmatprep.subr.mxu0 0.0
        %3098 = vmatpush1.msra.mxu0 0.0
        %3099 = vmatprep.subr.mxu0 0.0
        %3100 = vmatpush1.msra.mxu0 0.0
        %3101 = vmatprep.subr.mxu0 0.0
        %3102 = vmatpush1.msra.mxu0 0.0
        %3103 = vmatprep.subr.mxu0 0.0
        %3104 = vmatpush1.msra.mxu0 0.0
        %3105 = vmatprep.subr.mxu0 0.0
        %3106 = vmatpush1.msra.mxu0 0.0
        %3107 = vmatprep.subr.mxu0 0.0
        %3108 = vmatpush1.msra.mxu0 0.0
        %3109 = vmatprep.subr.mxu0 0.0
        %3110 = vmatpush1.msra.mxu0 0.0
        %3111 = vmatprep.subr.mxu0 0.0
        %3112 = vmatpush1.msra.mxu0 0.0
        %3113 = vmatprep.subr.mxu0 0.0
        %3114 = vmatpush1.msra.mxu0 0.0
        %3115 = vmatprep.subr.mxu0 0.0
        %3116 = vmatpush1.msra.mxu0 0.0
        %3117 = vmatprep.subr.mxu0 0.0
        %3118 = vmatpush1.msra.mxu0 0.0
        %3119 = vmatprep.subr.mxu0 0.0
        %3120 = vmatpush1.msra.mxu0 0.0
        %3121 = vmatprep.subr.mxu0 0.0
        %3122 = vmatpush1.msra.mxu0 0.0
        %3123 = vmatprep.subr.mxu0 0.0
        %3124 = vmatpush1.msra.mxu0 0.0
        %3125 = vmatprep.subr.mxu0 0.0
        %3126 = vmatpush1.msra.mxu0 0.0
        %3127 = vmatprep.subr.mxu0 0.0
        %3128 = vmatpush1.msra.mxu0 0.0
        %3129 = vmatprep.subr.mxu0 0.0
        %3130 = vmatpush1.msra.mxu0 0.0
        %3131 = vmatprep.subr.mxu0 0.0
        %3132 = vmatpush1.msra.mxu0 0.0
        %3133 = vmatprep.subr.mxu0 0.0
        %3134 = vmatpush1.msra.mxu0 0.0
        %3135 = vmatprep.subr.mxu0 0.0
        %3136 = vmatpush1.msra.mxu0 0.0
        %3137 = vmatprep.subr.mxu0 0.0
        %3138 = vmatpush1.msra.mxu0 0.0
        %3139 = vmatprep.subr.mxu0 0.0
        %3140 = vmatpush1.msra.mxu0 0.0
        %3141 = vmatprep.mubr.f32.mxu0 0.0
        %3142 = vmatmul.mubr.f32.gmra.mrb[0].mxu0 %v2707
        %v3143 = vpop.f32.mrb[0].mxu0
        %v3144 = vadd.f32 0.0, %v3143
        %v3145 = vpop.f32.mrb[0].mxu0
        %v3146 = vadd.f32 0.0, %v3145
        %3147 = vmatprep.mubr.f32.mxu0 0.0
        %3148 = vmatmul.mubr.f32.gmra.mrb[0].mxu0 %v2710
        %v3149 = vpop.f32.mrb[0].mxu0
        %v3150 = vadd.f32 0.0, %v3149
        %v3151 = vpop.f32.mrb[0].mxu0
        %v3152 = vadd.f32 0.0, %v3151
        %3153 = vmatprep.mubr.f32.mxu0 0.0
        %3154 = vmatmul.mubr.f32.gmra.mrb[0].mxu0 %v2713
        %v3155 = vpop.f32.mrb[0].mxu0
        %v3156 = vadd.f32 0.0, %v3155
        %v3157 = vpop.f32.mrb[0].mxu0
        %v3158 = vadd.f32 0.0, %v3157
        %3159 = vmatprep.mubr.f32.mxu0 0.0
        %3160 = vmatmul.mubr.f32.gmra.mrb[0].mxu0 %v2716
        %v3161 = vpop.f32.mrb[0].mxu0
        %v3162 = vadd.f32 0.0, %v3161
        %v3163 = vpop.f32.mrb[0].mxu0
        %v3164 = vadd.f32 0.0, %v3163
        %3165 = vdwg.mxu0
        %v3166 = vmul.f32 %v3055, %v2239
        %v3167 = vmul.f32 %v3057, %v2241
        %v3168 = vmul.f32 %v3144, %v2452
        %v3169 = vmul.f32 %v3146, %v2454
        %v3170 = vmul.f32 %v3061, %v2243
        %v3171 = vmul.f32 %v3063, %v2245
        %v3172 = vmul.f32 %v3150, %v2456
        %v3173 = vmul.f32 %v3152, %v2458
        %v3174 = vmul.f32 %v3067, %v2249
        %v3175 = vmul.f32 %v3069, %v2251
        %v3176 = vmul.f32 %v3156, %v2462
        %v3177 = vmul.f32 %v3158, %v2464
        %v3178 = vmul.f32 %v3073, %v2253
        %v3179 = vmul.f32 %v3075, %v2255
        %v3180 = vmul.f32 %v3162, %v2466
        %v3181 = vmul.f32 %v3164, %v2468
        %v3182 = vadd.f32 %v2924, %v3166
        %v3183 = vadd.f32 %v2925, %v3167
        %v3184 = vadd.f32 %v2926, %v3168
        %v3185 = vadd.f32 %v2927, %v3169
        %v3186 = vadd.f32 %v2928, %v3170
        %v3187 = vadd.f32 %v2929, %v3171
        %v3188 = vadd.f32 %v2930, %v3172
        %v3189 = vadd.f32 %v2931, %v3173
        %v3190 = vadd.f32 %v2932, %v3174
        %v3191 = vadd.f32 %v2933, %v3175
        %v3192 = vadd.f32 %v2934, %v3176
        %v3193 = vadd.f32 %v2935, %v3177
        %v3194 = vadd.f32 %v2936, %v3178
        %v3195 = vadd.f32 %v2937, %v3179
        %v3196 = vadd.f32 %v2938, %v3180
        %v3197 = vadd.f32 %v2939, %v3181
        %v3198 = vsub.f32 %v2383, %v2682
        %v3199 = vsub.f32 %v2385, %v2683
        %v3200 = vsub.f32 %v2596, %v2684
        %v3201 = vsub.f32 %v2598, %v2685
        %v3202 = vmul.f32 %v3198, 1.442695
        %v3203 = vpow.pop %v3202
        %v3204 = vmul.f32 %v3199, 1.442695
        %v3205 = vpow.pop %v3204
        %v3206 = vmul.f32 %v3200, 1.442695
        %v3207 = vpow.pop %v3206
        %v3208 = vmul.f32 %v3201, 1.442695
        %v3209 = vpow.pop %v3208
        %v3210 = vadd.f32 %v2976, %v3203
        %v3211 = vadd.f32 %v2977, %v3205
        %v3212 = vadd.f32 %v2978, %v3207
        %v3213 = vadd.f32 %v2979, %v3209
        %v3215 = vsel %vm725, %v3203, 0
        %v3218 = vsel %vm725, %v3205, 0
        %v3221 = vsel %vm725, %v3207, 0
        %v3224 = vsel %vm725, %v3209, 0
        %3226 = vmatprep.subr.mxu0 %v3218
        %3227 = vmatpush1.msra.mxu0 %v3215
        %3228 = vmatprep.subr.mxu0 0.0
        %3229 = vmatpush1.msra.mxu0 0.0
        %3230 = vmatprep.subr.mxu0 0.0
        %3231 = vmatpush1.msra.mxu0 0.0
        %3232 = vmatprep.subr.mxu0 0.0
        %3233 = vmatpush1.msra.mxu0 0.0
        %3234 = vmatprep.subr.mxu0 0.0
        %3235 = vmatpush1.msra.mxu0 0.0
        %3236 = vmatprep.subr.mxu0 0.0
        %3237 = vmatpush1.msra.mxu0 0.0
        %3238 = vmatprep.subr.mxu0 0.0
        %3239 = vmatpush1.msra.mxu0 0.0
        %3240 = vmatprep.subr.mxu0 0.0
        %3241 = vmatpush1.msra.mxu0 0.0
        %3242 = vmatprep.subr.mxu0 0.0
        %3243 = vmatpush1.msra.mxu0 0.0
        %3244 = vmatprep.subr.mxu0 0.0
        %3245 = vmatpush1.msra.mxu0 0.0
        %3246 = vmatprep.subr.mxu0 0.0
        %3247 = vmatpush1.msra.mxu0 0.0
        %3248 = vmatprep.subr.mxu0 0.0
        %3249 = vmatpush1.msra.mxu0 0.0
        %3250 = vmatprep.subr.mxu0 0.0
        %3251 = vmatpush1.msra.mxu0 0.0
        %3252 = vmatprep.subr.mxu0 0.0
        %3253 = vmatpush1.msra.mxu0 0.0
        %3254 = vmatprep.subr.mxu0 0.0
        %3255 = vmatpush1.msra.mxu0 0.0
        %3256 = vmatprep.subr.mxu0 0.0
        %3257 = vmatpush1.msra.mxu0 0.0
        %3258 = vmatprep.subr.mxu0 0.0
        %3259 = vmatpush1.msra.mxu0 0.0
        %3260 = vmatprep.subr.mxu0 0.0
        %3261 = vmatpush1.msra.mxu0 0.0
        %3262 = vmatprep.subr.mxu0 0.0
        %3263 = vmatpush1.msra.mxu0 0.0
        %3264 = vmatprep.subr.mxu0 0.0
        %3265 = vmatpush1.msra.mxu0 0.0
        %3266 = vmatprep.subr.mxu0 0.0
        %3267 = vmatpush1.msra.mxu0 0.0
        %3268 = vmatprep.subr.mxu0 0.0
        %3269 = vmatpush1.msra.mxu0 0.0
        %3270 = vmatprep.subr.mxu0 0.0
        %3271 = vmatpush1.msra.mxu0 0.0
        %3272 = vmatprep.subr.mxu0 0.0
        %3273 = vmatpush1.msra.mxu0 0.0
        %3274 = vmatprep.subr.mxu0 0.0
        %3275 = vmatpush1.msra.mxu0 0.0
        %3276 = vmatprep.subr.mxu0 0.0
        %3277 = vmatpush1.msra.mxu0 0.0
        %3278 = vmatprep.subr.mxu0 0.0
        %3279 = vmatpush1.msra.mxu0 0.0
        %3280 = vmatprep.subr.mxu0 0.0
        %3281 = vmatpush1.msra.mxu0 0.0
        %3282 = vmatprep.subr.mxu0 0.0
        %3283 = vmatpush1.msra.mxu0 0.0
        %3284 = vmatprep.subr.mxu0 0.0
        %3285 = vmatpush1.msra.mxu0 0.0
        %3286 = vmatprep.subr.mxu0 0.0
        %3287 = vmatpush1.msra.mxu0 0.0
        %3288 = vmatprep.subr.mxu0 0.0
        %3289 = vmatpush1.msra.mxu0 0.0
        %3290 = vmatprep.mubr.f32.mxu0 0.0
        %3291 = vmatmul.mubr.f32.gmra.mrb[0].mxu0 %v2707
        %v3292 = vpop.f32.mrb[0].mxu0
        %v3293 = vadd.f32 0.0, %v3292
        %v3294 = vpop.f32.mrb[0].mxu0
        %v3295 = vadd.f32 0.0, %v3294
        %3296 = vmatprep.mubr.f32.mxu0 0.0
        %3297 = vmatmul.mubr.f32.gmra.mrb[0].mxu0 %v2710
        %v3298 = vpop.f32.mrb[0].mxu0
        %v3299 = vadd.f32 0.0, %v3298
        %v3300 = vpop.f32.mrb[0].mxu0
        %v3301 = vadd.f32 0.0, %v3300
        %3302 = vmatprep.mubr.f32.mxu0 0.0
        %3303 = vmatmul.mubr.f32.gmra.mrb[0].mxu0 %v2713
        %v3304 = vpop.f32.mrb[0].mxu0
        %v3305 = vadd.f32 0.0, %v3304
        %v3306 = vpop.f32.mrb[0].mxu0
        %v3307 = vadd.f32 0.0, %v3306
        %3308 = vmatprep.mubr.f32.mxu0 0.0
        %3309 = vmatmul.mubr.f32.gmra.mrb[0].mxu0 %v2716
        %v3310 = vpop.f32.mrb[0].mxu0
        %v3311 = vadd.f32 0.0, %v3310
        %v3312 = vpop.f32.mrb[0].mxu0
        %v3313 = vadd.f32 0.0, %v3312
        %3314 = vdwg.mxu0
        %3315 = vmatprep.subr.mxu0 %v3224
        %3316 = vmatpush1.msra.mxu0 %v3221
        %3317 = vmatprep.subr.mxu0 0.0
        %3318 = vmatpush1.msra.mxu0 0.0
        %3319 = vmatprep.subr.mxu0 0.0
        %3320 = vmatpush1.msra.mxu0 0.0
        %3321 = vmatprep.subr.mxu0 0.0
        %3322 = vmatpush1.msra.mxu0 0.0
        %3323 = vmatprep.subr.mxu0 0.0
        %3324 = vmatpush1.msra.mxu0 0.0
        %3325 = vmatprep.subr.mxu0 0.0
        %3326 = vmatpush1.msra.mxu0 0.0
        %3327 = vmatprep.subr.mxu0 0.0
        %3328 = vmatpush1.msra.mxu0 0.0
        %3329 = vmatprep.subr.mxu0 0.0
        %3330 = vmatpush1.msra.mxu0 0.0
        %3331 = vmatprep.subr.mxu0 0.0
        %3332 = vmatpush1.msra.mxu0 0.0
        %3333 = vmatprep.subr.mxu0 0.0
        %3334 = vmatpush1.msra.mxu0 0.0
        %3335 = vmatprep.subr.mxu0 0.0
        %3336 = vmatpush1.msra.mxu0 0.0
        %3337 = vmatprep.subr.mxu0 0.0
        %3338 = vmatpush1.msra.mxu0 0.0
        %3339 = vmatprep.subr.mxu0 0.0
        %3340 = vmatpush1.msra.mxu0 0.0
        %3341 = vmatprep.subr.mxu0 0.0
        %3342 = vmatpush1.msra.mxu0 0.0
        %3343 = vmatprep.subr.mxu0 0.0
        %3344 = vmatpush1.msra.mxu0 0.0
        %3345 = vmatprep.subr.mxu0 0.0
        %3346 = vmatpush1.msra.mxu0 0.0
        %3347 = vmatprep.subr.mxu0 0.0
        %3348 = vmatpush1.msra.mxu0 0.0
        %3349 = vmatprep.subr.mxu0 0.0
        %3350 = vmatpush1.msra.mxu0 0.0
        %3351 = vmatprep.subr.mxu0 0.0
        %3352 = vmatpush1.msra.mxu0 0.0
        %3353 = vmatprep.subr.mxu0 0.0
        %3354 = vmatpush1.msra.mxu0 0.0
        %3355 = vmatprep.subr.mxu0 0.0
        %3356 = vmatpush1.msra.mxu0 0.0
        %3357 = vmatprep.subr.mxu0 0.0
        %3358 = vmatpush1.msra.mxu0 0.0
        %3359 = vmatprep.subr.mxu0 0.0
        %3360 = vmatpush1.msra.mxu0 0.0
        %3361 = vmatprep.subr.mxu0 0.0
        %3362 = vmatpush1.msra.mxu0 0.0
        %3363 = vmatprep.subr.mxu0 0.0
        %3364 = vmatpush1.msra.mxu0 0.0
        %3365 = vmatprep.subr.mxu0 0.0
        %3366 = vmatpush1.msra.mxu0 0.0
        %3367 = vmatprep.subr.mxu0 0.0
        %3368 = vmatpush1.msra.mxu0 0.0
        %3369 = vmatprep.subr.mxu0 0.0
        %3370 = vmatpush1.msra.mxu0 0.0
        %3371 = vmatprep.subr.mxu0 0.0
        %3372 = vmatpush1.msra.mxu0 0.0
        %3373 = vmatprep.subr.mxu0 0.0
        %3374 = vmatpush1.msra.mxu0 0.0
        %3375 = vmatprep.subr.mxu0 0.0
        %3376 = vmatpush1.msra.mxu0 0.0
        %3377 = vmatprep.subr.mxu0 0.0
        %3378 = vmatpush1.msra.mxu0 0.0
        %3379 = vmatprep.mubr.f32.mxu0 0.0
        %3380 = vmatmul.mubr.f32.gmra.mrb[0].mxu0 %v2707
        %v3381 = vpop.f32.mrb[0].mxu0
        %v3382 = vadd.f32 0.0, %v3381
        %v3383 = vpop.f32.mrb[0].mxu0
        %v3384 = vadd.f32 0.0, %v3383
        %3385 = vmatprep.mubr.f32.mxu0 0.0
        %3386 = vmatmul.mubr.f32.gmra.mrb[0].mxu0 %v2710
        %v3387 = vpop.f32.mrb[0].mxu0
        %v3388 = vadd.f32 0.0, %v3387
        %v3389 = vpop.f32.mrb[0].mxu0
        %v3390 = vadd.f32 0.0, %v3389
        %3391 = vmatprep.mubr.f32.mxu0 0.0
        %3392 = vmatmul.mubr.f32.gmra.mrb[0].mxu0 %v2713
        %v3393 = vpop.f32.mrb[0].mxu0
        %v3394 = vadd.f32 0.0, %v3393
        %v3395 = vpop.f32.mrb[0].mxu0
        %v3396 = vadd.f32 0.0, %v3395
        %3397 = vmatprep.mubr.f32.mxu0 0.0
        %3398 = vmatmul.mubr.f32.gmra.mrb[0].mxu0 %v2716
        %v3399 = vpop.f32.mrb[0].mxu0
        %v3400 = vadd.f32 0.0, %v3399
        %v3401 = vpop.f32.mrb[0].mxu0
        %v3402 = vadd.f32 0.0, %v3401
        %3403 = vdwg.mxu0
        %v3404 = vmul.f32 %v3293, %v2259
        %v3405 = vmul.f32 %v3295, %v2261
        %v3406 = vmul.f32 %v3382, %v2472
        %v3407 = vmul.f32 %v3384, %v2474
        %v3408 = vmul.f32 %v3299, %v2263
        %v3409 = vmul.f32 %v3301, %v2265
        %v3410 = vmul.f32 %v3388, %v2476
        %v3411 = vmul.f32 %v3390, %v2478
        %v3412 = vmul.f32 %v3305, %v2269
        %v3413 = vmul.f32 %v3307, %v2271
        %v3414 = vmul.f32 %v3394, %v2482
        %v3415 = vmul.f32 %v3396, %v2484
        %v3416 = vmul.f32 %v3311, %v2273
        %v3417 = vmul.f32 %v3313, %v2275
        %v3418 = vmul.f32 %v3400, %v2486
        %v3419 = vmul.f32 %v3402, %v2488
        %v3420 = vadd.f32 %v3182, %v3404
        %v3421 = vadd.f32 %v3183, %v3405
        %v3422 = vadd.f32 %v3184, %v3406
        %v3423 = vadd.f32 %v3185, %v3407
        %v3424 = vadd.f32 %v3186, %v3408
        %v3425 = vadd.f32 %v3187, %v3409
        %v3426 = vadd.f32 %v3188, %v3410
        %v3427 = vadd.f32 %v3189, %v3411
        %v3428 = vadd.f32 %v3190, %v3412
        %v3429 = vadd.f32 %v3191, %v3413
        %v3430 = vadd.f32 %v3192, %v3414
        %v3431 = vadd.f32 %v3193, %v3415
        %v3432 = vadd.f32 %v3194, %v3416
        %v3433 = vadd.f32 %v3195, %v3417
        %v3434 = vadd.f32 %v3196, %v3418
        %v3435 = vadd.f32 %v3197, %v3419
        %v3436 = vsub.f32 %v2383, %v2944
        %v3437 = vsub.f32 %v2385, %v2945
        %v3438 = vsub.f32 %v2596, %v2946
        %v3439 = vsub.f32 %v2598, %v2947
        %v3440 = vmul.f32 %v3436, 1.442695
        %v3441 = vpow.pop %v3440
        %v3442 = vmul.f32 %v3437, 1.442695
        %v3443 = vpow.pop %v3442
        %v3444 = vmul.f32 %v3438, 1.442695
        %v3445 = vpow.pop %v3444
        %v3446 = vmul.f32 %v3439, 1.442695
        %v3447 = vpow.pop %v3446
        %v3452 = vrot.slane %v3441, 4
        %v3453 = vrot.slane %v3443, 4
        %v3454 = vrot.slane %v3445, 4
        %v3455 = vrot.slane %v3447, 4
        %v3460 = vadd.f32 %v3210, %v3452
        %v3461 = vadd.f32 %v3211, %v3453
        %v3462 = vadd.f32 %v3212, %v3454
        %v3463 = vadd.f32 %v3213, %v3455
        %v3464 = vsel %vm725, %v3452, 0
        %v3466 = vsel %vm725, %v3453, 0
        %v3468 = vsel %vm725, %v3454, 0
        %v3470 = vsel %vm725, %v3455, 0
        %3472 = vmatprep.subr.mxu0 %v3466
        %3473 = vmatpush1.msra.mxu0 %v3464
        %3474 = vmatprep.subr.mxu0 0.0
        %3475 = vmatpush1.msra.mxu0 0.0
        %3476 = vmatprep.subr.mxu0 0.0
        %3477 = vmatpush1.msra.mxu0 0.0
        %3478 = vmatprep.subr.mxu0 0.0
        %3479 = vmatpush1.msra.mxu0 0.0
        %3480 = vmatprep.subr.mxu0 0.0
        %3481 = vmatpush1.msra.mxu0 0.0
        %3482 = vmatprep.subr.mxu0 0.0
        %3483 = vmatpush1.msra.mxu0 0.0
        %3484 = vmatprep.subr.mxu0 0.0
        %3485 = vmatpush1.msra.mxu0 0.0
        %3486 = vmatprep.subr.mxu0 0.0
        %3487 = vmatpush1.msra.mxu0 0.0
        %3488 = vmatprep.subr.mxu0 0.0
        %3489 = vmatpush1.msra.mxu0 0.0
        %3490 = vmatprep.subr.mxu0 0.0
        %3491 = vmatpush1.msra.mxu0 0.0
        %3492 = vmatprep.subr.mxu0 0.0
        %3493 = vmatpush1.msra.mxu0 0.0
        %3494 = vmatprep.subr.mxu0 0.0
        %3495 = vmatpush1.msra.mxu0 0.0
        %3496 = vmatprep.subr.mxu0 0.0
        %3497 = vmatpush1.msra.mxu0 0.0
        %3498 = vmatprep.subr.mxu0 0.0
        %3499 = vmatpush1.msra.mxu0 0.0
        %3500 = vmatprep.subr.mxu0 0.0
        %3501 = vmatpush1.msra.mxu0 0.0
        %3502 = vmatprep.subr.mxu0 0.0
        %3503 = vmatpush1.msra.mxu0 0.0
        %3504 = vmatprep.subr.mxu0 0.0
        %3505 = vmatpush1.msra.mxu0 0.0
        %3506 = vmatprep.subr.mxu0 0.0
        %3507 = vmatpush1.msra.mxu0 0.0
        %3508 = vmatprep.subr.mxu0 0.0
        %3509 = vmatpush1.msra.mxu0 0.0
        %3510 = vmatprep.subr.mxu0 0.0
        %3511 = vmatpush1.msra.mxu0 0.0
        %3512 = vmatprep.subr.mxu0 0.0
        %3513 = vmatpush1.msra.mxu0 0.0
        %3514 = vmatprep.subr.mxu0 0.0
        %3515 = vmatpush1.msra.mxu0 0.0
        %3516 = vmatprep.subr.mxu0 0.0
        %3517 = vmatpush1.msra.mxu0 0.0
        %3518 = vmatprep.subr.mxu0 0.0
        %3519 = vmatpush1.msra.mxu0 0.0
        %3520 = vmatprep.subr.mxu0 0.0
        %3521 = vmatpush1.msra.mxu0 0.0
        %3522 = vmatprep.subr.mxu0 0.0
        %3523 = vmatpush1.msra.mxu0 0.0
        %3524 = vmatprep.subr.mxu0 0.0
        %3525 = vmatpush1.msra.mxu0 0.0
        %3526 = vmatprep.subr.mxu0 0.0
        %3527 = vmatpush1.msra.mxu0 0.0
        %3528 = vmatprep.subr.mxu0 0.0
        %3529 = vmatpush1.msra.mxu0 0.0
        %3530 = vmatprep.subr.mxu0 0.0
        %3531 = vmatpush1.msra.mxu0 0.0
        %3532 = vmatprep.subr.mxu0 0.0
        %3533 = vmatpush1.msra.mxu0 0.0
        %3534 = vmatprep.subr.mxu0 0.0
        %3535 = vmatpush1.msra.mxu0 0.0
        %3536 = vmatprep.mubr.f32.mxu0 0.0
        %3537 = vmatmul.mubr.f32.gmra.mrb[0].mxu0 %v2707
        %v3538 = vpop.f32.mrb[0].mxu0
        %v3539 = vadd.f32 0.0, %v3538
        %v3540 = vpop.f32.mrb[0].mxu0
        %v3541 = vadd.f32 0.0, %v3540
        %3542 = vmatprep.mubr.f32.mxu0 0.0
        %3543 = vmatmul.mubr.f32.gmra.mrb[0].mxu0 %v2710
        %v3544 = vpop.f32.mrb[0].mxu0
        %v3545 = vadd.f32 0.0, %v3544
        %v3546 = vpop.f32.mrb[0].mxu0
        %v3547 = vadd.f32 0.0, %v3546
        %3548 = vmatprep.mubr.f32.mxu0 0.0
        %3549 = vmatmul.mubr.f32.gmra.mrb[0].mxu0 %v2713
        %v3550 = vpop.f32.mrb[0].mxu0
        %v3551 = vadd.f32 0.0, %v3550
        %v3552 = vpop.f32.mrb[0].mxu0
        %v3553 = vadd.f32 0.0, %v3552
        %3554 = vmatprep.mubr.f32.mxu0 0.0
        %3555 = vmatmul.mubr.f32.gmra.mrb[0].mxu0 %v2716
        %v3556 = vpop.f32.mrb[0].mxu0
        %v3557 = vadd.f32 0.0, %v3556
        %v3558 = vpop.f32.mrb[0].mxu0
        %v3559 = vadd.f32 0.0, %v3558
        %3560 = vdwg.mxu0
        %3561 = vmatprep.subr.mxu0 %v3470
        %3562 = vmatpush1.msra.mxu0 %v3468
        %3563 = vmatprep.subr.mxu0 0.0
        %3564 = vmatpush1.msra.mxu0 0.0
        %3565 = vmatprep.subr.mxu0 0.0
        %3566 = vmatpush1.msra.mxu0 0.0
        %3567 = vmatprep.subr.mxu0 0.0
        %3568 = vmatpush1.msra.mxu0 0.0
        %3569 = vmatprep.subr.mxu0 0.0
        %3570 = vmatpush1.msra.mxu0 0.0
        %3571 = vmatprep.subr.mxu0 0.0
        %3572 = vmatpush1.msra.mxu0 0.0
        %3573 = vmatprep.subr.mxu0 0.0
        %3574 = vmatpush1.msra.mxu0 0.0
        %3575 = vmatprep.subr.mxu0 0.0
        %3576 = vmatpush1.msra.mxu0 0.0
        %3577 = vmatprep.subr.mxu0 0.0
        %3578 = vmatpush1.msra.mxu0 0.0
        %3579 = vmatprep.subr.mxu0 0.0
        %3580 = vmatpush1.msra.mxu0 0.0
        %3581 = vmatprep.subr.mxu0 0.0
        %3582 = vmatpush1.msra.mxu0 0.0
        %3583 = vmatprep.subr.mxu0 0.0
        %3584 = vmatpush1.msra.mxu0 0.0
        %3585 = vmatprep.subr.mxu0 0.0
        %3586 = vmatpush1.msra.mxu0 0.0
        %3587 = vmatprep.subr.mxu0 0.0
        %3588 = vmatpush1.msra.mxu0 0.0
        %3589 = vmatprep.subr.mxu0 0.0
        %3590 = vmatpush1.msra.mxu0 0.0
        %3591 = vmatprep.subr.mxu0 0.0
        %3592 = vmatpush1.msra.mxu0 0.0
        %3593 = vmatprep.subr.mxu0 0.0
        %3594 = vmatpush1.msra.mxu0 0.0
        %3595 = vmatprep.subr.mxu0 0.0
        %3596 = vmatpush1.msra.mxu0 0.0
        %3597 = vmatprep.subr.mxu0 0.0
        %3598 = vmatpush1.msra.mxu0 0.0
        %3599 = vmatprep.subr.mxu0 0.0
        %3600 = vmatpush1.msra.mxu0 0.0
        %3601 = vmatprep.subr.mxu0 0.0
        %3602 = vmatpush1.msra.mxu0 0.0
        %3603 = vmatprep.subr.mxu0 0.0
        %3604 = vmatpush1.msra.mxu0 0.0
        %3605 = vmatprep.subr.mxu0 0.0
        %3606 = vmatpush1.msra.mxu0 0.0
        %3607 = vmatprep.subr.mxu0 0.0
        %3608 = vmatpush1.msra.mxu0 0.0
        %3609 = vmatprep.subr.mxu0 0.0
        %3610 = vmatpush1.msra.mxu0 0.0
        %3611 = vmatprep.subr.mxu0 0.0
        %3612 = vmatpush1.msra.mxu0 0.0
        %3613 = vmatprep.subr.mxu0 0.0
        %3614 = vmatpush1.msra.mxu0 0.0
        %3615 = vmatprep.subr.mxu0 0.0
        %3616 = vmatpush1.msra.mxu0 0.0
        %3617 = vmatprep.subr.mxu0 0.0
        %3618 = vmatpush1.msra.mxu0 0.0
        %3619 = vmatprep.subr.mxu0 0.0
        %3620 = vmatpush1.msra.mxu0 0.0
        %3621 = vmatprep.subr.mxu0 0.0
        %3622 = vmatpush1.msra.mxu0 0.0
        %3623 = vmatprep.subr.mxu0 0.0
        %3624 = vmatpush1.msra.mxu0 0.0
        %3625 = vmatprep.mubr.f32.mxu0 0.0
        %3626 = vmatmul.mubr.f32.gmra.mrb[0].mxu0 %v2707
        %v3627 = vpop.f32.mrb[0].mxu0
        %v3628 = vadd.f32 0.0, %v3627
        %v3629 = vpop.f32.mrb[0].mxu0
        %v3630 = vadd.f32 0.0, %v3629
        %3631 = vmatprep.mubr.f32.mxu0 0.0
        %3632 = vmatmul.mubr.f32.gmra.mrb[0].mxu0 %v2710
        %v3633 = vpop.f32.mrb[0].mxu0
        %v3634 = vadd.f32 0.0, %v3633
        %v3635 = vpop.f32.mrb[0].mxu0
        %v3636 = vadd.f32 0.0, %v3635
        %3637 = vmatprep.mubr.f32.mxu0 0.0
        %3638 = vmatmul.mubr.f32.gmra.mrb[0].mxu0 %v2713
        %v3639 = vpop.f32.mrb[0].mxu0
        %v3640 = vadd.f32 0.0, %v3639
        %v3641 = vpop.f32.mrb[0].mxu0
        %v3642 = vadd.f32 0.0, %v3641
        %3643 = vmatprep.mubr.f32.mxu0 0.0
        %3644 = vmatmul.mubr.f32.gmra.mrb[0].mxu0 %v2716
        %v3645 = vpop.f32.mrb[0].mxu0
        %v3646 = vadd.f32 0.0, %v3645
        %v3647 = vpop.f32.mrb[0].mxu0
        %v3648 = vadd.f32 0.0, %v3647
        %3649 = vdwg.mxu0
        %v3650 = vmul.f32 %v3539, %v2279
        %v3651 = vmul.f32 %v3541, %v2281
        %v3652 = vmul.f32 %v3628, %v2492
        %v3653 = vmul.f32 %v3630, %v2494
        %v3654 = vmul.f32 %v3545, %v2283
        %v3655 = vmul.f32 %v3547, %v2285
        %v3656 = vmul.f32 %v3634, %v2496
        %v3657 = vmul.f32 %v3636, %v2498
        %v3658 = vmul.f32 %v3551, %v2289
        %v3659 = vmul.f32 %v3553, %v2291
        %v3660 = vmul.f32 %v3640, %v2502
        %v3661 = vmul.f32 %v3642, %v2504
        %v3662 = vmul.f32 %v3557, %v2293
        %v3663 = vmul.f32 %v3559, %v2295
        %v3664 = vmul.f32 %v3646, %v2506
        %v3665 = vmul.f32 %v3648, %v2508
        %v3666 = vadd.f32 %v3420, %v3650
        %v3667 = vadd.f32 %v3421, %v3651
        %v3668 = vadd.f32 %v3422, %v3652
        %v3669 = vadd.f32 %v3423, %v3653
        %v3670 = vadd.f32 %v3424, %v3654
        %v3671 = vadd.f32 %v3425, %v3655
        %v3672 = vadd.f32 %v3426, %v3656
        %v3673 = vadd.f32 %v3427, %v3657
        %v3674 = vadd.f32 %v3428, %v3658
        %v3675 = vadd.f32 %v3429, %v3659
        %v3676 = vadd.f32 %v3430, %v3660
        %v3677 = vadd.f32 %v3431, %v3661
        %v3678 = vadd.f32 %v3432, %v3662
        %v3679 = vadd.f32 %v3433, %v3663
        %v3680 = vadd.f32 %v3434, %v3664
        %v3681 = vadd.f32 %v3435, %v3665
        %v3682 = vsub.f32 %v2389, %v2682
        %v3683 = vsub.f32 %v2391, %v2683
        %v3684 = vsub.f32 %v2602, %v2684
        %v3685 = vsub.f32 %v2604, %v2685
        %v3686 = vmul.f32 %v3682, 1.442695
        %v3687 = vpow.pop %v3686
        %v3688 = vmul.f32 %v3683, 1.442695
        %v3689 = vpow.pop %v3688
        %v3690 = vmul.f32 %v3684, 1.442695
        %v3691 = vpow.pop %v3690
        %v3692 = vmul.f32 %v3685, 1.442695
        %v3693 = vpow.pop %v3692
        %v3694 = vadd.f32 %v3460, %v3687
        %v3695 = vadd.f32 %v3461, %v3689
        %v3696 = vadd.f32 %v3462, %v3691
        %v3697 = vadd.f32 %v3463, %v3693
        %v3699 = vsel %vm725, %v3687, 0
        %v3702 = vsel %vm725, %v3689, 0
        %v3705 = vsel %vm725, %v3691, 0
        %v3708 = vsel %vm725, %v3693, 0
        %3710 = vmatprep.subr.mxu0 %v3702
        %3711 = vmatpush1.msra.mxu0 %v3699
        %3712 = vmatprep.subr.mxu0 0.0
        %3713 = vmatpush1.msra.mxu0 0.0
        %3714 = vmatprep.subr.mxu0 0.0
        %3715 = vmatpush1.msra.mxu0 0.0
        %3716 = vmatprep.subr.mxu0 0.0
        %3717 = vmatpush1.msra.mxu0 0.0
        %3718 = vmatprep.subr.mxu0 0.0
        %3719 = vmatpush1.msra.mxu0 0.0
        %3720 = vmatprep.subr.mxu0 0.0
        %3721 = vmatpush1.msra.mxu0 0.0
        %3722 = vmatprep.subr.mxu0 0.0
        %3723 = vmatpush1.msra.mxu0 0.0
        %3724 = vmatprep.subr.mxu0 0.0
        %3725 = vmatpush1.msra.mxu0 0.0
        %3726 = vmatprep.subr.mxu0 0.0
        %3727 = vmatpush1.msra.mxu0 0.0
        %3728 = vmatprep.subr.mxu0 0.0
        %3729 = vmatpush1.msra.mxu0 0.0
        %3730 = vmatprep.subr.mxu0 0.0
        %3731 = vmatpush1.msra.mxu0 0.0
        %3732 = vmatprep.subr.mxu0 0.0
        %3733 = vmatpush1.msra.mxu0 0.0
        %3734 = vmatprep.subr.mxu0 0.0
        %3735 = vmatpush1.msra.mxu0 0.0
        %3736 = vmatprep.subr.mxu0 0.0
        %3737 = vmatpush1.msra.mxu0 0.0
        %3738 = vmatprep.subr.mxu0 0.0
        %3739 = vmatpush1.msra.mxu0 0.0
        %3740 = vmatprep.subr.mxu0 0.0
        %3741 = vmatpush1.msra.mxu0 0.0
        %3742 = vmatprep.subr.mxu0 0.0
        %3743 = vmatpush1.msra.mxu0 0.0
        %3744 = vmatprep.subr.mxu0 0.0
        %3745 = vmatpush1.msra.mxu0 0.0
        %3746 = vmatprep.subr.mxu0 0.0
        %3747 = vmatpush1.msra.mxu0 0.0
        %3748 = vmatprep.subr.mxu0 0.0
        %3749 = vmatpush1.msra.mxu0 0.0
        %3750 = vmatprep.subr.mxu0 0.0
        %3751 = vmatpush1.msra.mxu0 0.0
        %3752 = vmatprep.subr.mxu0 0.0
        %3753 = vmatpush1.msra.mxu0 0.0
        %3754 = vmatprep.subr.mxu0 0.0
        %3755 = vmatpush1.msra.mxu0 0.0
        %3756 = vmatprep.subr.mxu0 0.0
        %3757 = vmatpush1.msra.mxu0 0.0
        %3758 = vmatprep.subr.mxu0 0.0
        %3759 = vmatpush1.msra.mxu0 0.0
        %3760 = vmatprep.subr.mxu0 0.0
        %3761 = vmatpush1.msra.mxu0 0.0
        %3762 = vmatprep.subr.mxu0 0.0
        %3763 = vmatpush1.msra.mxu0 0.0
        %3764 = vmatprep.subr.mxu0 0.0
        %3765 = vmatpush1.msra.mxu0 0.0
        %3766 = vmatprep.subr.mxu0 0.0
        %3767 = vmatpush1.msra.mxu0 0.0
        %3768 = vmatprep.subr.mxu0 0.0
        %3769 = vmatpush1.msra.mxu0 0.0
        %3770 = vmatprep.subr.mxu0 0.0
        %3771 = vmatpush1.msra.mxu0 0.0
        %3772 = vmatprep.subr.mxu0 0.0
        %3773 = vmatpush1.msra.mxu0 0.0
        %3774 = vmatprep.mubr.f32.mxu0 0.0
        %3775 = vmatmul.mubr.f32.gmra.mrb[0].mxu0 %v2707
        %v3776 = vpop.f32.mrb[0].mxu0
        %v3777 = vadd.f32 0.0, %v3776
        %v3778 = vpop.f32.mrb[0].mxu0
        %v3779 = vadd.f32 0.0, %v3778
        %3780 = vmatprep.mubr.f32.mxu0 0.0
        %3781 = vmatmul.mubr.f32.gmra.mrb[0].mxu0 %v2710
        %v3782 = vpop.f32.mrb[0].mxu0
        %v3783 = vadd.f32 0.0, %v3782
        %v3784 = vpop.f32.mrb[0].mxu0
        %v3785 = vadd.f32 0.0, %v3784
        %3786 = vmatprep.mubr.f32.mxu0 0.0
        %3787 = vmatmul.mubr.f32.gmra.mrb[0].mxu0 %v2713
        %v3788 = vpop.f32.mrb[0].mxu0
        %v3789 = vadd.f32 0.0, %v3788
        %v3790 = vpop.f32.mrb[0].mxu0
        %v3791 = vadd.f32 0.0, %v3790
        %3792 = vmatprep.mubr.f32.mxu0 0.0
        %3793 = vmatmul.mubr.f32.gmra.mrb[0].mxu0 %v2716
        %v3794 = vpop.f32.mrb[0].mxu0
        %v3795 = vadd.f32 0.0, %v3794
        %v3796 = vpop.f32.mrb[0].mxu0
        %v3797 = vadd.f32 0.0, %v3796
        %3798 = vdwg.mxu0
        %3799 = vmatprep.subr.mxu0 %v3708
        %3800 = vmatpush1.msra.mxu0 %v3705
        %3801 = vmatprep.subr.mxu0 0.0
        %3802 = vmatpush1.msra.mxu0 0.0
        %3803 = vmatprep.subr.mxu0 0.0
        %3804 = vmatpush1.msra.mxu0 0.0
        %3805 = vmatprep.subr.mxu0 0.0
        %3806 = vmatpush1.msra.mxu0 0.0
        %3807 = vmatprep.subr.mxu0 0.0
        %3808 = vmatpush1.msra.mxu0 0.0
        %3809 = vmatprep.subr.mxu0 0.0
        %3810 = vmatpush1.msra.mxu0 0.0
        %3811 = vmatprep.subr.mxu0 0.0
        %3812 = vmatpush1.msra.mxu0 0.0
        %3813 = vmatprep.subr.mxu0 0.0
        %3814 = vmatpush1.msra.mxu0 0.0
        %3815 = vmatprep.subr.mxu0 0.0
        %3816 = vmatpush1.msra.mxu0 0.0
        %3817 = vmatprep.subr.mxu0 0.0
        %3818 = vmatpush1.msra.mxu0 0.0
        %3819 = vmatprep.subr.mxu0 0.0
        %3820 = vmatpush1.msra.mxu0 0.0
        %3821 = vmatprep.subr.mxu0 0.0
        %3822 = vmatpush1.msra.mxu0 0.0
        %3823 = vmatprep.subr.mxu0 0.0
        %3824 = vmatpush1.msra.mxu0 0.0
        %3825 = vmatprep.subr.mxu0 0.0
        %3826 = vmatpush1.msra.mxu0 0.0
        %3827 = vmatprep.subr.mxu0 0.0
        %3828 = vmatpush1.msra.mxu0 0.0
        %3829 = vmatprep.subr.mxu0 0.0
        %3830 = vmatpush1.msra.mxu0 0.0
        %3831 = vmatprep.subr.mxu0 0.0
        %3832 = vmatpush1.msra.mxu0 0.0
        %3833 = vmatprep.subr.mxu0 0.0
        %3834 = vmatpush1.msra.mxu0 0.0
        %3835 = vmatprep.subr.mxu0 0.0
        %3836 = vmatpush1.msra.mxu0 0.0
        %3837 = vmatprep.subr.mxu0 0.0
        %3838 = vmatpush1.msra.mxu0 0.0
        %3839 = vmatprep.subr.mxu0 0.0
        %3840 = vmatpush1.msra.mxu0 0.0
        %3841 = vmatprep.subr.mxu0 0.0
        %3842 = vmatpush1.msra.mxu0 0.0
        %3843 = vmatprep.subr.mxu0 0.0
        %3844 = vmatpush1.msra.mxu0 0.0
        %3845 = vmatprep.subr.mxu0 0.0
        %3846 = vmatpush1.msra.mxu0 0.0
        %3847 = vmatprep.subr.mxu0 0.0
        %3848 = vmatpush1.msra.mxu0 0.0
        %3849 = vmatprep.subr.mxu0 0.0
        %3850 = vmatpush1.msra.mxu0 0.0
        %3851 = vmatprep.subr.mxu0 0.0
        %3852 = vmatpush1.msra.mxu0 0.0
        %3853 = vmatprep.subr.mxu0 0.0
        %3854 = vmatpush1.msra.mxu0 0.0
        %3855 = vmatprep.subr.mxu0 0.0
        %3856 = vmatpush1.msra.mxu0 0.0
        %3857 = vmatprep.subr.mxu0 0.0
        %3858 = vmatpush1.msra.mxu0 0.0
        %3859 = vmatprep.subr.mxu0 0.0
        %3860 = vmatpush1.msra.mxu0 0.0
        %3861 = vmatprep.subr.mxu0 0.0
        %3862 = vmatpush1.msra.mxu0 0.0
        %3863 = vmatprep.mubr.f32.mxu0 0.0
        %3864 = vmatmul.mubr.f32.gmra.mrb[0].mxu0 %v2707
        %v3865 = vpop.f32.mrb[0].mxu0
        %v3866 = vadd.f32 0.0, %v3865
        %v3867 = vpop.f32.mrb[0].mxu0
        %v3868 = vadd.f32 0.0, %v3867
        %3869 = vmatprep.mubr.f32.mxu0 0.0
        %3870 = vmatmul.mubr.f32.gmra.mrb[0].mxu0 %v2710
        %v3871 = vpop.f32.mrb[0].mxu0
        %v3872 = vadd.f32 0.0, %v3871
        %v3873 = vpop.f32.mrb[0].mxu0
        %v3874 = vadd.f32 0.0, %v3873
        %3875 = vmatprep.mubr.f32.mxu0 0.0
        %3876 = vmatmul.mubr.f32.gmra.mrb[0].mxu0 %v2713
        %v3877 = vpop.f32.mrb[0].mxu0
        %v3878 = vadd.f32 0.0, %v3877
        %v3879 = vpop.f32.mrb[0].mxu0
        %v3880 = vadd.f32 0.0, %v3879
        %3881 = vmatprep.mubr.f32.mxu0 0.0
        %3882 = vmatmul.mubr.f32.gmra.mrb[0].mxu0 %v2716
        %v3883 = vpop.f32.mrb[0].mxu0
        %v3884 = vadd.f32 0.0, %v3883
        %v3885 = vpop.f32.mrb[0].mxu0
        %v3886 = vadd.f32 0.0, %v3885
        %3887 = vdwg.mxu0
        %v3888 = vmul.f32 %v3777, %v2299
        %v3889 = vmul.f32 %v3779, %v2301
        %v3890 = vmul.f32 %v3866, %v2512
        %v3891 = vmul.f32 %v3868, %v2514
        %v3892 = vmul.f32 %v3783, %v2303
        %v3893 = vmul.f32 %v3785, %v2305
        %v3894 = vmul.f32 %v3872, %v2516
        %v3895 = vmul.f32 %v3874, %v2518
        %v3896 = vmul.f32 %v3789, %v2309
        %v3897 = vmul.f32 %v3791, %v2311
        %v3898 = vmul.f32 %v3878, %v2522
        %v3899 = vmul.f32 %v3880, %v2524
        %v3900 = vmul.f32 %v3795, %v2313
        %v3901 = vmul.f32 %v3797, %v2315
        %v3902 = vmul.f32 %v3884, %v2526
        %v3903 = vmul.f32 %v3886, %v2528
        %v3904 = vadd.f32 %v3666, %v3888
        %v3905 = vadd.f32 %v3667, %v3889
        %v3906 = vadd.f32 %v3668, %v3890
        %v3907 = vadd.f32 %v3669, %v3891
        %v3908 = vadd.f32 %v3670, %v3892
        %v3909 = vadd.f32 %v3671, %v3893
        %v3910 = vadd.f32 %v3672, %v3894
        %v3911 = vadd.f32 %v3673, %v3895
        %v3912 = vadd.f32 %v3674, %v3896
        %v3913 = vadd.f32 %v3675, %v3897
        %v3914 = vadd.f32 %v3676, %v3898
        %v3915 = vadd.f32 %v3677, %v3899
        %v3916 = vadd.f32 %v3678, %v3900
        %v3917 = vadd.f32 %v3679, %v3901
        %v3918 = vadd.f32 %v3680, %v3902
        %v3919 = vadd.f32 %v3681, %v3903
        %v3920 = vsub.f32 %v2389, %v2944
        %v3921 = vsub.f32 %v2391, %v2945
        %v3922 = vsub.f32 %v2602, %v2946
        %v3923 = vsub.f32 %v2604, %v2947
        %v3924 = vmul.f32 %v3920, 1.442695
        %v3925 = vpow.pop %v3924
        %v3926 = vmul.f32 %v3921, 1.442695
        %v3927 = vpow.pop %v3926
        %v3928 = vmul.f32 %v3922, 1.442695
        %v3929 = vpow.pop %v3928
        %v3930 = vmul.f32 %v3923, 1.442695
        %v3931 = vpow.pop %v3930
        %v3936 = vrot.slane %v3925, 4
        %v3937 = vrot.slane %v3927, 4
        %v3938 = vrot.slane %v3929, 4
        %v3939 = vrot.slane %v3931, 4
        %v3944 = vadd.f32 %v3694, %v3936
        %v3945 = vadd.f32 %v3695, %v3937
        %v3946 = vadd.f32 %v3696, %v3938
        %v3947 = vadd.f32 %v3697, %v3939
        %v3948 = vsel %vm725, %v3936, 0
        %v3950 = vsel %vm725, %v3937, 0
        %v3952 = vsel %vm725, %v3938, 0
        %v3954 = vsel %vm725, %v3939, 0
        %3956 = vmatprep.subr.mxu0 %v3950
        %3957 = vmatpush1.msra.mxu0 %v3948
        %3958 = vmatprep.subr.mxu0 0.0
        %3959 = vmatpush1.msra.mxu0 0.0
        %3960 = vmatprep.subr.mxu0 0.0
        %3961 = vmatpush1.msra.mxu0 0.0
        %3962 = vmatprep.subr.mxu0 0.0
        %3963 = vmatpush1.msra.mxu0 0.0
        %3964 = vmatprep.subr.mxu0 0.0
        %3965 = vmatpush1.msra.mxu0 0.0
        %3966 = vmatprep.subr.mxu0 0.0
        %3967 = vmatpush1.msra.mxu0 0.0
        %3968 = vmatprep.subr.mxu0 0.0
        %3969 = vmatpush1.msra.mxu0 0.0
        %3970 = vmatprep.subr.mxu0 0.0
        %3971 = vmatpush1.msra.mxu0 0.0
        %3972 = vmatprep.subr.mxu0 0.0
        %3973 = vmatpush1.msra.mxu0 0.0
        %3974 = vmatprep.subr.mxu0 0.0
        %3975 = vmatpush1.msra.mxu0 0.0
        %3976 = vmatprep.subr.mxu0 0.0
        %3977 = vmatpush1.msra.mxu0 0.0
        %3978 = vmatprep.subr.mxu0 0.0
        %3979 = vmatpush1.msra.mxu0 0.0
        %3980 = vmatprep.subr.mxu0 0.0
        %3981 = vmatpush1.msra.mxu0 0.0
        %3982 = vmatprep.subr.mxu0 0.0
        %3983 = vmatpush1.msra.mxu0 0.0
        %3984 = vmatprep.subr.mxu0 0.0
        %3985 = vmatpush1.msra.mxu0 0.0
        %3986 = vmatprep.subr.mxu0 0.0
        %3987 = vmatpush1.msra.mxu0 0.0
        %3988 = vmatprep.subr.mxu0 0.0
        %3989 = vmatpush1.msra.mxu0 0.0
        %3990 = vmatprep.subr.mxu0 0.0
        %3991 = vmatpush1.msra.mxu0 0.0
        %3992 = vmatprep.subr.mxu0 0.0
        %3993 = vmatpush1.msra.mxu0 0.0
        %3994 = vmatprep.subr.mxu0 0.0
        %3995 = vmatpush1.msra.mxu0 0.0
        %3996 = vmatprep.subr.mxu0 0.0
        %3997 = vmatpush1.msra.mxu0 0.0
        %3998 = vmatprep.subr.mxu0 0.0
        %3999 = vmatpush1.msra.mxu0 0.0
        %4000 = vmatprep.subr.mxu0 0.0
        %4001 = vmatpush1.msra.mxu0 0.0
        %4002 = vmatprep.subr.mxu0 0.0
        %4003 = vmatpush1.msra.mxu0 0.0
        %4004 = vmatprep.subr.mxu0 0.0
        %4005 = vmatpush1.msra.mxu0 0.0
        %4006 = vmatprep.subr.mxu0 0.0
        %4007 = vmatpush1.msra.mxu0 0.0
        %4008 = vmatprep.subr.mxu0 0.0
        %4009 = vmatpush1.msra.mxu0 0.0
        %4010 = vmatprep.subr.mxu0 0.0
        %4011 = vmatpush1.msra.mxu0 0.0
        %4012 = vmatprep.subr.mxu0 0.0
        %4013 = vmatpush1.msra.mxu0 0.0
        %4014 = vmatprep.subr.mxu0 0.0
        %4015 = vmatpush1.msra.mxu0 0.0
        %4016 = vmatprep.subr.mxu0 0.0
        %4017 = vmatpush1.msra.mxu0 0.0
        %4018 = vmatprep.subr.mxu0 0.0
        %4019 = vmatpush1.msra.mxu0 0.0
        %4020 = vmatprep.mubr.f32.mxu0 0.0
        %4021 = vmatmul.mubr.f32.gmra.mrb[0].mxu0 %v2707
        %v4022 = vpop.f32.mrb[0].mxu0
        %v4023 = vadd.f32 0.0, %v4022
        %v4024 = vpop.f32.mrb[0].mxu0
        %v4025 = vadd.f32 0.0, %v4024
        %4026 = vmatprep.mubr.f32.mxu0 0.0
        %4027 = vmatmul.mubr.f32.gmra.mrb[0].mxu0 %v2710
        %v4028 = vpop.f32.mrb[0].mxu0
        %v4029 = vadd.f32 0.0, %v4028
        %v4030 = vpop.f32.mrb[0].mxu0
        %v4031 = vadd.f32 0.0, %v4030
        %4032 = vmatprep.mubr.f32.mxu0 0.0
        %4033 = vmatmul.mubr.f32.gmra.mrb[0].mxu0 %v2713
        %v4034 = vpop.f32.mrb[0].mxu0
        %v4035 = vadd.f32 0.0, %v4034
        %v4036 = vpop.f32.mrb[0].mxu0
        %v4037 = vadd.f32 0.0, %v4036
        %4038 = vmatprep.mubr.f32.mxu0 0.0
        %4039 = vmatmul.mubr.f32.gmra.mrb[0].mxu0 %v2716
        %v4040 = vpop.f32.mrb[0].mxu0
        %v4041 = vadd.f32 0.0, %v4040
        %v4042 = vpop.f32.mrb[0].mxu0
        %v4043 = vadd.f32 0.0, %v4042
        %4044 = vdwg.mxu0
        %4045 = vmatprep.subr.mxu0 %v3954
        %4046 = vmatpush1.msra.mxu0 %v3952
        %4047 = vmatprep.subr.mxu0 0.0
        %4048 = vmatpush1.msra.mxu0 0.0
        %4049 = vmatprep.subr.mxu0 0.0
        %4050 = vmatpush1.msra.mxu0 0.0
        %4051 = vmatprep.subr.mxu0 0.0
        %4052 = vmatpush1.msra.mxu0 0.0
        %4053 = vmatprep.subr.mxu0 0.0
        %4054 = vmatpush1.msra.mxu0 0.0
        %4055 = vmatprep.subr.mxu0 0.0
        %4056 = vmatpush1.msra.mxu0 0.0
        %4057 = vmatprep.subr.mxu0 0.0
        %4058 = vmatpush1.msra.mxu0 0.0
        %4059 = vmatprep.subr.mxu0 0.0
        %4060 = vmatpush1.msra.mxu0 0.0
        %4061 = vmatprep.subr.mxu0 0.0
        %4062 = vmatpush1.msra.mxu0 0.0
        %4063 = vmatprep.subr.mxu0 0.0
        %4064 = vmatpush1.msra.mxu0 0.0
        %4065 = vmatprep.subr.mxu0 0.0
        %4066 = vmatpush1.msra.mxu0 0.0
        %4067 = vmatprep.subr.mxu0 0.0
        %4068 = vmatpush1.msra.mxu0 0.0
        %4069 = vmatprep.subr.mxu0 0.0
        %4070 = vmatpush1.msra.mxu0 0.0
        %4071 = vmatprep.subr.mxu0 0.0
        %4072 = vmatpush1.msra.mxu0 0.0
        %4073 = vmatprep.subr.mxu0 0.0
        %4074 = vmatpush1.msra.mxu0 0.0
        %4075 = vmatprep.subr.mxu0 0.0
        %4076 = vmatpush1.msra.mxu0 0.0
        %4077 = vmatprep.subr.mxu0 0.0
        %4078 = vmatpush1.msra.mxu0 0.0
        %4079 = vmatprep.subr.mxu0 0.0
        %4080 = vmatpush1.msra.mxu0 0.0
        %4081 = vmatprep.subr.mxu0 0.0
        %4082 = vmatpush1.msra.mxu0 0.0
        %4083 = vmatprep.subr.mxu0 0.0
        %4084 = vmatpush1.msra.mxu0 0.0
        %4085 = vmatprep.subr.mxu0 0.0
        %4086 = vmatpush1.msra.mxu0 0.0
        %4087 = vmatprep.subr.mxu0 0.0
        %4088 = vmatpush1.msra.mxu0 0.0
        %4089 = vmatprep.subr.mxu0 0.0
        %4090 = vmatpush1.msra.mxu0 0.0
        %4091 = vmatprep.subr.mxu0 0.0
        %4092 = vmatpush1.msra.mxu0 0.0
        %4093 = vmatprep.subr.mxu0 0.0
        %4094 = vmatpush1.msra.mxu0 0.0
        %4095 = vmatprep.subr.mxu0 0.0
        %4096 = vmatpush1.msra.mxu0 0.0
        %4097 = vmatprep.subr.mxu0 0.0
        %4098 = vmatpush1.msra.mxu0 0.0
        %4099 = vmatprep.subr.mxu0 0.0
        %4100 = vmatpush1.msra.mxu0 0.0
        %4101 = vmatprep.subr.mxu0 0.0
        %4102 = vmatpush1.msra.mxu0 0.0
        %4103 = vmatprep.subr.mxu0 0.0
        %4104 = vmatpush1.msra.mxu0 0.0
        %4105 = vmatprep.subr.mxu0 0.0
        %4106 = vmatpush1.msra.mxu0 0.0
        %4107 = vmatprep.subr.mxu0 0.0
        %4108 = vmatpush1.msra.mxu0 0.0
        %4109 = vmatprep.mubr.f32.mxu0 0.0
        %4110 = vmatmul.mubr.f32.gmra.mrb[0].mxu0 %v2707
        %v4111 = vpop.f32.mrb[0].mxu0
        %v4112 = vadd.f32 0.0, %v4111
        %v4113 = vpop.f32.mrb[0].mxu0
        %v4114 = vadd.f32 0.0, %v4113
        %4115 = vmatprep.mubr.f32.mxu0 0.0
        %4116 = vmatmul.mubr.f32.gmra.mrb[0].mxu0 %v2710
        %v4117 = vpop.f32.mrb[0].mxu0
        %v4118 = vadd.f32 0.0, %v4117
        %v4119 = vpop.f32.mrb[0].mxu0
        %v4120 = vadd.f32 0.0, %v4119
        %4121 = vmatprep.mubr.f32.mxu0 0.0
        %4122 = vmatmul.mubr.f32.gmra.mrb[0].mxu0 %v2713
        %v4123 = vpop.f32.mrb[0].mxu0
        %v4124 = vadd.f32 0.0, %v4123
        %v4125 = vpop.f32.mrb[0].mxu0
        %v4126 = vadd.f32 0.0, %v4125
        %4127 = vmatprep.mubr.f32.mxu0 0.0
        %4128 = vmatmul.mubr.f32.gmra.mrb[0].mxu0 %v2716
        %v4129 = vpop.f32.mrb[0].mxu0
        %v4130 = vadd.f32 0.0, %v4129
        %v4131 = vpop.f32.mrb[0].mxu0
        %v4132 = vadd.f32 0.0, %v4131
        %4133 = vdwg.mxu0
        %v4134 = vmul.f32 %v4023, %v2319
        %v4135 = vmul.f32 %v4025, %v2321
        %v4136 = vmul.f32 %v4112, %v2532
        %v4137 = vmul.f32 %v4114, %v2534
        %v4138 = vmul.f32 %v4029, %v2323
        %v4139 = vmul.f32 %v4031, %v2325
        %v4140 = vmul.f32 %v4118, %v2536
        %v4141 = vmul.f32 %v4120, %v2538
        %v4142 = vmul.f32 %v4035, %v2329
        %v4143 = vmul.f32 %v4037, %v2331
        %v4144 = vmul.f32 %v4124, %v2542
        %v4145 = vmul.f32 %v4126, %v2544
        %v4146 = vmul.f32 %v4041, %v2333
        %v4147 = vmul.f32 %v4043, %v2335
        %v4148 = vmul.f32 %v4130, %v2546
        %v4149 = vmul.f32 %v4132, %v2548
        %v4150 = vadd.f32 %v3904, %v4134
        %v4151 = vadd.f32 %v3905, %v4135
        %v4152 = vadd.f32 %v3906, %v4136
        %v4153 = vadd.f32 %v3907, %v4137
        %v4154 = vadd.f32 %v3908, %v4138
        %v4155 = vadd.f32 %v3909, %v4139
        %v4156 = vadd.f32 %v3910, %v4140
        %v4157 = vadd.f32 %v3911, %v4141
        %v4158 = vadd.f32 %v3912, %v4142
        %v4159 = vadd.f32 %v3913, %v4143
        %v4160 = vadd.f32 %v3914, %v4144
        %v4161 = vadd.f32 %v3915, %v4145
        %v4162 = vadd.f32 %v3916, %v4146
        %v4163 = vadd.f32 %v3917, %v4147
        %v4164 = vadd.f32 %v3918, %v4148
        %v4165 = vadd.f32 %v3919, %v4149
        %v4166 = vsub.f32 %v2393, %v2682
        %v4167 = vsub.f32 %v2395, %v2683
        %v4168 = vsub.f32 %v2606, %v2684
        %v4169 = vsub.f32 %v2608, %v2685
        %v4170 = vmul.f32 %v4166, 1.442695
        %v4171 = vpow.pop %v4170
        %v4172 = vmul.f32 %v4167, 1.442695
        %v4173 = vpow.pop %v4172
        %v4174 = vmul.f32 %v4168, 1.442695
        %v4175 = vpow.pop %v4174
        %v4176 = vmul.f32 %v4169, 1.442695
        %v4177 = vpow.pop %v4176
        %v4178 = vadd.f32 %v3944, %v4171
        %v4179 = vadd.f32 %v3945, %v4173
        %v4180 = vadd.f32 %v3946, %v4175
        %v4181 = vadd.f32 %v3947, %v4177
        %v4183 = vsel %vm725, %v4171, 0
        %v4186 = vsel %vm725, %v4173, 0
        %v4189 = vsel %vm725, %v4175, 0
        %v4192 = vsel %vm725, %v4177, 0
        %4194 = vmatprep.subr.mxu0 %v4186
        %4195 = vmatpush1.msra.mxu0 %v4183
        %4196 = vmatprep.subr.mxu0 0.0
        %4197 = vmatpush1.msra.mxu0 0.0
        %4198 = vmatprep.subr.mxu0 0.0
        %4199 = vmatpush1.msra.mxu0 0.0
        %4200 = vmatprep.subr.mxu0 0.0
        %4201 = vmatpush1.msra.mxu0 0.0
        %4202 = vmatprep.subr.mxu0 0.0
        %4203 = vmatpush1.msra.mxu0 0.0
        %4204 = vmatprep.subr.mxu0 0.0
        %4205 = vmatpush1.msra.mxu0 0.0
        %4206 = vmatprep.subr.mxu0 0.0
        %4207 = vmatpush1.msra.mxu0 0.0
        %4208 = vmatprep.subr.mxu0 0.0
        %4209 = vmatpush1.msra.mxu0 0.0
        %4210 = vmatprep.subr.mxu0 0.0
        %4211 = vmatpush1.msra.mxu0 0.0
        %4212 = vmatprep.subr.mxu0 0.0
        %4213 = vmatpush1.msra.mxu0 0.0
        %4214 = vmatprep.subr.mxu0 0.0
        %4215 = vmatpush1.msra.mxu0 0.0
        %4216 = vmatprep.subr.mxu0 0.0
        %4217 = vmatpush1.msra.mxu0 0.0
        %4218 = vmatprep.subr.mxu0 0.0
        %4219 = vmatpush1.msra.mxu0 0.0
        %4220 = vmatprep.subr.mxu0 0.0
        %4221 = vmatpush1.msra.mxu0 0.0
        %4222 = vmatprep.subr.mxu0 0.0
        %4223 = vmatpush1.msra.mxu0 0.0
        %4224 = vmatprep.subr.mxu0 0.0
        %4225 = vmatpush1.msra.mxu0 0.0
        %4226 = vmatprep.subr.mxu0 0.0
        %4227 = vmatpush1.msra.mxu0 0.0
        %4228 = vmatprep.subr.mxu0 0.0
        %4229 = vmatpush1.msra.mxu0 0.0
        %4230 = vmatprep.subr.mxu0 0.0
        %4231 = vmatpush1.msra.mxu0 0.0
        %4232 = vmatprep.subr.mxu0 0.0
        %4233 = vmatpush1.msra.mxu0 0.0
        %4234 = vmatprep.subr.mxu0 0.0
        %4235 = vmatpush1.msra.mxu0 0.0
        %4236 = vmatprep.subr.mxu0 0.0
        %4237 = vmatpush1.msra.mxu0 0.0
        %4238 = vmatprep.subr.mxu0 0.0
        %4239 = vmatpush1.msra.mxu0 0.0
        %4240 = vmatprep.subr.mxu0 0.0
        %4241 = vmatpush1.msra.mxu0 0.0
        %4242 = vmatprep.subr.mxu0 0.0
        %4243 = vmatpush1.msra.mxu0 0.0
        %4244 = vmatprep.subr.mxu0 0.0
        %4245 = vmatpush1.msra.mxu0 0.0
        %4246 = vmatprep.subr.mxu0 0.0
        %4247 = vmatpush1.msra.mxu0 0.0
        %4248 = vmatprep.subr.mxu0 0.0
        %4249 = vmatpush1.msra.mxu0 0.0
        %4250 = vmatprep.subr.mxu0 0.0
        %4251 = vmatpush1.msra.mxu0 0.0
        %4252 = vmatprep.subr.mxu0 0.0
        %4253 = vmatpush1.msra.mxu0 0.0
        %4254 = vmatprep.subr.mxu0 0.0
        %4255 = vmatpush1.msra.mxu0 0.0
        %4256 = vmatprep.subr.mxu0 0.0
        %4257 = vmatpush1.msra.mxu0 0.0
        %4258 = vmatprep.mubr.f32.mxu0 0.0
        %4259 = vmatmul.mubr.f32.gmra.mrb[0].mxu0 %v2707
        %v4260 = vpop.f32.mrb[0].mxu0
        %v4261 = vadd.f32 0.0, %v4260
        %v4262 = vpop.f32.mrb[0].mxu0
        %v4263 = vadd.f32 0.0, %v4262
        %4264 = vmatprep.mubr.f32.mxu0 0.0
        %4265 = vmatmul.mubr.f32.gmra.mrb[0].mxu0 %v2710
        %v4266 = vpop.f32.mrb[0].mxu0
        %v4267 = vadd.f32 0.0, %v4266
        %v4268 = vpop.f32.mrb[0].mxu0
        %v4269 = vadd.f32 0.0, %v4268
        %4270 = vmatprep.mubr.f32.mxu0 0.0
        %4271 = vmatmul.mubr.f32.gmra.mrb[0].mxu0 %v2713
        %v4272 = vpop.f32.mrb[0].mxu0
        %v4273 = vadd.f32 0.0, %v4272
        %v4274 = vpop.f32.mrb[0].mxu0
        %v4275 = vadd.f32 0.0, %v4274
        %4276 = vmatprep.mubr.f32.mxu0 0.0
        %4277 = vmatmul.mubr.f32.gmra.mrb[0].mxu0 %v2716
        %v4278 = vpop.f32.mrb[0].mxu0
        %v4279 = vadd.f32 0.0, %v4278
        %v4280 = vpop.f32.mrb[0].mxu0
        %v4281 = vadd.f32 0.0, %v4280
        %4282 = vdwg.mxu0
        %4283 = vmatprep.subr.mxu0 %v4192
        %4284 = vmatpush1.msra.mxu0 %v4189
        %4285 = vmatprep.subr.mxu0 0.0
        %4286 = vmatpush1.msra.mxu0 0.0
        %4287 = vmatprep.subr.mxu0 0.0
        %4288 = vmatpush1.msra.mxu0 0.0
        %4289 = vmatprep.subr.mxu0 0.0
        %4290 = vmatpush1.msra.mxu0 0.0
        %4291 = vmatprep.subr.mxu0 0.0
        %4292 = vmatpush1.msra.mxu0 0.0
        %4293 = vmatprep.subr.mxu0 0.0
        %4294 = vmatpush1.msra.mxu0 0.0
        %4295 = vmatprep.subr.mxu0 0.0
        %4296 = vmatpush1.msra.mxu0 0.0
        %4297 = vmatprep.subr.mxu0 0.0
        %4298 = vmatpush1.msra.mxu0 0.0
        %4299 = vmatprep.subr.mxu0 0.0
        %4300 = vmatpush1.msra.mxu0 0.0
        %4301 = vmatprep.subr.mxu0 0.0
        %4302 = vmatpush1.msra.mxu0 0.0
        %4303 = vmatprep.subr.mxu0 0.0
        %4304 = vmatpush1.msra.mxu0 0.0
        %4305 = vmatprep.subr.mxu0 0.0
        %4306 = vmatpush1.msra.mxu0 0.0
        %4307 = vmatprep.subr.mxu0 0.0
        %4308 = vmatpush1.msra.mxu0 0.0
        %4309 = vmatprep.subr.mxu0 0.0
        %4310 = vmatpush1.msra.mxu0 0.0
        %4311 = vmatprep.subr.mxu0 0.0
        %4312 = vmatpush1.msra.mxu0 0.0
        %4313 = vmatprep.subr.mxu0 0.0
        %4314 = vmatpush1.msra.mxu0 0.0
        %4315 = vmatprep.subr.mxu0 0.0
        %4316 = vmatpush1.msra.mxu0 0.0
        %4317 = vmatprep.subr.mxu0 0.0
        %4318 = vmatpush1.msra.mxu0 0.0
        %4319 = vmatprep.subr.mxu0 0.0
        %4320 = vmatpush1.msra.mxu0 0.0
        %4321 = vmatprep.subr.mxu0 0.0
        %4322 = vmatpush1.msra.mxu0 0.0
        %4323 = vmatprep.subr.mxu0 0.0
        %4324 = vmatpush1.msra.mxu0 0.0
        %4325 = vmatprep.subr.mxu0 0.0
        %4326 = vmatpush1.msra.mxu0 0.0
        %4327 = vmatprep.subr.mxu0 0.0
        %4328 = vmatpush1.msra.mxu0 0.0
        %4329 = vmatprep.subr.mxu0 0.0
        %4330 = vmatpush1.msra.mxu0 0.0
        %4331 = vmatprep.subr.mxu0 0.0
        %4332 = vmatpush1.msra.mxu0 0.0
        %4333 = vmatprep.subr.mxu0 0.0
        %4334 = vmatpush1.msra.mxu0 0.0
        %4335 = vmatprep.subr.mxu0 0.0
        %4336 = vmatpush1.msra.mxu0 0.0
        %4337 = vmatprep.subr.mxu0 0.0
        %4338 = vmatpush1.msra.mxu0 0.0
        %4339 = vmatprep.subr.mxu0 0.0
        %4340 = vmatpush1.msra.mxu0 0.0
        %4341 = vmatprep.subr.mxu0 0.0
        %4342 = vmatpush1.msra.mxu0 0.0
        %4343 = vmatprep.subr.mxu0 0.0
        %4344 = vmatpush1.msra.mxu0 0.0
        %4345 = vmatprep.subr.mxu0 0.0
        %4346 = vmatpush1.msra.mxu0 0.0
        %4347 = vmatprep.mubr.f32.mxu0 0.0
        %4348 = vmatmul.mubr.f32.gmra.mrb[0].mxu0 %v2707
        %v4349 = vpop.f32.mrb[0].mxu0
        %v4350 = vadd.f32 0.0, %v4349
        %v4351 = vpop.f32.mrb[0].mxu0
        %v4352 = vadd.f32 0.0, %v4351
        %4353 = vmatprep.mubr.f32.mxu0 0.0
        %4354 = vmatmul.mubr.f32.gmra.mrb[0].mxu0 %v2710
        %v4355 = vpop.f32.mrb[0].mxu0
        %v4356 = vadd.f32 0.0, %v4355
        %v4357 = vpop.f32.mrb[0].mxu0
        %v4358 = vadd.f32 0.0, %v4357
        %4359 = vmatprep.mubr.f32.mxu0 0.0
        %4360 = vmatmul.mubr.f32.gmra.mrb[0].mxu0 %v2713
        %v4361 = vpop.f32.mrb[0].mxu0
        %v4362 = vadd.f32 0.0, %v4361
        %v4363 = vpop.f32.mrb[0].mxu0
        %v4364 = vadd.f32 0.0, %v4363
        %4365 = vmatprep.mubr.f32.mxu0 0.0
        %4366 = vmatmul.mubr.f32.gmra.mrb[0].mxu0 %v2716
        %v4367 = vpop.f32.mrb[0].mxu0
        %v4368 = vadd.f32 0.0, %v4367
        %v4369 = vpop.f32.mrb[0].mxu0
        %v4370 = vadd.f32 0.0, %v4369
        %4371 = vdwg.mxu0
        %v4372 = vmul.f32 %v4261, %v2339
        %v4373 = vmul.f32 %v4263, %v2341
        %v4374 = vmul.f32 %v4350, %v2552
        %v4375 = vmul.f32 %v4352, %v2554
        %v4376 = vmul.f32 %v4267, %v2343
        %v4377 = vmul.f32 %v4269, %v2345
        %v4378 = vmul.f32 %v4356, %v2556
        %v4379 = vmul.f32 %v4358, %v2558
        %v4380 = vmul.f32 %v4273, %v2349
        %v4381 = vmul.f32 %v4275, %v2351
        %v4382 = vmul.f32 %v4362, %v2562
        %v4383 = vmul.f32 %v4364, %v2564
        %v4384 = vmul.f32 %v4279, %v2353
        %v4385 = vmul.f32 %v4281, %v2355
        %v4386 = vmul.f32 %v4368, %v2566
        %v4387 = vmul.f32 %v4370, %v2568
        %v4388 = vadd.f32 %v4150, %v4372
        %v4389 = vadd.f32 %v4151, %v4373
        %v4390 = vadd.f32 %v4152, %v4374
        %v4391 = vadd.f32 %v4153, %v4375
        %v4392 = vadd.f32 %v4154, %v4376
        %v4393 = vadd.f32 %v4155, %v4377
        %v4394 = vadd.f32 %v4156, %v4378
        %v4395 = vadd.f32 %v4157, %v4379
        %v4396 = vadd.f32 %v4158, %v4380
        %v4397 = vadd.f32 %v4159, %v4381
        %v4398 = vadd.f32 %v4160, %v4382
        %v4399 = vadd.f32 %v4161, %v4383
        %v4400 = vadd.f32 %v4162, %v4384
        %v4401 = vadd.f32 %v4163, %v4385
        %v4402 = vadd.f32 %v4164, %v4386
        %v4403 = vadd.f32 %v4165, %v4387
        %v4404 = vsub.f32 %v2393, %v2944
        %v4405 = vsub.f32 %v2395, %v2945
        %v4406 = vsub.f32 %v2606, %v2946
        %v4407 = vsub.f32 %v2608, %v2947
        %v4408 = vmul.f32 %v4404, 1.442695
        %v4409 = vpow.pop %v4408
        %v4410 = vmul.f32 %v4405, 1.442695
        %v4411 = vpow.pop %v4410
        %v4412 = vmul.f32 %v4406, 1.442695
        %v4413 = vpow.pop %v4412
        %v4414 = vmul.f32 %v4407, 1.442695
        %v4415 = vpow.pop %v4414
        %v4420 = vrot.slane %v4409, 4
        %v4421 = vrot.slane %v4411, 4
        %v4422 = vrot.slane %v4413, 4
        %v4423 = vrot.slane %v4415, 4
        %v4428 = vadd.f32 %v4178, %v4420
        %v4429 = vadd.f32 %v4179, %v4421
        %v4430 = vadd.f32 %v4180, %v4422
        %v4431 = vadd.f32 %v4181, %v4423
        %v4432 = vsel %vm725, %v4420, 0
        %v4434 = vsel %vm725, %v4421, 0
        %v4436 = vsel %vm725, %v4422, 0
        %v4438 = vsel %vm725, %v4423, 0
        %4440 = vmatprep.subr.mxu0 %v4434
        %4441 = vmatpush1.msra.mxu0 %v4432
        %4442 = vmatprep.subr.mxu0 0.0
        %4443 = vmatpush1.msra.mxu0 0.0
        %4444 = vmatprep.subr.mxu0 0.0
        %4445 = vmatpush1.msra.mxu0 0.0
        %4446 = vmatprep.subr.mxu0 0.0
        %4447 = vmatpush1.msra.mxu0 0.0
        %4448 = vmatprep.subr.mxu0 0.0
        %4449 = vmatpush1.msra.mxu0 0.0
        %4450 = vmatprep.subr.mxu0 0.0
        %4451 = vmatpush1.msra.mxu0 0.0
        %4452 = vmatprep.subr.mxu0 0.0
        %4453 = vmatpush1.msra.mxu0 0.0
        %4454 = vmatprep.subr.mxu0 0.0
        %4455 = vmatpush1.msra.mxu0 0.0
        %4456 = vmatprep.subr.mxu0 0.0
        %4457 = vmatpush1.msra.mxu0 0.0
        %4458 = vmatprep.subr.mxu0 0.0
        %4459 = vmatpush1.msra.mxu0 0.0
        %4460 = vmatprep.subr.mxu0 0.0
        %4461 = vmatpush1.msra.mxu0 0.0
        %4462 = vmatprep.subr.mxu0 0.0
        %4463 = vmatpush1.msra.mxu0 0.0
        %4464 = vmatprep.subr.mxu0 0.0
        %4465 = vmatpush1.msra.mxu0 0.0
        %4466 = vmatprep.subr.mxu0 0.0
        %4467 = vmatpush1.msra.mxu0 0.0
        %4468 = vmatprep.subr.mxu0 0.0
        %4469 = vmatpush1.msra.mxu0 0.0
        %4470 = vmatprep.subr.mxu0 0.0
        %4471 = vmatpush1.msra.mxu0 0.0
        %4472 = vmatprep.subr.mxu0 0.0
        %4473 = vmatpush1.msra.mxu0 0.0
        %4474 = vmatprep.subr.mxu0 0.0
        %4475 = vmatpush1.msra.mxu0 0.0
        %4476 = vmatprep.subr.mxu0 0.0
        %4477 = vmatpush1.msra.mxu0 0.0
        %4478 = vmatprep.subr.mxu0 0.0
        %4479 = vmatpush1.msra.mxu0 0.0
        %4480 = vmatprep.subr.mxu0 0.0
        %4481 = vmatpush1.msra.mxu0 0.0
        %4482 = vmatprep.subr.mxu0 0.0
        %4483 = vmatpush1.msra.mxu0 0.0
        %4484 = vmatprep.subr.mxu0 0.0
        %4485 = vmatpush1.msra.mxu0 0.0
        %4486 = vmatprep.subr.mxu0 0.0
        %4487 = vmatpush1.msra.mxu0 0.0
        %4488 = vmatprep.subr.mxu0 0.0
        %4489 = vmatpush1.msra.mxu0 0.0
        %4490 = vmatprep.subr.mxu0 0.0
        %4491 = vmatpush1.msra.mxu0 0.0
        %4492 = vmatprep.subr.mxu0 0.0
        %4493 = vmatpush1.msra.mxu0 0.0
        %4494 = vmatprep.subr.mxu0 0.0
        %4495 = vmatpush1.msra.mxu0 0.0
        %4496 = vmatprep.subr.mxu0 0.0
        %4497 = vmatpush1.msra.mxu0 0.0
        %4498 = vmatprep.subr.mxu0 0.0
        %4499 = vmatpush1.msra.mxu0 0.0
        %4500 = vmatprep.subr.mxu0 0.0
        %4501 = vmatpush1.msra.mxu0 0.0
        %4502 = vmatprep.subr.mxu0 0.0
        %4503 = vmatpush1.msra.mxu0 0.0
        %4504 = vmatprep.mubr.f32.mxu0 0.0
        %4505 = vmatmul.mubr.f32.gmra.mrb[0].mxu0 %v2707
        %v4506 = vpop.f32.mrb[0].mxu0
        %v4507 = vadd.f32 0.0, %v4506
        %v4508 = vpop.f32.mrb[0].mxu0
        %v4509 = vadd.f32 0.0, %v4508
        %4510 = vmatprep.mubr.f32.mxu0 0.0
        %4511 = vmatmul.mubr.f32.gmra.mrb[0].mxu0 %v2710
        %v4512 = vpop.f32.mrb[0].mxu0
        %v4513 = vadd.f32 0.0, %v4512
        %v4514 = vpop.f32.mrb[0].mxu0
        %v4515 = vadd.f32 0.0, %v4514
        %4516 = vmatprep.mubr.f32.mxu0 0.0
        %4517 = vmatmul.mubr.f32.gmra.mrb[0].mxu0 %v2713
        %v4518 = vpop.f32.mrb[0].mxu0
        %v4519 = vadd.f32 0.0, %v4518
        %v4520 = vpop.f32.mrb[0].mxu0
        %v4521 = vadd.f32 0.0, %v4520
        %4522 = vmatprep.mubr.f32.mxu0 0.0
        %4523 = vmatmul.mubr.f32.gmra.mrb[0].mxu0 %v2716
        %v4524 = vpop.f32.mrb[0].mxu0
        %v4525 = vadd.f32 0.0, %v4524
        %v4526 = vpop.f32.mrb[0].mxu0
        %v4527 = vadd.f32 0.0, %v4526
        %4528 = vdwg.mxu0
        %4529 = vmatprep.subr.mxu0 %v4438
        %4530 = vmatpush1.msra.mxu0 %v4436
        %4531 = vmatprep.subr.mxu0 0.0
        %4532 = vmatpush1.msra.mxu0 0.0
        %4533 = vmatprep.subr.mxu0 0.0
        %4534 = vmatpush1.msra.mxu0 0.0
        %4535 = vmatprep.subr.mxu0 0.0
        %4536 = vmatpush1.msra.mxu0 0.0
        %4537 = vmatprep.subr.mxu0 0.0
        %4538 = vmatpush1.msra.mxu0 0.0
        %4539 = vmatprep.subr.mxu0 0.0
        %4540 = vmatpush1.msra.mxu0 0.0
        %4541 = vmatprep.subr.mxu0 0.0
        %4542 = vmatpush1.msra.mxu0 0.0
        %4543 = vmatprep.subr.mxu0 0.0
        %4544 = vmatpush1.msra.mxu0 0.0
        %4545 = vmatprep.subr.mxu0 0.0
        %4546 = vmatpush1.msra.mxu0 0.0
        %4547 = vmatprep.subr.mxu0 0.0
        %4548 = vmatpush1.msra.mxu0 0.0
        %4549 = vmatprep.subr.mxu0 0.0
        %4550 = vmatpush1.msra.mxu0 0.0
        %4551 = vmatprep.subr.mxu0 0.0
        %4552 = vmatpush1.msra.mxu0 0.0
        %4553 = vmatprep.subr.mxu0 0.0
        %4554 = vmatpush1.msra.mxu0 0.0
        %4555 = vmatprep.subr.mxu0 0.0
        %4556 = vmatpush1.msra.mxu0 0.0
        %4557 = vmatprep.subr.mxu0 0.0
        %4558 = vmatpush1.msra.mxu0 0.0
        %4559 = vmatprep.subr.mxu0 0.0
        %4560 = vmatpush1.msra.mxu0 0.0
        %4561 = vmatprep.subr.mxu0 0.0
        %4562 = vmatpush1.msra.mxu0 0.0
        %4563 = vmatprep.subr.mxu0 0.0
        %4564 = vmatpush1.msra.mxu0 0.0
        %4565 = vmatprep.subr.mxu0 0.0
        %4566 = vmatpush1.msra.mxu0 0.0
        %4567 = vmatprep.subr.mxu0 0.0
        %4568 = vmatpush1.msra.mxu0 0.0
        %4569 = vmatprep.subr.mxu0 0.0
        %4570 = vmatpush1.msra.mxu0 0.0
        %4571 = vmatprep.subr.mxu0 0.0
        %4572 = vmatpush1.msra.mxu0 0.0
        %4573 = vmatprep.subr.mxu0 0.0
        %4574 = vmatpush1.msra.mxu0 0.0
        %4575 = vmatprep.subr.mxu0 0.0
        %4576 = vmatpush1.msra.mxu0 0.0
        %4577 = vmatprep.subr.mxu0 0.0
        %4578 = vmatpush1.msra.mxu0 0.0
        %4579 = vmatprep.subr.mxu0 0.0
        %4580 = vmatpush1.msra.mxu0 0.0
        %4581 = vmatprep.subr.mxu0 0.0
        %4582 = vmatpush1.msra.mxu0 0.0
        %4583 = vmatprep.subr.mxu0 0.0
        %4584 = vmatpush1.msra.mxu0 0.0
        %4585 = vmatprep.subr.mxu0 0.0
        %4586 = vmatpush1.msra.mxu0 0.0
        %4587 = vmatprep.subr.mxu0 0.0
        %4588 = vmatpush1.msra.mxu0 0.0
        %4589 = vmatprep.subr.mxu0 0.0
        %4590 = vmatpush1.msra.mxu0 0.0
        %4591 = vmatprep.subr.mxu0 0.0
        %4592 = vmatpush1.msra.mxu0 0.0
        %4593 = vmatprep.mubr.f32.mxu0 0.0
        %4594 = vmatmul.mubr.f32.gmra.mrb[0].mxu0 %v2707
        %v4595 = vpop.f32.mrb[0].mxu0
        %v4596 = vadd.f32 0.0, %v4595
        %v4597 = vpop.f32.mrb[0].mxu0
        %v4598 = vadd.f32 0.0, %v4597
        %4599 = vmatprep.mubr.f32.mxu0 0.0
        %4600 = vmatmul.mubr.f32.gmra.mrb[0].mxu0 %v2710
        %v4601 = vpop.f32.mrb[0].mxu0
        %v4602 = vadd.f32 0.0, %v4601
        %v4603 = vpop.f32.mrb[0].mxu0
        %v4604 = vadd.f32 0.0, %v4603
        %4605 = vmatprep.mubr.f32.mxu0 0.0
        %4606 = vmatmul.mubr.f32.gmra.mrb[0].mxu0 %v2713
        %v4607 = vpop.f32.mrb[0].mxu0
        %v4608 = vadd.f32 0.0, %v4607
        %v4609 = vpop.f32.mrb[0].mxu0
        %v4610 = vadd.f32 0.0, %v4609
        %4611 = vmatprep.mubr.f32.mxu0 0.0
        %4612 = vmatmul.mubr.f32.gmra.mrb[0].mxu0 %v2716
        %v4613 = vpop.f32.mrb[0].mxu0
        %v4614 = vadd.f32 0.0, %v4613
        %v4615 = vpop.f32.mrb[0].mxu0
        %v4616 = vadd.f32 0.0, %v4615
        %4617 = vdwg.mxu0
        %v4618 = vmul.f32 %v4507, %v2359
        %v4619 = vmul.f32 %v4509, %v2361
        %v4620 = vmul.f32 %v4596, %v2572
        %v4621 = vmul.f32 %v4598, %v2574
        %v4622 = vmul.f32 %v4513, %v2363
        %v4623 = vmul.f32 %v4515, %v2365
        %v4624 = vmul.f32 %v4602, %v2576
        %v4625 = vmul.f32 %v4604, %v2578
        %v4626 = vmul.f32 %v4519, %v2369
        %v4627 = vmul.f32 %v4521, %v2371
        %v4628 = vmul.f32 %v4608, %v2582
        %v4629 = vmul.f32 %v4610, %v2584
        %v4630 = vmul.f32 %v4525, %v2373
        %v4631 = vmul.f32 %v4527, %v2375
        %v4632 = vmul.f32 %v4614, %v2586
        %v4633 = vmul.f32 %v4616, %v2588
        %v4634 = vadd.f32 %v4388, %v4618
        %v4635 = vadd.f32 %v4389, %v4619
        %v4636 = vadd.f32 %v4390, %v4620
        %v4637 = vadd.f32 %v4391, %v4621
        %v4638 = vadd.f32 %v4392, %v4622
        %v4639 = vadd.f32 %v4393, %v4623
        %v4640 = vadd.f32 %v4394, %v4624
        %v4641 = vadd.f32 %v4395, %v4625
        %v4642 = vadd.f32 %v4396, %v4626
        %v4643 = vadd.f32 %v4397, %v4627
        %v4644 = vadd.f32 %v4398, %v4628
        %v4645 = vadd.f32 %v4399, %v4629
        %v4646 = vadd.f32 %v4400, %v4630
        %v4647 = vadd.f32 %v4401, %v4631
        %v4648 = vadd.f32 %v4402, %v4632
        %v4649 = vadd.f32 %v4403, %v4633
        %v4650 = vrcp.pop %v4428
        %v4651 = vrcp.pop %v4429
        %v4652 = vrcp.pop %v4430
        %v4653 = vrcp.pop %v4431
        %v4655 = vsel %vm725, %v4650, 0
        %v4658 = vsel %vm725, %v4651, 0
        %v4661 = vsel %vm725, %v4652, 0
        %v4664 = vsel %vm725, %v4653, 0
        %4666 = vmatprep.subr.mxu0 %v4658
        %4667 = vmatpush1.msra.mxu0 %v4655
        %4668 = vmatprep.subr.mxu0 0.0
        %4669 = vmatpush1.msra.mxu0 0.0
        %4670 = vmatprep.subr.mxu0 0.0
        %4671 = vmatpush1.msra.mxu0 0.0
        %4672 = vmatprep.subr.mxu0 0.0
        %4673 = vmatpush1.msra.mxu0 0.0
        %4674 = vmatprep.subr.mxu0 0.0
        %4675 = vmatpush1.msra.mxu0 0.0
        %4676 = vmatprep.subr.mxu0 0.0
        %4677 = vmatpush1.msra.mxu0 0.0
        %4678 = vmatprep.subr.mxu0 0.0
        %4679 = vmatpush1.msra.mxu0 0.0
        %4680 = vmatprep.subr.mxu0 0.0
        %4681 = vmatpush1.msra.mxu0 0.0
        %4682 = vmatprep.subr.mxu0 0.0
        %4683 = vmatpush1.msra.mxu0 0.0
        %4684 = vmatprep.subr.mxu0 0.0
        %4685 = vmatpush1.msra.mxu0 0.0
        %4686 = vmatprep.subr.mxu0 0.0
        %4687 = vmatpush1.msra.mxu0 0.0
        %4688 = vmatprep.subr.mxu0 0.0
        %4689 = vmatpush1.msra.mxu0 0.0
        %4690 = vmatprep.subr.mxu0 0.0
        %4691 = vmatpush1.msra.mxu0 0.0
        %4692 = vmatprep.subr.mxu0 0.0
        %4693 = vmatpush1.msra.mxu0 0.0
        %4694 = vmatprep.subr.mxu0 0.0
        %4695 = vmatpush1.msra.mxu0 0.0
        %4696 = vmatprep.subr.mxu0 0.0
        %4697 = vmatpush1.msra.mxu0 0.0
        %4698 = vmatprep.subr.mxu0 0.0
        %4699 = vmatpush1.msra.mxu0 0.0
        %4700 = vmatprep.subr.mxu0 0.0
        %4701 = vmatpush1.msra.mxu0 0.0
        %4702 = vmatprep.subr.mxu0 0.0
        %4703 = vmatpush1.msra.mxu0 0.0
        %4704 = vmatprep.subr.mxu0 0.0
        %4705 = vmatpush1.msra.mxu0 0.0
        %4706 = vmatprep.subr.mxu0 0.0
        %4707 = vmatpush1.msra.mxu0 0.0
        %4708 = vmatprep.subr.mxu0 0.0
        %4709 = vmatpush1.msra.mxu0 0.0
        %4710 = vmatprep.subr.mxu0 0.0
        %4711 = vmatpush1.msra.mxu0 0.0
        %4712 = vmatprep.subr.mxu0 0.0
        %4713 = vmatpush1.msra.mxu0 0.0
        %4714 = vmatprep.subr.mxu0 0.0
        %4715 = vmatpush1.msra.mxu0 0.0
        %4716 = vmatprep.subr.mxu0 0.0
        %4717 = vmatpush1.msra.mxu0 0.0
        %4718 = vmatprep.subr.mxu0 0.0
        %4719 = vmatpush1.msra.mxu0 0.0
        %4720 = vmatprep.subr.mxu0 0.0
        %4721 = vmatpush1.msra.mxu0 0.0
        %4722 = vmatprep.subr.mxu0 0.0
        %4723 = vmatpush1.msra.mxu0 0.0
        %4724 = vmatprep.subr.mxu0 0.0
        %4725 = vmatpush1.msra.mxu0 0.0
        %4726 = vmatprep.subr.mxu0 0.0
        %4727 = vmatpush1.msra.mxu0 0.0
        %4728 = vmatprep.subr.mxu0 0.0
        %4729 = vmatpush1.msra.mxu0 0.0
        %4730 = vmatprep.mubr.f32.mxu0 0.0
        %4731 = vmatmul.mubr.f32.gmra.mrb[0].mxu0 %v2707
        %v4732 = vpop.f32.mrb[0].mxu0
        %v4733 = vadd.f32 0.0, %v4732
        %v4734 = vpop.f32.mrb[0].mxu0
        %v4735 = vadd.f32 0.0, %v4734
        %4736 = vmatprep.mubr.f32.mxu0 0.0
        %4737 = vmatmul.mubr.f32.gmra.mrb[0].mxu0 %v2710
        %v4738 = vpop.f32.mrb[0].mxu0
        %v4739 = vadd.f32 0.0, %v4738
        %v4740 = vpop.f32.mrb[0].mxu0
        %v4741 = vadd.f32 0.0, %v4740
        %4742 = vmatprep.mubr.f32.mxu0 0.0
        %4743 = vmatmul.mubr.f32.gmra.mrb[0].mxu0 %v2713
        %v4744 = vpop.f32.mrb[0].mxu0
        %v4745 = vadd.f32 0.0, %v4744
        %v4746 = vpop.f32.mrb[0].mxu0
        %v4747 = vadd.f32 0.0, %v4746
        %4748 = vmatprep.mubr.f32.mxu0 0.0
        %4749 = vmatmul.mubr.f32.gmra.mrb[0].mxu0 %v2716
        %v4750 = vpop.f32.mrb[0].mxu0
        %v4751 = vadd.f32 0.0, %v4750
        %v4752 = vpop.f32.mrb[0].mxu0
        %v4753 = vadd.f32 0.0, %v4752
        %4754 = vdwg.mxu0
        %4755 = vmatprep.subr.mxu0 %v4664
        %4756 = vmatpush1.msra.mxu0 %v4661
        %4757 = vmatprep.subr.mxu0 0.0
        %4758 = vmatpush1.msra.mxu0 0.0
        %4759 = vmatprep.subr.mxu0 0.0
        %4760 = vmatpush1.msra.mxu0 0.0
        %4761 = vmatprep.subr.mxu0 0.0
        %4762 = vmatpush1.msra.mxu0 0.0
        %4763 = vmatprep.subr.mxu0 0.0
        %4764 = vmatpush1.msra.mxu0 0.0
        %4765 = vmatprep.subr.mxu0 0.0
        %4766 = vmatpush1.msra.mxu0 0.0
        %4767 = vmatprep.subr.mxu0 0.0
        %4768 = vmatpush1.msra.mxu0 0.0
        %4769 = vmatprep.subr.mxu0 0.0
        %4770 = vmatpush1.msra.mxu0 0.0
        %4771 = vmatprep.subr.mxu0 0.0
        %4772 = vmatpush1.msra.mxu0 0.0
        %4773 = vmatprep.subr.mxu0 0.0
        %4774 = vmatpush1.msra.mxu0 0.0
        %4775 = vmatprep.subr.mxu0 0.0
        %4776 = vmatpush1.msra.mxu0 0.0
        %4777 = vmatprep.subr.mxu0 0.0
        %4778 = vmatpush1.msra.mxu0 0.0
        %4779 = vmatprep.subr.mxu0 0.0
        %4780 = vmatpush1.msra.mxu0 0.0
        %4781 = vmatprep.subr.mxu0 0.0
        %4782 = vmatpush1.msra.mxu0 0.0
        %4783 = vmatprep.subr.mxu0 0.0
        %4784 = vmatpush1.msra.mxu0 0.0
        %4785 = vmatprep.subr.mxu0 0.0
        %4786 = vmatpush1.msra.mxu0 0.0
        %4787 = vmatprep.subr.mxu0 0.0
        %4788 = vmatpush1.msra.mxu0 0.0
        %4789 = vmatprep.subr.mxu0 0.0
        %4790 = vmatpush1.msra.mxu0 0.0
        %4791 = vmatprep.subr.mxu0 0.0
        %4792 = vmatpush1.msra.mxu0 0.0
        %4793 = vmatprep.subr.mxu0 0.0
        %4794 = vmatpush1.msra.mxu0 0.0
        %4795 = vmatprep.subr.mxu0 0.0
        %4796 = vmatpush1.msra.mxu0 0.0
        %4797 = vmatprep.subr.mxu0 0.0
        %4798 = vmatpush1.msra.mxu0 0.0
        %4799 = vmatprep.subr.mxu0 0.0
        %4800 = vmatpush1.msra.mxu0 0.0
        %4801 = vmatprep.subr.mxu0 0.0
        %4802 = vmatpush1.msra.mxu0 0.0
        %4803 = vmatprep.subr.mxu0 0.0
        %4804 = vmatpush1.msra.mxu0 0.0
        %4805 = vmatprep.subr.mxu0 0.0
        %4806 = vmatpush1.msra.mxu0 0.0
        %4807 = vmatprep.subr.mxu0 0.0
        %4808 = vmatpush1.msra.mxu0 0.0
        %4809 = vmatprep.subr.mxu0 0.0
        %4810 = vmatpush1.msra.mxu0 0.0
        %4811 = vmatprep.subr.mxu0 0.0
        %4812 = vmatpush1.msra.mxu0 0.0
        %4813 = vmatprep.subr.mxu0 0.0
        %4814 = vmatpush1.msra.mxu0 0.0
        %4815 = vmatprep.subr.mxu0 0.0
        %4816 = vmatpush1.msra.mxu0 0.0
        %4817 = vmatprep.subr.mxu0 0.0
        %4818 = vmatpush1.msra.mxu0 0.0
        %4819 = vmatprep.mubr.f32.mxu0 0.0
        %4820 = vmatmul.mubr.f32.gmra.mrb[0].mxu0 %v2707
        %v4821 = vpop.f32.mrb[0].mxu0
        %v4822 = vadd.f32 0.0, %v4821
        %v4823 = vpop.f32.mrb[0].mxu0
        %v4824 = vadd.f32 0.0, %v4823
        %4825 = vmatprep.mubr.f32.mxu0 0.0
        %4826 = vmatmul.mubr.f32.gmra.mrb[0].mxu0 %v2710
        %v4827 = vpop.f32.mrb[0].mxu0
        %v4828 = vadd.f32 0.0, %v4827
        %v4829 = vpop.f32.mrb[0].mxu0
        %v4830 = vadd.f32 0.0, %v4829
        %4831 = vmatprep.mubr.f32.mxu0 0.0
        %4832 = vmatmul.mubr.f32.gmra.mrb[0].mxu0 %v2713
        %v4833 = vpop.f32.mrb[0].mxu0
        %v4834 = vadd.f32 0.0, %v4833
        %v4835 = vpop.f32.mrb[0].mxu0
        %v4836 = vadd.f32 0.0, %v4835
        %4837 = vmatprep.mubr.f32.mxu0 0.0
        %4838 = vmatmul.mubr.f32.gmra.mrb[0].mxu0 %v2716
        %v4839 = vpop.f32.mrb[0].mxu0
        %v4840 = vadd.f32 0.0, %v4839
        %v4841 = vpop.f32.mrb[0].mxu0
        %v4842 = vadd.f32 0.0, %v4841
        %4843 = vdwg.mxu0
        %v4844 = vmul.f32 %v4634, %v4733
        %v4845 = vmul.f32 %v4635, %v4735
        %v4846 = vmul.f32 %v4636, %v4822
        %v4847 = vmul.f32 %v4637, %v4824
        %v4848 = vmul.f32 %v4638, %v4739
        %v4849 = vmul.f32 %v4639, %v4741
        %v4850 = vmul.f32 %v4640, %v4828
        %v4851 = vmul.f32 %v4641, %v4830
        %v4852 = vmul.f32 %v4642, %v4745
        %v4853 = vmul.f32 %v4643, %v4747
        %v4854 = vmul.f32 %v4644, %v4834
        %v4855 = vmul.f32 %v4645, %v4836
        %v4856 = vmul.f32 %v4646, %v4751
        %v4857 = vmul.f32 %v4647, %v4753
        %v4858 = vmul.f32 %v4648, %v4840
        %v4859 = vmul.f32 %v4649, %v4842
        %v4860 = vld [vmem:[%s6] sm:$0xff]
        %v4861 = vld [vmem:[%s6 + $0x8] sm:$0xff]
        %v4862 = vld [vmem:[%s7] sm:$0xff]
        %v4863 = vld [vmem:[%s7 + $0x8] sm:$0xff]
        %4865 = vset.pattern.permute.xlu0 0
        %4866 = vperm.xlu0 %4865, %v4862
        %v4867 = vpop.permute.xlu0 %4866
        %4870 = vset.pattern.permute.xlu0 0
        %4871 = vperm.xlu0 %4870, %v4863
        %v4872 = vpop.permute.xlu0 %4871
        %vm4874 = vcmask 261120
        %v4876 = vsel %vm4874, %v4860, 0
        %v4879 = vsel %vm4874, %v4861, 0
        %4881 = vmatprep.subr.mxu0 %v4845
        %4882 = vmatpush1.msra.mxu0 %v4844
        %4883 = vmatprep.subr.mxu0 %v4849
        %4884 = vmatpush1.msra.mxu0 %v4848
        %4885 = vmatprep.subr.mxu0 %v4853
        %4886 = vmatpush1.msra.mxu0 %v4852
        %4887 = vmatprep.subr.mxu0 %v4857
        %4888 = vmatpush1.msra.mxu0 %v4856
        %4889 = vmatprep.subr.mxu0 0.0
        %4890 = vmatpush1.msra.mxu0 0.0
        %4891 = vmatprep.subr.mxu0 0.0
        %4892 = vmatpush1.msra.mxu0 0.0
        %4893 = vmatprep.subr.mxu0 0.0
        %4894 = vmatpush1.msra.mxu0 0.0
        %4895 = vmatprep.subr.mxu0 0.0
        %4896 = vmatpush1.msra.mxu0 0.0
        %4897 = vmatprep.subr.mxu0 0.0
        %4898 = vmatpush1.msra.mxu0 0.0
        %4899 = vmatprep.subr.mxu0 0.0
        %4900 = vmatpush1.msra.mxu0 0.0
        %4901 = vmatprep.subr.mxu0 0.0
        %4902 = vmatpush1.msra.mxu0 0.0
        %4903 = vmatprep.subr.mxu0 0.0
        %4904 = vmatpush1.msra.mxu0 0.0
        %4905 = vmatprep.subr.mxu0 0.0
        %4906 = vmatpush1.msra.mxu0 0.0
        %4907 = vmatprep.subr.mxu0 0.0
        %4908 = vmatpush1.msra.mxu0 0.0
        %4909 = vmatprep.subr.mxu0 0.0
        %4910 = vmatpush1.msra.mxu0 0.0
        %4911 = vmatprep.subr.mxu0 0.0
        %4912 = vmatpush1.msra.mxu0 0.0
        %4913 = vmatprep.subr.mxu0 0.0
        %4914 = vmatpush1.msra.mxu0 0.0
        %4915 = vmatprep.subr.mxu0 0.0
        %4916 = vmatpush1.msra.mxu0 0.0
        %4917 = vmatprep.subr.mxu0 0.0
        %4918 = vmatpush1.msra.mxu0 0.0
        %4919 = vmatprep.subr.mxu0 0.0
        %4920 = vmatpush1.msra.mxu0 0.0
        %4921 = vmatprep.subr.mxu0 0.0
        %4922 = vmatpush1.msra.mxu0 0.0
        %4923 = vmatprep.subr.mxu0 0.0
        %4924 = vmatpush1.msra.mxu0 0.0
        %4925 = vmatprep.subr.mxu0 0.0
        %4926 = vmatpush1.msra.mxu0 0.0
        %4927 = vmatprep.subr.mxu0 0.0
        %4928 = vmatpush1.msra.mxu0 0.0
        %4929 = vmatprep.subr.mxu0 0.0
        %4930 = vmatpush1.msra.mxu0 0.0
        %4931 = vmatprep.subr.mxu0 0.0
        %4932 = vmatpush1.msra.mxu0 0.0
        %4933 = vmatprep.subr.mxu0 0.0
        %4934 = vmatpush1.msra.mxu0 0.0
        %4935 = vmatprep.subr.mxu0 0.0
        %4936 = vmatpush1.msra.mxu0 0.0
        %4937 = vmatprep.subr.mxu0 0.0
        %4938 = vmatpush1.msra.mxu0 0.0
        %4939 = vmatprep.subr.mxu0 0.0
        %4940 = vmatpush1.msra.mxu0 0.0
        %4941 = vmatprep.subr.mxu0 0.0
        %4942 = vmatpush1.msra.mxu0 0.0
        %4943 = vmatprep.subr.mxu0 0.0
        %4944 = vmatpush1.msra.mxu0 0.0
        %4945 = vmatprep.mubr.f32.mxu0 0.0
        %4946 = vmatmul.mubr.f32.gmra.mrb[0].mxu0 %v4876
        %v4947 = vpop.f32.mrb[0].mxu0
        %v4948 = vadd.f32 %v4867, %v4947
        %v4949 = vpop.f32.mrb[0].mxu0
        %v4950 = vadd.f32 %v4867, %v4949
        %4951 = vmatprep.mubr.f32.mxu0 0.0
        %4952 = vmatmul.mubr.f32.gmra.mrb[0].mxu0 %v4879
        %v4953 = vpop.f32.mrb[0].mxu0
        %v4954 = vadd.f32 %v4872, %v4953
        %v4955 = vpop.f32.mrb[0].mxu0
        %v4956 = vadd.f32 %v4872, %v4955
        %4957 = vdwg.mxu0
        %4958 = vmatprep.subr.mxu0 %v4847
        %4959 = vmatpush1.msra.mxu0 %v4846
        %4960 = vmatprep.subr.mxu0 %v4851
        %4961 = vmatpush1.msra.mxu0 %v4850
        %4962 = vmatprep.subr.mxu0 %v4855
        %4963 = vmatpush1.msra.mxu0 %v4854
        %4964 = vmatprep.subr.mxu0 %v4859
        %4965 = vmatpush1.msra.mxu0 %v4858
        %4966 = vmatprep.subr.mxu0 0.0
        %4967 = vmatpush1.msra.mxu0 0.0
        %4968 = vmatprep.subr.mxu0 0.0
        %4969 = vmatpush1.msra.mxu0 0.0
        %4970 = vmatprep.subr.mxu0 0.0
        %4971 = vmatpush1.msra.mxu0 0.0
        %4972 = vmatprep.subr.mxu0 0.0
        %4973 = vmatpush1.msra.mxu0 0.0
        %4974 = vmatprep.subr.mxu0 0.0
        %4975 = vmatpush1.msra.mxu0 0.0
        %4976 = vmatprep.subr.mxu0 0.0
        %4977 = vmatpush1.msra.mxu0 0.0
        %4978 = vmatprep.subr.mxu0 0.0
        %4979 = vmatpush1.msra.mxu0 0.0
        %4980 = vmatprep.subr.mxu0 0.0
        %4981 = vmatpush1.msra.mxu0 0.0
        %4982 = vmatprep.subr.mxu0 0.0
        %4983 = vmatpush1.msra.mxu0 0.0
        %4984 = vmatprep.subr.mxu0 0.0
        %4985 = vmatpush1.msra.mxu0 0.0
        %4986 = vmatprep.subr.mxu0 0.0
        %4987 = vmatpush1.msra.mxu0 0.0
        %4988 = vmatprep.subr.mxu0 0.0
        %4989 = vmatpush1.msra.mxu0 0.0
        %4990 = vmatprep.subr.mxu0 0.0
        %4991 = vmatpush1.msra.mxu0 0.0
        %4992 = vmatprep.subr.mxu0 0.0
        %4993 = vmatpush1.msra.mxu0 0.0
        %4994 = vmatprep.subr.mxu0 0.0
        %4995 = vmatpush1.msra.mxu0 0.0
        %4996 = vmatprep.subr.mxu0 0.0
        %4997 = vmatpush1.msra.mxu0 0.0
        %4998 = vmatprep.subr.mxu0 0.0
        %4999 = vmatpush1.msra.mxu0 0.0
        %5000 = vmatprep.subr.mxu0 0.0
        %5001 = vmatpush1.msra.mxu0 0.0
        %5002 = vmatprep.subr.mxu0 0.0
        %5003 = vmatpush1.msra.mxu0 0.0
        %5004 = vmatprep.subr.mxu0 0.0
        %5005 = vmatpush1.msra.mxu0 0.0
        %5006 = vmatprep.subr.mxu0 0.0
        %5007 = vmatpush1.msra.mxu0 0.0
        %5008 = vmatprep.subr.mxu0 0.0
        %5009 = vmatpush1.msra.mxu0 0.0
        %5010 = vmatprep.subr.mxu0 0.0
        %5011 = vmatpush1.msra.mxu0 0.0
        %5012 = vmatprep.subr.mxu0 0.0
        %5013 = vmatpush1.msra.mxu0 0.0
        %5014 = vmatprep.subr.mxu0 0.0
        %5015 = vmatpush1.msra.mxu0 0.0
        %5016 = vmatprep.subr.mxu0 0.0
        %5017 = vmatpush1.msra.mxu0 0.0
        %5018 = vmatprep.subr.mxu0 0.0
        %5019 = vmatpush1.msra.mxu0 0.0
        %5020 = vmatprep.subr.mxu0 0.0
        %5021 = vmatpush1.msra.mxu0 0.0
        %5022 = vmatprep.mubr.f32.mxu0 0.0
        %5023 = vmatmul.mubr.f32.gmra.mrb[0].mxu0 %v4876
        %v5024 = vpop.f32.mrb[0].mxu0
        %v5025 = vadd.f32 %v4867, %v5024
        %v5026 = vpop.f32.mrb[0].mxu0
        %v5027 = vadd.f32 %v4867, %v5026
        %5028 = vmatprep.mubr.f32.mxu0 0.0
        %5029 = vmatmul.mubr.f32.gmra.mrb[0].mxu0 %v4879
        %v5030 = vpop.f32.mrb[0].mxu0
        %v5031 = vadd.f32 %v4872, %v5030
        %v5032 = vpop.f32.mrb[0].mxu0
        %v5033 = vadd.f32 %v4872, %v5032
        %5034 = vdwg.mxu0
        %v5035 = vmax.f32 %v4948, 0.0
        %v5036 = vmax.f32 %v4950, 0.0
        %v5037 = vmax.f32 %v5025, 0.0
        %v5038 = vmax.f32 %v5027, 0.0
        %v5039 = vmax.f32 %v4954, 0.0
        %v5040 = vmax.f32 %v4956, 0.0
        %v5041 = vmax.f32 %v5031, 0.0
        %v5042 = vmax.f32 %v5033, 0.0
        %v5043 = vld [vmem:[%s8] sm:$0xf]
        %v5044 = vld [vmem:[%s9] sm:$0xff]
        %v5045 = vld [vmem:[%s9 + $0x8] sm:$0xff]
        %vm5046 = vcmask 130048
        %v5048 = vsel %vm5046, %v5043, 0
        %5050 = vmatprep.subr.mxu0 %v5036
        %5051 = vmatpush1.msra.mxu0 %v5035
        %5052 = vmatprep.subr.mxu0 %v5040
        %5053 = vmatpush1.msra.mxu0 %v5039
        %5054 = vmatprep.subr.mxu0 0.0
        %5055 = vmatpush1.msra.mxu0 0.0
        %5056 = vmatprep.subr.mxu0 0.0
        %5057 = vmatpush1.msra.mxu0 0.0
        %5058 = vmatprep.subr.mxu0 0.0
        %5059 = vmatpush1.msra.mxu0 0.0
        %5060 = vmatprep.subr.mxu0 0.0
        %5061 = vmatpush1.msra.mxu0 0.0
        %5062 = vmatprep.subr.mxu0 0.0
        %5063 = vmatpush1.msra.mxu0 0.0
        %5064 = vmatprep.subr.mxu0 0.0
        %5065 = vmatpush1.msra.mxu0 0.0
        %5066 = vmatprep.subr.mxu0 0.0
        %5067 = vmatpush1.msra.mxu0 0.0
        %5068 = vmatprep.subr.mxu0 0.0
        %5069 = vmatpush1.msra.mxu0 0.0
        %5070 = vmatprep.subr.mxu0 0.0
        %5071 = vmatpush1.msra.mxu0 0.0
        %5072 = vmatprep.subr.mxu0 0.0
        %5073 = vmatpush1.msra.mxu0 0.0
        %5074 = vmatprep.subr.mxu0 0.0
        %5075 = vmatpush1.msra.mxu0 0.0
        %5076 = vmatprep.subr.mxu0 0.0
        %5077 = vmatpush1.msra.mxu0 0.0
        %5078 = vmatprep.subr.mxu0 0.0
        %5079 = vmatpush1.msra.mxu0 0.0
        %5080 = vmatprep.subr.mxu0 0.0
        %5081 = vmatpush1.msra.mxu0 0.0
        %5082 = vmatprep.subr.mxu0 0.0
        %5083 = vmatpush1.msra.mxu0 0.0
        %5084 = vmatprep.subr.mxu0 0.0
        %5085 = vmatpush1.msra.mxu0 0.0
        %5086 = vmatprep.subr.mxu0 0.0
        %5087 = vmatpush1.msra.mxu0 0.0
        %5088 = vmatprep.subr.mxu0 0.0
        %5089 = vmatpush1.msra.mxu0 0.0
        %5090 = vmatprep.subr.mxu0 0.0
        %5091 = vmatpush1.msra.mxu0 0.0
        %5092 = vmatprep.subr.mxu0 0.0
        %5093 = vmatpush1.msra.mxu0 0.0
        %5094 = vmatprep.subr.mxu0 0.0
        %5095 = vmatpush1.msra.mxu0 0.0
        %5096 = vmatprep.subr.mxu0 0.0
        %5097 = vmatpush1.msra.mxu0 0.0
        %5098 = vmatprep.subr.mxu0 0.0
        %5099 = vmatpush1.msra.mxu0 0.0
        %5100 = vmatprep.subr.mxu0 0.0
        %5101 = vmatpush1.msra.mxu0 0.0
        %5102 = vmatprep.subr.mxu0 0.0
        %5103 = vmatpush1.msra.mxu0 0.0
        %5104 = vmatprep.subr.mxu0 0.0
        %5105 = vmatpush1.msra.mxu0 0.0
        %5106 = vmatprep.subr.mxu0 0.0
        %5107 = vmatpush1.msra.mxu0 0.0
        %5108 = vmatprep.subr.mxu0 0.0
        %5109 = vmatpush1.msra.mxu0 0.0
        %5110 = vmatprep.subr.mxu0 0.0
        %5111 = vmatpush1.msra.mxu0 0.0
        %5112 = vmatprep.subr.mxu0 0.0
        %5113 = vmatpush1.msra.mxu0 0.0
        %5114 = vmatprep.mubr.f32.mxu0 0.0
        %5115 = vmatmul.mubr.f32.gmra.mrb[0].mxu0 %v5048
        %v5116 = vpop.f32.mrb[0].mxu0
        %v5117 = vadd.f32 0.0, %v5116
        %v5118 = vpop.f32.mrb[0].mxu0
        %v5119 = vadd.f32 0.0, %v5118
        %5120 = vdwg.mxu0
        %5121 = vmatprep.subr.mxu0 %v5038
        %5122 = vmatpush1.msra.mxu0 %v5037
        %5123 = vmatprep.subr.mxu0 %v5042
        %5124 = vmatpush1.msra.mxu0 %v5041
        %5125 = vmatprep.subr.mxu0 0.0
        %5126 = vmatpush1.msra.mxu0 0.0
        %5127 = vmatprep.subr.mxu0 0.0
        %5128 = vmatpush1.msra.mxu0 0.0
        %5129 = vmatprep.subr.mxu0 0.0
        %5130 = vmatpush1.msra.mxu0 0.0
        %5131 = vmatprep.subr.mxu0 0.0
        %5132 = vmatpush1.msra.mxu0 0.0
        %5133 = vmatprep.subr.mxu0 0.0
        %5134 = vmatpush1.msra.mxu0 0.0
        %5135 = vmatprep.subr.mxu0 0.0
        %5136 = vmatpush1.msra.mxu0 0.0
        %5137 = vmatprep.subr.mxu0 0.0
        %5138 = vmatpush1.msra.mxu0 0.0
        %5139 = vmatprep.subr.mxu0 0.0
        %5140 = vmatpush1.msra.mxu0 0.0
        %5141 = vmatprep.subr.mxu0 0.0
        %5142 = vmatpush1.msra.mxu0 0.0
        %5143 = vmatprep.subr.mxu0 0.0
        %5144 = vmatpush1.msra.mxu0 0.0
        %5145 = vmatprep.subr.mxu0 0.0
        %5146 = vmatpush1.msra.mxu0 0.0
        %5147 = vmatprep.subr.mxu0 0.0
        %5148 = vmatpush1.msra.mxu0 0.0
        %5149 = vmatprep.subr.mxu0 0.0
        %5150 = vmatpush1.msra.mxu0 0.0
        %5151 = vmatprep.subr.mxu0 0.0
        %5152 = vmatpush1.msra.mxu0 0.0
        %5153 = vmatprep.subr.mxu0 0.0
        %5154 = vmatpush1.msra.mxu0 0.0
        %5155 = vmatprep.subr.mxu0 0.0
        %5156 = vmatpush1.msra.mxu0 0.0
        %5157 = vmatprep.subr.mxu0 0.0
        %5158 = vmatpush1.msra.mxu0 0.0
        %5159 = vmatprep.subr.mxu0 0.0
        %5160 = vmatpush1.msra.mxu0 0.0
        %5161 = vmatprep.subr.mxu0 0.0
        %5162 = vmatpush1.msra.mxu0 0.0
        %5163 = vmatprep.subr.mxu0 0.0
        %5164 = vmatpush1.msra.mxu0 0.0
        %5165 = vmatprep.subr.mxu0 0.0
        %5166 = vmatpush1.msra.mxu0 0.0
        %5167 = vmatprep.subr.mxu0 0.0
        %5168 = vmatpush1.msra.mxu0 0.0
        %5169 = vmatprep.subr.mxu0 0.0
        %5170 = vmatpush1.msra.mxu0 0.0
        %5171 = vmatprep.subr.mxu0 0.0
        %5172 = vmatpush1.msra.mxu0 0.0
        %5173 = vmatprep.subr.mxu0 0.0
        %5174 = vmatpush1.msra.mxu0 0.0
        %5175 = vmatprep.subr.mxu0 0.0
        %5176 = vmatpush1.msra.mxu0 0.0
        %5177 = vmatprep.subr.mxu0 0.0
        %5178 = vmatpush1.msra.mxu0 0.0
        %5179 = vmatprep.subr.mxu0 0.0
        %5180 = vmatpush1.msra.mxu0 0.0
        %5181 = vmatprep.subr.mxu0 0.0
        %5182 = vmatpush1.msra.mxu0 0.0
        %5183 = vmatprep.subr.mxu0 0.0
        %5184 = vmatpush1.msra.mxu0 0.0
        %5185 = vmatprep.mubr.f32.mxu0 0.0
        %5186 = vmatmul.mubr.f32.gmra.mrb[0].mxu0 %v5048
        %v5187 = vpop.f32.mrb[0].mxu0
        %v5188 = vadd.f32 0.0, %v5187
        %v5189 = vpop.f32.mrb[0].mxu0
        %v5190 = vadd.f32 0.0, %v5189
        %5191 = vdwg.mxu0
        %v5193 = vsel %vm676, %v5044, 0
        %v5196 = vsel %vm676, %v5045, 0
        %v5199 = vsel %vm725, %v5117, 0
        %v5202 = vsel %vm725, %v5119, 0
        %v5205 = vsel %vm725, %v5188, 0
        %v5208 = vsel %vm725, %v5190, 0
        %5210 = vmatprep.subr.mxu0 %v5202
        %5211 = vmatpush1.msra.mxu0 %v5199
        %5212 = vmatprep.subr.mxu0 0.0
        %5213 = vmatpush1.msra.mxu0 0.0
        %5214 = vmatprep.subr.mxu0 0.0
        %5215 = vmatpush1.msra.mxu0 0.0
        %5216 = vmatprep.subr.mxu0 0.0
        %5217 = vmatpush1.msra.mxu0 0.0
        %5218 = vmatprep.subr.mxu0 0.0
        %5219 = vmatpush1.msra.mxu0 0.0
        %5220 = vmatprep.subr.mxu0 0.0
        %5221 = vmatpush1.msra.mxu0 0.0
        %5222 = vmatprep.subr.mxu0 0.0
        %5223 = vmatpush1.msra.mxu0 0.0
        %5224 = vmatprep.subr.mxu0 0.0
        %5225 = vmatpush1.msra.mxu0 0.0
        %5226 = vmatprep.subr.mxu0 0.0
        %5227 = vmatpush1.msra.mxu0 0.0
        %5228 = vmatprep.subr.mxu0 0.0
        %5229 = vmatpush1.msra.mxu0 0.0
        %5230 = vmatprep.subr.mxu0 0.0
        %5231 = vmatpush1.msra.mxu0 0.0
        %5232 = vmatprep.subr.mxu0 0.0
        %5233 = vmatpush1.msra.mxu0 0.0
        %5234 = vmatprep.subr.mxu0 0.0
        %5235 = vmatpush1.msra.mxu0 0.0
        %5236 = vmatprep.subr.mxu0 0.0
        %5237 = vmatpush1.msra.mxu0 0.0
        %5238 = vmatprep.subr.mxu0 0.0
        %5239 = vmatpush1.msra.mxu0 0.0
        %5240 = vmatprep.subr.mxu0 0.0
        %5241 = vmatpush1.msra.mxu0 0.0
        %5242 = vmatprep.subr.mxu0 0.0
        %5243 = vmatpush1.msra.mxu0 0.0
        %5244 = vmatprep.subr.mxu0 0.0
        %5245 = vmatpush1.msra.mxu0 0.0
        %5246 = vmatprep.subr.mxu0 0.0
        %5247 = vmatpush1.msra.mxu0 0.0
        %5248 = vmatprep.subr.mxu0 0.0
        %5249 = vmatpush1.msra.mxu0 0.0
        %5250 = vmatprep.subr.mxu0 0.0
        %5251 = vmatpush1.msra.mxu0 0.0
        %5252 = vmatprep.subr.mxu0 0.0
        %5253 = vmatpush1.msra.mxu0 0.0
        %5254 = vmatprep.subr.mxu0 0.0
        %5255 = vmatpush1.msra.mxu0 0.0
        %5256 = vmatprep.subr.mxu0 0.0
        %5257 = vmatpush1.msra.mxu0 0.0
        %5258 = vmatprep.subr.mxu0 0.0
        %5259 = vmatpush1.msra.mxu0 0.0
        %5260 = vmatprep.subr.mxu0 0.0
        %5261 = vmatpush1.msra.mxu0 0.0
        %5262 = vmatprep.subr.mxu0 0.0
        %5263 = vmatpush1.msra.mxu0 0.0
        %5264 = vmatprep.subr.mxu0 0.0
        %5265 = vmatpush1.msra.mxu0 0.0
        %5266 = vmatprep.subr.mxu0 0.0
        %5267 = vmatpush1.msra.mxu0 0.0
        %5268 = vmatprep.subr.mxu0 0.0
        %5269 = vmatpush1.msra.mxu0 0.0
        %5270 = vmatprep.subr.mxu0 0.0
        %5271 = vmatpush1.msra.mxu0 0.0
        %5272 = vmatprep.subr.mxu0 0.0
        %5273 = vmatpush1.msra.mxu0 0.0
        %5274 = vmatprep.mubr.f32.mxu0 0.0
        %5275 = vmatmul.mubr.f32.gmra.mrb[0].mxu0 %v5193
        %v5276 = vpop.f32.mrb[0].mxu0
        %v5277 = vadd.f32 0.0, %v5276
        %v5278 = vpop.f32.mrb[0].mxu0
        %v5279 = vadd.f32 0.0, %v5278
        %5280 = vmatprep.mubr.f32.mxu0 0.0
        %5281 = vmatmul.mubr.f32.gmra.mrb[0].mxu0 %v5196
        %v5282 = vpop.f32.mrb[0].mxu0
        %v5283 = vadd.f32 0.0, %v5282
        %v5284 = vpop.f32.mrb[0].mxu0
        %v5285 = vadd.f32 0.0, %v5284
        %5286 = vdwg.mxu0
        %5287 = vmatprep.subr.mxu0 %v5208
        %5288 = vmatpush1.msra.mxu0 %v5205
        %5289 = vmatprep.subr.mxu0 0.0
        %5290 = vmatpush1.msra.mxu0 0.0
        %5291 = vmatprep.subr.mxu0 0.0
        %5292 = vmatpush1.msra.mxu0 0.0
        %5293 = vmatprep.subr.mxu0 0.0
        %5294 = vmatpush1.msra.mxu0 0.0
        %5295 = vmatprep.subr.mxu0 0.0
        %5296 = vmatpush1.msra.mxu0 0.0
        %5297 = vmatprep.subr.mxu0 0.0
        %5298 = vmatpush1.msra.mxu0 0.0
        %5299 = vmatprep.subr.mxu0 0.0
        %5300 = vmatpush1.msra.mxu0 0.0
        %5301 = vmatprep.subr.mxu0 0.0
        %5302 = vmatpush1.msra.mxu0 0.0
        %5303 = vmatprep.subr.mxu0 0.0
        %5304 = vmatpush1.msra.mxu0 0.0
        %5305 = vmatprep.subr.mxu0 0.0
        %5306 = vmatpush1.msra.mxu0 0.0
        %5307 = vmatprep.subr.mxu0 0.0
        %5308 = vmatpush1.msra.mxu0 0.0
        %5309 = vmatprep.subr.mxu0 0.0
        %5310 = vmatpush1.msra.mxu0 0.0
        %5311 = vmatprep.subr.mxu0 0.0
        %5312 = vmatpush1.msra.mxu0 0.0
        %5313 = vmatprep.subr.mxu0 0.0
        %5314 = vmatpush1.msra.mxu0 0.0
        %5315 = vmatprep.subr.mxu0 0.0
        %5316 = vmatpush1.msra.mxu0 0.0
        %5317 = vmatprep.subr.mxu0 0.0
        %5318 = vmatpush1.msra.mxu0 0.0
        %5319 = vmatprep.subr.mxu0 0.0
        %5320 = vmatpush1.msra.mxu0 0.0
        %5321 = vmatprep.subr.mxu0 0.0
        %5322 = vmatpush1.msra.mxu0 0.0
        %5323 = vmatprep.subr.mxu0 0.0
        %5324 = vmatpush1.msra.mxu0 0.0
        %5325 = vmatprep.subr.mxu0 0.0
        %5326 = vmatpush1.msra.mxu0 0.0
        %5327 = vmatprep.subr.mxu0 0.0
        %5328 = vmatpush1.msra.mxu0 0.0
        %5329 = vmatprep.subr.mxu0 0.0
        %5330 = vmatpush1.msra.mxu0 0.0
        %5331 = vmatprep.subr.mxu0 0.0
        %5332 = vmatpush1.msra.mxu0 0.0
        %5333 = vmatprep.subr.mxu0 0.0
        %5334 = vmatpush1.msra.mxu0 0.0
        %5335 = vmatprep.subr.mxu0 0.0
        %5336 = vmatpush1.msra.mxu0 0.0
        %5337 = vmatprep.subr.mxu0 0.0
        %5338 = vmatpush1.msra.mxu0 0.0
        %5339 = vmatprep.subr.mxu0 0.0
        %5340 = vmatpush1.msra.mxu0 0.0
        %5341 = vmatprep.subr.mxu0 0.0
        %5342 = vmatpush1.msra.mxu0 0.0
        %5343 = vmatprep.subr.mxu0 0.0
        %5344 = vmatpush1.msra.mxu0 0.0
        %5345 = vmatprep.subr.mxu0 0.0
        %5346 = vmatpush1.msra.mxu0 0.0
        %5347 = vmatprep.subr.mxu0 0.0
        %5348 = vmatpush1.msra.mxu0 0.0
        %5349 = vmatprep.subr.mxu0 0.0
        %5350 = vmatpush1.msra.mxu0 0.0
        %5351 = vmatprep.mubr.f32.mxu0 0.0
        %5352 = vmatmul.mubr.f32.gmra.mrb[0].mxu0 %v5193
        %v5353 = vpop.f32.mrb[0].mxu0
        %v5354 = vadd.f32 0.0, %v5353
        %v5355 = vpop.f32.mrb[0].mxu0
        %v5356 = vadd.f32 0.0, %v5355
        %5357 = vmatprep.mubr.f32.mxu0 0.0
        %5358 = vmatmul.mubr.f32.gmra.mrb[0].mxu0 %v5196
        %v5359 = vpop.f32.mrb[0].mxu0
        %v5360 = vadd.f32 0.0, %v5359
        %v5361 = vpop.f32.mrb[0].mxu0
        %v5362 = vadd.f32 0.0, %v5361
        %5363 = vdwg.mxu0
        %v5364 = vsub.f32 %v5035, %v5277
        %v5365 = vsub.f32 %v5036, %v5279
        %v5366 = vsub.f32 %v5037, %v5354
        %v5367 = vsub.f32 %v5038, %v5356
        %v5368 = vsub.f32 %v5039, %v5283
        %v5369 = vsub.f32 %v5040, %v5285
        %v5370 = vsub.f32 %v5041, %v5360
        %v5371 = vsub.f32 %v5042, %v5362
        %v5372 = vmul.f32 %v5364, %v5364
        %v5373 = vmul.f32 %v5365, %v5365
        %v5374 = vmul.f32 %v5366, %v5366
        %v5375 = vmul.f32 %v5367, %v5367
        %v5376 = vmul.f32 %v5368, %v5368
        %v5377 = vmul.f32 %v5369, %v5369
        %v5378 = vmul.f32 %v5370, %v5370
        %v5379 = vmul.f32 %v5371, %v5371
        %5380 = vmatprep.subr.mxu0 %v5373
        %5381 = vmatpush1.msra.mxu0 %v5372
        %5382 = vmatprep.subr.mxu0 %v5377
        %5383 = vmatpush1.msra.mxu0 %v5376
        %5384 = vmatprep.subr.mxu0 0.0
        %5385 = vmatpush1.msra.mxu0 0.0
        %5386 = vmatprep.subr.mxu0 0.0
        %5387 = vmatpush1.msra.mxu0 0.0
        %5388 = vmatprep.subr.mxu0 0.0
        %5389 = vmatpush1.msra.mxu0 0.0
        %5390 = vmatprep.subr.mxu0 0.0
        %5391 = vmatpush1.msra.mxu0 0.0
        %5392 = vmatprep.subr.mxu0 0.0
        %5393 = vmatpush1.msra.mxu0 0.0
        %5394 = vmatprep.subr.mxu0 0.0
        %5395 = vmatpush1.msra.mxu0 0.0
        %5396 = vmatprep.subr.mxu0 0.0
        %5397 = vmatpush1.msra.mxu0 0.0
        %5398 = vmatprep.subr.mxu0 0.0
        %5399 = vmatpush1.msra.mxu0 0.0
        %5400 = vmatprep.subr.mxu0 0.0
        %5401 = vmatpush1.msra.mxu0 0.0
        %5402 = vmatprep.subr.mxu0 0.0
        %5403 = vmatpush1.msra.mxu0 0.0
        %5404 = vmatprep.subr.mxu0 0.0
        %5405 = vmatpush1.msra.mxu0 0.0
        %5406 = vmatprep.subr.mxu0 0.0
        %5407 = vmatpush1.msra.mxu0 0.0
        %5408 = vmatprep.subr.mxu0 0.0
        %5409 = vmatpush1.msra.mxu0 0.0
        %5410 = vmatprep.subr.mxu0 0.0
        %5411 = vmatpush1.msra.mxu0 0.0
        %5412 = vmatprep.subr.mxu0 0.0
        %5413 = vmatpush1.msra.mxu0 0.0
        %5414 = vmatprep.subr.mxu0 0.0
        %5415 = vmatpush1.msra.mxu0 0.0
        %5416 = vmatprep.subr.mxu0 0.0
        %5417 = vmatpush1.msra.mxu0 0.0
        %5418 = vmatprep.subr.mxu0 0.0
        %5419 = vmatpush1.msra.mxu0 0.0
        %5420 = vmatprep.subr.mxu0 0.0
        %5421 = vmatpush1.msra.mxu0 0.0
        %5422 = vmatprep.subr.mxu0 0.0
        %5423 = vmatpush1.msra.mxu0 0.0
        %5424 = vmatprep.subr.mxu0 0.0
        %5425 = vmatpush1.msra.mxu0 0.0
        %5426 = vmatprep.subr.mxu0 0.0
        %5427 = vmatpush1.msra.mxu0 0.0
        %5428 = vmatprep.subr.mxu0 0.0
        %5429 = vmatpush1.msra.mxu0 0.0
        %5430 = vmatprep.subr.mxu0 0.0
        %5431 = vmatpush1.msra.mxu0 0.0
        %5432 = vmatprep.subr.mxu0 0.0
        %5433 = vmatpush1.msra.mxu0 0.0
        %5434 = vmatprep.subr.mxu0 0.0
        %5435 = vmatpush1.msra.mxu0 0.0
        %5436 = vmatprep.subr.mxu0 0.0
        %5437 = vmatpush1.msra.mxu0 0.0
        %5438 = vmatprep.subr.mxu0 0.0
        %5439 = vmatpush1.msra.mxu0 0.0
        %5440 = vmatprep.subr.mxu0 0.0
        %5441 = vmatpush1.msra.mxu0 0.0
        %5442 = vmatprep.subr.mxu0 0.0
        %5443 = vmatpush1.msra.mxu0 0.0
        %5444 = vmatprep.mubr.f32.mxu0 0.0
        %5445 = vmatmul.mubr.f32.gmra.mrb[0].mxu0 %v5048
        %v5446 = vpop.f32.mrb[0].mxu0
        %v5447 = vadd.f32 0.0, %v5446
        %v5448 = vpop.f32.mrb[0].mxu0
        %v5449 = vadd.f32 0.0, %v5448
        %5450 = vdwg.mxu0
        %5451 = vmatprep.subr.mxu0 %v5375
        %5452 = vmatpush1.msra.mxu0 %v5374
        %5453 = vmatprep.subr.mxu0 %v5379
        %5454 = vmatpush1.msra.mxu0 %v5378
        %5455 = vmatprep.subr.mxu0 0.0
        %5456 = vmatpush1.msra.mxu0 0.0
        %5457 = vmatprep.subr.mxu0 0.0
        %5458 = vmatpush1.msra.mxu0 0.0
        %5459 = vmatprep.subr.mxu0 0.0
        %5460 = vmatpush1.msra.mxu0 0.0
        %5461 = vmatprep.subr.mxu0 0.0
        %5462 = vmatpush1.msra.mxu0 0.0
        %5463 = vmatprep.subr.mxu0 0.0
        %5464 = vmatpush1.msra.mxu0 0.0
        %5465 = vmatprep.subr.mxu0 0.0
        %5466 = vmatpush1.msra.mxu0 0.0
        %5467 = vmatprep.subr.mxu0 0.0
        %5468 = vmatpush1.msra.mxu0 0.0
        %5469 = vmatprep.subr.mxu0 0.0
        %5470 = vmatpush1.msra.mxu0 0.0
        %5471 = vmatprep.subr.mxu0 0.0
        %5472 = vmatpush1.msra.mxu0 0.0
        %5473 = vmatprep.subr.mxu0 0.0
        %5474 = vmatpush1.msra.mxu0 0.0
        %5475 = vmatprep.subr.mxu0 0.0
        %5476 = vmatpush1.msra.mxu0 0.0
        %5477 = vmatprep.subr.mxu0 0.0
        %5478 = vmatpush1.msra.mxu0 0.0
        %5479 = vmatprep.subr.mxu0 0.0
        %5480 = vmatpush1.msra.mxu0 0.0
        %5481 = vmatprep.subr.mxu0 0.0
        %5482 = vmatpush1.msra.mxu0 0.0
        %5483 = vmatprep.subr.mxu0 0.0
        %5484 = vmatpush1.msra.mxu0 0.0
        %5485 = vmatprep.subr.mxu0 0.0
        %5486 = vmatpush1.msra.mxu0 0.0
        %5487 = vmatprep.subr.mxu0 0.0
        %5488 = vmatpush1.msra.mxu0 0.0
        %5489 = vmatprep.subr.mxu0 0.0
        %5490 = vmatpush1.msra.mxu0 0.0
        %5491 = vmatprep.subr.mxu0 0.0
        %5492 = vmatpush1.msra.mxu0 0.0
        %5493 = vmatprep.subr.mxu0 0.0
        %5494 = vmatpush1.msra.mxu0 0.0
        %5495 = vmatprep.subr.mxu0 0.0
        %5496 = vmatpush1.msra.mxu0 0.0
        %5497 = vmatprep.subr.mxu0 0.0
        %5498 = vmatpush1.msra.mxu0 0.0
        %5499 = vmatprep.subr.mxu0 0.0
        %5500 = vmatpush1.msra.mxu0 0.0
        %5501 = vmatprep.subr.mxu0 0.0
        %5502 = vmatpush1.msra.mxu0 0.0
        %5503 = vmatprep.subr.mxu0 0.0
        %5504 = vmatpush1.msra.mxu0 0.0
        %5505 = vmatprep.subr.mxu0 0.0
        %5506 = vmatpush1.msra.mxu0 0.0
        %5507 = vmatprep.subr.mxu0 0.0
        %5508 = vmatpush1.msra.mxu0 0.0
        %5509 = vmatprep.subr.mxu0 0.0
        %5510 = vmatpush1.msra.mxu0 0.0
        %5511 = vmatprep.subr.mxu0 0.0
        %5512 = vmatpush1.msra.mxu0 0.0
        %5513 = vmatprep.subr.mxu0 0.0
        %5514 = vmatpush1.msra.mxu0 0.0
        %5515 = vmatprep.mubr.f32.mxu0 0.0
        %5516 = vmatmul.mubr.f32.gmra.mrb[0].mxu0 %v5048
        %v5517 = vpop.f32.mrb[0].mxu0
        %v5518 = vadd.f32 0.0, %v5517
        %v5519 = vpop.f32.mrb[0].mxu0
        %v5520 = vadd.f32 0.0, %v5519
        %5521 = vdwg.mxu0
        %v5523 = vsel %vm725, %v5447, 0
        %v5526 = vsel %vm725, %v5449, 0
        %v5529 = vsel %vm725, %v5518, 0
        %v5532 = vsel %vm725, %v5520, 0
        %5534 = vmatprep.subr.mxu0 %v5526
        %5535 = vmatpush1.msra.mxu0 %v5523
        %5536 = vmatprep.subr.mxu0 0.0
        %5537 = vmatpush1.msra.mxu0 0.0
        %5538 = vmatprep.subr.mxu0 0.0
        %5539 = vmatpush1.msra.mxu0 0.0
        %5540 = vmatprep.subr.mxu0 0.0
        %5541 = vmatpush1.msra.mxu0 0.0
        %5542 = vmatprep.subr.mxu0 0.0
        %5543 = vmatpush1.msra.mxu0 0.0
        %5544 = vmatprep.subr.mxu0 0.0
        %5545 = vmatpush1.msra.mxu0 0.0
        %5546 = vmatprep.subr.mxu0 0.0
        %5547 = vmatpush1.msra.mxu0 0.0
        %5548 = vmatprep.subr.mxu0 0.0
        %5549 = vmatpush1.msra.mxu0 0.0
        %5550 = vmatprep.subr.mxu0 0.0
        %5551 = vmatpush1.msra.mxu0 0.0
        %5552 = vmatprep.subr.mxu0 0.0
        %5553 = vmatpush1.msra.mxu0 0.0
        %5554 = vmatprep.subr.mxu0 0.0
        %5555 = vmatpush1.msra.mxu0 0.0
        %5556 = vmatprep.subr.mxu0 0.0
        %5557 = vmatpush1.msra.mxu0 0.0
        %5558 = vmatprep.subr.mxu0 0.0
        %5559 = vmatpush1.msra.mxu0 0.0
        %5560 = vmatprep.subr.mxu0 0.0
        %5561 = vmatpush1.msra.mxu0 0.0
        %5562 = vmatprep.subr.mxu0 0.0
        %5563 = vmatpush1.msra.mxu0 0.0
        %5564 = vmatprep.subr.mxu0 0.0
        %5565 = vmatpush1.msra.mxu0 0.0
        %5566 = vmatprep.subr.mxu0 0.0
        %5567 = vmatpush1.msra.mxu0 0.0
        %5568 = vmatprep.subr.mxu0 0.0
        %5569 = vmatpush1.msra.mxu0 0.0
        %5570 = vmatprep.subr.mxu0 0.0
        %5571 = vmatpush1.msra.mxu0 0.0
        %5572 = vmatprep.subr.mxu0 0.0
        %5573 = vmatpush1.msra.mxu0 0.0
        %5574 = vmatprep.subr.mxu0 0.0
        %5575 = vmatpush1.msra.mxu0 0.0
        %5576 = vmatprep.subr.mxu0 0.0
        %5577 = vmatpush1.msra.mxu0 0.0
        %5578 = vmatprep.subr.mxu0 0.0
        %5579 = vmatpush1.msra.mxu0 0.0
        %5580 = vmatprep.subr.mxu0 0.0
        %5581 = vmatpush1.msra.mxu0 0.0
        %5582 = vmatprep.subr.mxu0 0.0
        %5583 = vmatpush1.msra.mxu0 0.0
        %5584 = vmatprep.subr.mxu0 0.0
        %5585 = vmatpush1.msra.mxu0 0.0
        %5586 = vmatprep.subr.mxu0 0.0
        %5587 = vmatpush1.msra.mxu0 0.0
        %5588 = vmatprep.subr.mxu0 0.0
        %5589 = vmatpush1.msra.mxu0 0.0
        %5590 = vmatprep.subr.mxu0 0.0
        %5591 = vmatpush1.msra.mxu0 0.0
        %5592 = vmatprep.subr.mxu0 0.0
        %5593 = vmatpush1.msra.mxu0 0.0
        %5594 = vmatprep.subr.mxu0 0.0
        %5595 = vmatpush1.msra.mxu0 0.0
        %5596 = vmatprep.subr.mxu0 0.0
        %5597 = vmatpush1.msra.mxu0 0.0
        %5598 = vmatprep.mubr.f32.mxu0 0.0
        %5599 = vmatmul.mubr.f32.gmra.mrb[0].mxu0 %v5193
        %v5600 = vpop.f32.mrb[0].mxu0
        %v5601 = vadd.f32 1e-05, %v5600
        %v5602 = vpop.f32.mrb[0].mxu0
        %v5603 = vadd.f32 1e-05, %v5602
        %5604 = vmatprep.mubr.f32.mxu0 0.0
        %5605 = vmatmul.mubr.f32.gmra.mrb[0].mxu0 %v5196
        %v5606 = vpop.f32.mrb[0].mxu0
        %v5607 = vadd.f32 1e-05, %v5606
        %v5608 = vpop.f32.mrb[0].mxu0
        %v5609 = vadd.f32 1e-05, %v5608
        %5610 = vdwg.mxu0
        %5611 = vmatprep.subr.mxu0 %v5532
        %5612 = vmatpush1.msra.mxu0 %v5529
        %5613 = vmatprep.subr.mxu0 0.0
        %5614 = vmatpush1.msra.mxu0 0.0
        %5615 = vmatprep.subr.mxu0 0.0
        %5616 = vmatpush1.msra.mxu0 0.0
        %5617 = vmatprep.subr.mxu0 0.0
        %5618 = vmatpush1.msra.mxu0 0.0
        %5619 = vmatprep.subr.mxu0 0.0
        %5620 = vmatpush1.msra.mxu0 0.0
        %5621 = vmatprep.subr.mxu0 0.0
        %5622 = vmatpush1.msra.mxu0 0.0
        %5623 = vmatprep.subr.mxu0 0.0
        %5624 = vmatpush1.msra.mxu0 0.0
        %5625 = vmatprep.subr.mxu0 0.0
        %5626 = vmatpush1.msra.mxu0 0.0
        %5627 = vmatprep.subr.mxu0 0.0
        %5628 = vmatpush1.msra.mxu0 0.0
        %5629 = vmatprep.subr.mxu0 0.0
        %5630 = vmatpush1.msra.mxu0 0.0
        %5631 = vmatprep.subr.mxu0 0.0
        %5632 = vmatpush1.msra.mxu0 0.0
        %5633 = vmatprep.subr.mxu0 0.0
        %5634 = vmatpush1.msra.mxu0 0.0
        %5635 = vmatprep.subr.mxu0 0.0
        %5636 = vmatpush1.msra.mxu0 0.0
        %5637 = vmatprep.subr.mxu0 0.0
        %5638 = vmatpush1.msra.mxu0 0.0
        %5639 = vmatprep.subr.mxu0 0.0
        %5640 = vmatpush1.msra.mxu0 0.0
        %5641 = vmatprep.subr.mxu0 0.0
        %5642 = vmatpush1.msra.mxu0 0.0
        %5643 = vmatprep.subr.mxu0 0.0
        %5644 = vmatpush1.msra.mxu0 0.0
        %5645 = vmatprep.subr.mxu0 0.0
        %5646 = vmatpush1.msra.mxu0 0.0
        %5647 = vmatprep.subr.mxu0 0.0
        %5648 = vmatpush1.msra.mxu0 0.0
        %5649 = vmatprep.subr.mxu0 0.0
        %5650 = vmatpush1.msra.mxu0 0.0
        %5651 = vmatprep.subr.mxu0 0.0
        %5652 = vmatpush1.msra.mxu0 0.0
        %5653 = vmatprep.subr.mxu0 0.0
        %5654 = vmatpush1.msra.mxu0 0.0
        %5655 = vmatprep.subr.mxu0 0.0
        %5656 = vmatpush1.msra.mxu0 0.0
        %5657 = vmatprep.subr.mxu0 0.0
        %5658 = vmatpush1.msra.mxu0 0.0
        %5659 = vmatprep.subr.mxu0 0.0
        %5660 = vmatpush1.msra.mxu0 0.0
        %5661 = vmatprep.subr.mxu0 0.0
        %5662 = vmatpush1.msra.mxu0 0.0
        %5663 = vmatprep.subr.mxu0 0.0
        %5664 = vmatpush1.msra.mxu0 0.0
        %5665 = vmatprep.subr.mxu0 0.0
        %5666 = vmatpush1.msra.mxu0 0.0
        %5667 = vmatprep.subr.mxu0 0.0
        %5668 = vmatpush1.msra.mxu0 0.0
        %5669 = vmatprep.subr.mxu0 0.0
        %5670 = vmatpush1.msra.mxu0 0.0
        %5671 = vmatprep.subr.mxu0 0.0
        %5672 = vmatpush1.msra.mxu0 0.0
        %5673 = vmatprep.subr.mxu0 0.0
        %5674 = vmatpush1.msra.mxu0 0.0
        %5675 = vmatprep.mubr.f32.mxu0 0.0
        %5676 = vmatmul.mubr.f32.gmra.mrb[0].mxu0 %v5193
        %v5677 = vpop.f32.mrb[0].mxu0
        %v5678 = vadd.f32 1e-05, %v5677
        %v5679 = vpop.f32.mrb[0].mxu0
        %v5680 = vadd.f32 1e-05, %v5679
        %5681 = vmatprep.mubr.f32.mxu0 0.0
        %5682 = vmatmul.mubr.f32.gmra.mrb[0].mxu0 %v5196
        %v5683 = vpop.f32.mrb[0].mxu0
        %v5684 = vadd.f32 1e-05, %v5683
        %v5685 = vpop.f32.mrb[0].mxu0
        %v5686 = vadd.f32 1e-05, %v5685
        %5687 = vdwg.mxu0
        %v5688 = vrsqrt.pop %v5601
        %v5689 = vrsqrt.pop %v5603
        %v5690 = vrsqrt.pop %v5678
        %v5691 = vrsqrt.pop %v5680
        %v5692 = vrsqrt.pop %v5607
        %v5693 = vrsqrt.pop %v5609
        %v5694 = vrsqrt.pop %v5684
        %v5695 = vrsqrt.pop %v5686
        %v5696 = vmul.f32 %v5364, %v5688
        %v5697 = vmul.f32 %v5365, %v5689
        %v5698 = vmul.f32 %v5366, %v5690
        %v5699 = vmul.f32 %v5367, %v5691
        %v5700 = vmul.f32 %v5368, %v5692
        %v5701 = vmul.f32 %v5369, %v5693
        %v5702 = vmul.f32 %v5370, %v5694
        %v5703 = vmul.f32 %v5371, %v5695
        %v5704 = vld [vmem:[%s10] sm:$0xff]
        %v5705 = vld [vmem:[%s10 + $0x8] sm:$0xff]
        %5707 = vset.pattern.permute.xlu0 0
        %5708 = vperm.xlu0 %5707, %v5704
        %v5709 = vpop.permute.xlu0 %5708
        %5712 = vset.pattern.permute.xlu0 0
        %5713 = vperm.xlu0 %5712, %v5705
        %v5714 = vpop.permute.xlu0 %5713
        %v5716 = vmul.f32 %v5696, %v5709
        %v5717 = vmul.f32 %v5697, %v5709
        %v5718 = vmul.f32 %v5698, %v5709
        %v5719 = vmul.f32 %v5699, %v5709
        %v5720 = vmul.f32 %v5700, %v5714
        %v5721 = vmul.f32 %v5701, %v5714
        %v5722 = vmul.f32 %v5702, %v5714
        %v5723 = vmul.f32 %v5703, %v5714
        %v5724 = vld [vmem:[%s11] sm:$0xff]
        %v5725 = vld [vmem:[%s11 + $0x8] sm:$0xff]
        %5727 = vset.pattern.permute.xlu0 0
        %5728 = vperm.xlu0 %5727, %v5724
        %v5729 = vpop.permute.xlu0 %5728
        %5732 = vset.pattern.permute.xlu0 0
        %5733 = vperm.xlu0 %5732, %v5725
        %v5734 = vpop.permute.xlu0 %5733
        %v5736 = vadd.f32 %v5716, %v5729
        %v5737 = vadd.f32 %v5717, %v5729
        %v5738 = vadd.f32 %v5718, %v5729
        %v5739 = vadd.f32 %v5719, %v5729
        %v5740 = vadd.f32 %v5720, %v5734
        %v5741 = vadd.f32 %v5721, %v5734
        %v5742 = vadd.f32 %v5722, %v5734
        %v5743 = vadd.f32 %v5723, %v5734
        %5744 = vst [vmem:[%s449] sm:$0xff] %v5736
        %5745 = vst [vmem:[%s449 + $0x8] sm:$0xff] %v5737
        %5746 = vst [vmem:[%s449 + $0x10] sm:$0xff] %v5738
        %5747 = vst [vmem:[%s449 + $0x18] sm:$0xff] %v5739
        %5748 = vst [vmem:[%s449 + $0x20] sm:$0xff] %v5740
        %5749 = vst [vmem:[%s449 + $0x28] sm:$0xff] %v5741
        %5750 = vst [vmem:[%s449 + $0x30] sm:$0xff] %v5742
        %5751 = vst [vmem:[%s449 + $0x38] sm:$0xff] %v5743
        %s5752 = sand.u32 %s310, 1
        %s5753 = scalar_lea.sflag [#allocation4], %s5752
        %s5754 = sand.u32 %s310, 1
        %s5755 = smul.addr %s5754, 64
        %s5756 = scalar_lea.vmem [#allocation5], %s5755
        // Predicated region
        $region73: #{tpu_custom_call.1} parent=67 // pred_check
          %p5757 = pneg %p320
        $region74: #{tpu_custom_call.1} parent=67 // pred_check_branch
          %5759 = sbr.rel (%p5757) target = $region76
        $region75: #{tpu_custom_call.1} parent=67 // pred_region
          %s5760 = smul.u32 4, %s34
          %s5762 = ssub.s32 1024, 1024
          %5763 = vsyncadd %s5753, %s5762
          %s5764 = smul.addr %s33, 16
          %s5765 = sadd.s32 %s5760, %s5764
          %s5766 = smul.addr %s5765, 128
          %s5767 = scalar_lea.hbm %s12, %s5766
          %s5768 = sshll.u32 %s5756, 4
          %s5769 = int_to_ptr.vmem [resolvable:$true] %s5768
          %5774 = dma.vmem_to_hbm [thread:$0]  %s5769, 1024, %s5767, %s5753, 512, 1024, 32
        $region76: #{tpu_custom_call.1} parent=67 // pred_fallthru
          _
      $region68: #{tpu_custom_call.1} parent=5 // pred_fallthru
        _
      %p5775 = scmp.le.s32.totalorder 2, %s24
      // Predicated region
      $region77: #{tpu_custom_call.1} parent=5 // pred_check
        %p5776 = pneg %p5775
      $region78: #{tpu_custom_call.1} parent=5 // pred_check_branch
        %5778 = sbr.rel (%p5776) target = $region80
      $region79: #{tpu_custom_call.1} parent=5 // pred_region
        %s5779 = ssub.s32 %s24, 2
        // Predicated region
        $region81: #{tpu_custom_call.1} parent=79 // pred_check
          %p5780 = pneg %p326
        $region82: #{tpu_custom_call.1} parent=79 // pred_check_branch
          %5782 = sbr.rel (%p5780) target = $region84
        $region83: #{tpu_custom_call.1} parent=79 // pred_region
          %s5783 = sand.u32 %s311, 1
          %s5784 = scalar_lea.sflag [#allocation4], %s5783
          %s5785 = sand.u32 %s311, 1
          %s5786 = smul.addr %s5785, 64
          %s5787 = scalar_lea.vmem [#allocation5], %s5786
          %5788 = dma.done %s5784, 1024
        $region84: #{tpu_custom_call.1} parent=79 // pred_fallthru
          _
      $region80: #{tpu_custom_call.1} parent=5 // pred_fallthru
        _
    $region6: #{tpu_custom_call.1} parent=1 // loop_footer
      %s28 = sadd.s32 1, %s24
    $region7: #{tpu_custom_call.1} parent=1 // loop_footer_branch
      %23 = sbr.rel target = $region3
    $region8: #{tpu_custom_call.1} parent=1 // loop_exit
      _
    %5789 = vsyncpa [#allocation3], 1
    %s5790 = scalar_lea.sflag [#allocation3], 1
    %5791 = vsyncpa %s5790, 1
    %5792 = vsyncpa [#allocation4], 1
    %s5793 = scalar_lea.sflag [#allocation4], 1
    %5794 = vsyncpa %s5793, 1

</llo_original>
